<compile_context>
chip_gen: v7x
topology: tpu7x:2x2x1
jax: 0.10.0
libtpu: 0.0.40
codegen_flags: <defaults>
</compile_context>

<pallas_src>
import numpy as np
import jax
import jax.numpy as jnp
from jax import lax
from jax.experimental import pallas as pl
from jax.experimental.pallas import tpu as pltpu

# ---- module constants (from PatchEmbedding.__init__) -----------------------
K1 = 25        # Conv2d(1, 40, (1, 25)) temporal kernel
KH = 22        # Conv2d(40, 40, (22, 1)) spatial kernel (== number of EEG rows)
H_PAD = 24     # 22 electrode rows zero-padded to a sublane-aligned 24
C = 40         # hidden channels
POOL_W = 75    # AvgPool2d window along time
POOL_S = 15    # AvgPool2d stride along time
BN_EPS = 1e-5
LANE = 128


def _round_up(x, m):
    return ((x + m - 1) // m) * m


def _erf(x):
    # Abramowitz & Stegun 7.1.26 rational approximation (|abs err| <= 1.5e-7).
    a1, a2, a3, a4, a5 = (0.254829592, -0.284496736, 1.421413741,
                          -1.453152027, 1.061405429)
    p = 0.3275911
    ax = jnp.abs(x)
    t = 1.0 / (1.0 + p * ax)   # exact divide: keeps error far below tolerance
    poly = ((((a5 * t + a4) * t + a3) * t + a2) * t + a1) * t
    e = 1.0 - poly * jnp.exp(-ax * ax)
    return jnp.where(x >= 0, e, -e)


def _gelu_exact(x):
    # PyTorch nn.GELU() default = exact (erf-based) GELU.
    return 0.5 * x * (1.0 + _erf(x * 0.7071067811865475))


def patch_embed_kernel(x_ref, wf_ref, bf_ref, pool_ref, wpt_ref, bp_ref,
                       o_ref, cols_ref):
    # x_ref   : (BB, H_PAD, W_pad)     zero-padded input slab (BB batch elements)
    # wf_ref  : (C, K1*H_PAD)          conv1*conv2 fused weight, BN scale folded
    # bf_ref  : (C, 1)                 fused bias (conv biases + BN shift)
    # pool_ref: (W1p, P_pad)           AvgPool2d((1,75),(1,15)) as constant matmul
    # wpt_ref : (E, C)                 1x1 projection weight
    # bp_ref  : (E, 1)                 projection bias
    # o_ref   : (BB, E, P_pad)
    # cols_ref: (K1*H_PAD, BB*W1p)     batched im2col scratch (VMEM)
    BB = x_ref.shape[0]
    W1p = cols_ref.shape[1] // BB

    # ---- 1. batched im2col: K1 sublane-aligned slabs per batch element ------
    # All slices are static; lane offsets i*W1p are multiples of 128.
    for i in range(BB):
        x = x_ref[i]                                            # (H_PAD, W_pad)
        for k in range(K1):
            cols_ref[k * H_PAD:(k + 1) * H_PAD,
                     i * W1p:(i + 1) * W1p] = x[:, k:k + W1p]

    # ---- 2. fused Conv2d(1,40,(1,25)) + Conv2d(40,40,(22,1)) + BatchNorm ----
    # ONE (C, 600) x (600, BB*W1p) MXU matmul for the whole batch block.
    act = jnp.dot(wf_ref[...], cols_ref[...],
                  preferred_element_type=jnp.float32) + bf_ref[...]   # (C, BB*W1p)

    g = _gelu_exact(act)                                        # exact GELU

    # Dropout(0.5): identity in eval / inference mode.
    # TODO(synk): training-mode dropout RNG + batch-statistics BatchNorm not emulated.

    # ---- 3. AvgPool (matmul vs constant window matrix) + 1x1 projection ------
    for i in range(BB):                                         # static, lane-aligned
        gi = g[:, i * W1p:(i + 1) * W1p]                        # (C, W1p)
        pooled = jnp.dot(gi, pool_ref[...],
                         preferred_element_type=jnp.float32)    # (C, P_pad)
        o_ref[i] = (jnp.dot(wpt_ref[...], pooled,
                            preferred_element_type=jnp.float32)
                    + bp_ref[...])                              # (E, P_pad)


def patch_embedding_forward(x, kparams, *, block_b=8):
    """x: (B, 1, H=22, W) f32 NCHW.  Returns (B, P, emb)."""
    B, Cin, H, W = x.shape
    assert Cin == 1 and H == KH, "PatchEmbedding expects (B, 1, 22, W)"
    W1 = W - K1 + 1
    assert W1 >= POOL_W, "time axis too short for AvgPool2d((1,75),(1,15))"
    P = (W1 - POOL_W) // POOL_S + 1

    wf, bf, wpt, bp = kparams
    E = wpt.shape[0]

    # lane-friendly padding of time / pooled axes.
    W1p = _round_up(W1, LANE)
    W_pad = _round_up(W1p + K1 - 1, LANE)
    P_pad = _round_up(P, LANE)

    # batch elements per grid step, capped so the im2col scratch (plus
    # double-buffered inputs) stays well inside default scoped VMEM.
    cols_budget = 8 * 1024 * 1024                  # bytes for the im2col scratch
    bb_cap = max(1, cols_budget // (K1 * H_PAD * W1p * 4))
    BB = int(min(block_b, B, bb_cap))
    B_pad = _round_up(B, BB)

    x2 = jnp.zeros((B_pad, H_PAD, W_pad), jnp.float32)
    x2 = x2.at[:B, :H, :W].set(x[:, 0, :, :])

    # constant pooling matrix: 1/75 inside each valid window, 0 elsewhere
    # (zero for padded time rows t >= W1 and padded pooled columns p >= P).
    t = np.arange(W1p)[:, None]
    pp = np.arange(P_pad)[None, :]
    poolmat = (((t >= pp * POOL_S) & (t < pp * POOL_S + POOL_W) & (pp < P))
               .astype(np.float32) / POOL_W)
    poolmat = jnp.asarray(poolmat)                               # (W1p, P_pad)

    out_ep = pl.pallas_call(
        patch_embed_kernel,
        out_shape=jax.ShapeDtypeStruct((B_pad, E, P_pad), jnp.float32),
        grid_spec=pltpu.PrefetchScalarGridSpec(
            num_scalar_prefetch=0,
            grid=(B_pad // BB,),
            in_specs=[
                pl.BlockSpec((BB, H_PAD, W_pad), lambda b: (b, 0, 0)),
                pl.BlockSpec(wf.shape, lambda b: (0, 0)),
                pl.BlockSpec(bf.shape, lambda b: (0, 0)),
                pl.BlockSpec(poolmat.shape, lambda b: (0, 0)),
                pl.BlockSpec(wpt.shape, lambda b: (0, 0)),
                pl.BlockSpec(bp.shape, lambda b: (0, 0)),
            ],
            out_specs=pl.BlockSpec((BB, E, P_pad), lambda b: (b, 0, 0)),
            scratch_shapes=[pltpu.VMEM((K1 * H_PAD, BB * W1p), jnp.float32)],
        ),
        compiler_params=pltpu.CompilerParams(
            dimension_semantics=("parallel",)),
    )(x2, wf, bf, poolmat, wpt, bp)

    # drop batch / lane padding; == torch `x.view(b, e, h*w).transpose(1, 2)`.
    return jnp.transpose(out_ep[:B, :, :P], (0, 2, 1))


# ---------------- deterministic parameter setup (plain JAX glue) -------------
def init_params(key, emb_size=40):
    ks = jax.random.split(key, 10)
    return dict(
        w1=jax.random.normal(ks[0], (C, 1, 1, K1), jnp.float32) * 0.2,   # conv1.weight
        b1=jax.random.normal(ks[1], (C,), jnp.float32) * 0.1,
        w2=jax.random.normal(ks[2], (C, C, KH, 1), jnp.float32) * 0.05,  # conv2.weight
        b2=jax.random.normal(ks[3], (C,), jnp.float32) * 0.1,
        gamma=1.0 + 0.1 * jax.random.normal(ks[4], (C,), jnp.float32),
        beta=0.1 * jax.random.normal(ks[5], (C,), jnp.float32),
        rmean=0.1 * jax.random.normal(ks[6], (C,), jnp.float32),
        rvar=jax.random.uniform(ks[7], (C,), jnp.float32, minval=0.5, maxval=1.5),
        wp=jax.random.normal(ks[8], (emb_size, C, 1, 1), jnp.float32) * 0.2,  # projection.weight
        bp=jax.random.normal(ks[9], (emb_size,), jnp.float32) * 0.1,
    )


def pack_kernel_params(p):
    """Fuse conv1 + conv2 + BatchNorm(eval) into a single weight/bias pair."""
    w1 = p['w1'][:, 0, 0, :]                      # (C, K1)    [ci, k]
    w2 = p['w2'][:, :, :, 0]                      # (C, C, KH) [co, ci, h]
    # Wf[co, k, h] = sum_ci w2[co, ci, h] * w1[ci, k]
    wf = jnp.einsum('cih,ik->ckh', w2, w1)        # (C, K1, KH)
    wf = jnp.pad(wf, ((0, 0), (0, 0), (0, H_PAD - KH)))   # zero rows for padded h
    wf = wf.reshape(C, K1 * H_PAD)
    # fold conv1 bias into conv2 bias: b2_eff = b2 + sum_h W2_h @ b1
    b2_eff = p['b2'] + jnp.einsum('cih,i->c', w2, p['b1'])
    # fold BatchNorm (eval) affine into the fused weight / bias
    scale = p['gamma'] / jnp.sqrt(p['rvar'] + BN_EPS)
    shift = p['beta'] - p['rmean'] * scale
    wf = wf * scale[:, None]
    bf = (scale * b2_eff + shift)[:, None]        # (C, 1)
    wpt = p['wp'][:, :, 0, 0]                     # (E, C)
    bp = p['bp'][:, None]                         # (E, 1)
    return (wf, bf, wpt, bp)


# ---------------- pure-JAX reference (for numerical check) -------------------
def reference_forward(x, p):
    dn = ('NCHW', 'OIHW', 'NCHW')
    y = lax.conv_general_dilated(x, p['w1'], (1, 1), 'VALID', dimension_numbers=dn)
    y = y + p['b1'][None, :, None, None]
    y = lax.conv_general_dilated(y, p['w2'], (1, 1), 'VALID', dimension_numbers=dn)
    y = y + p['b2'][None, :, None, None]
    scale = p['gamma'] / jnp.sqrt(p['rvar'] + BN_EPS)
    shift = p['beta'] - p['rmean'] * scale
    y = y * scale[None, :, None, None] + shift[None, :, None, None]
    y = 0.5 * y * (1.0 + jax.scipy.special.erf(y / np.sqrt(2.0)))        # exact GELU
    y = lax.reduce_window(y, 0.0, lax.add,
                          (1, 1, 1, POOL_W), (1, 1, 1, POOL_S), 'VALID') / POOL_W
    y = lax.conv_general_dilated(y, p['wp'], (1, 1), 'VALID', dimension_numbers=dn)
    y = y + p['bp'][None, :, None, None]
    b, e, h, w = y.shape
    return jnp.transpose(y.reshape(b, e, h * w), (0, 2, 1))


if __name__ == "__main__":
    key = jax.random.PRNGKey(0)
    kx, kp = jax.random.split(key)

    # small but architecture-consistent input: H must be 22, W >= 99 (=> seq len 3)
    B, H, W = 3, 22, 129
    x = jax.random.normal(kx, (B, 1, H, W), jnp.float32)

    params = init_params(kp, emb_size=40)
    kparams = pack_kernel_params(params)

    # block_b=2 exercises both the multi-step grid and batch padding (B=3 -> B_pad=4)
    out = patch_embedding_forward(x, kparams, block_b=2)
    out = jax.block_until_ready(out)

    ref = reference_forward(x, params)
    assert out.shape == (B, 3, 40), out.shape
    max_err = float(jnp.max(jnp.abs(out - ref)))
    if max_err > 2e-3:
        raise AssertionError(f"kernel/reference mismatch: max abs err = {max_err}")

    print("KERNEL_OK")
</pallas_src>

<mosaic_0001>
module attributes {stable_mosaic.version = 11 : i64} {
  func.func @patch_embed_kernel(%arg0: i32, %arg1: memref<2x24x256xf32, #tpu.memory_space<vmem>>, %arg2: memref<40x600xf32, #tpu.memory_space<vmem>>, %arg3: memref<40x1xf32, #tpu.memory_space<vmem>>, %arg4: memref<128x128xf32, #tpu.memory_space<vmem>>, %arg5: memref<40x40xf32, #tpu.memory_space<vmem>>, %arg6: memref<40x1xf32, #tpu.memory_space<vmem>>, %arg7: memref<2x40x128xf32, #tpu.memory_space<vmem>>, %arg8: memref<600x256xf32, #tpu.memory_space<vmem>>) attributes {dimension_semantics = [#tpu.dimension_semantics<parallel>], iteration_bounds = array<i64: 2>, scalar_prefetch = 0 : i64, scratch_operands = 1 : i64, tpu.core_type = #tpu.core_type<tc>, window_params = [{transform_indices = @transform_0, window_bounds = array<i64: 2, 24, 256>}, {pipeline_mode = #tpu.pipeline_mode<synchronous>, transform_indices = @transform_1, window_bounds = array<i64: 40, 600>}, {pipeline_mode = #tpu.pipeline_mode<synchronous>, transform_indices = @transform_2, window_bounds = array<i64: 40, 1>}, {pipeline_mode = #tpu.pipeline_mode<synchronous>, transform_indices = @transform_3, window_bounds = array<i64: 128, 128>}, {pipeline_mode = #tpu.pipeline_mode<synchronous>, transform_indices = @transform_4, window_bounds = array<i64: 40, 40>}, {pipeline_mode = #tpu.pipeline_mode<synchronous>, transform_indices = @transform_5, window_bounds = array<i64: 40, 1>}, {transform_indices = @transform_6, window_bounds = array<i64: 2, 40, 128>}]} {
    %c0 = arith.constant 0 : index
    %c0_0 = arith.constant 0 : index
    %c0_1 = arith.constant 0 : index
    %0 = vector.load %arg1[%c0, %c0_0, %c0_1] : memref<2x24x256xf32, #tpu.memory_space<vmem>>, vector<1x24x256xf32>
    %1 = vector.shape_cast %0 : vector<1x24x256xf32> to vector<24x256xf32>
    %2 = vector.extract_strided_slice %1 {offsets = [0, 0], sizes = [24, 128], strides = [1, 1]} : vector<24x256xf32> to vector<24x128xf32>
    %c0_2 = arith.constant 0 : index
    %c0_3 = arith.constant 0 : index
    %3 = vector.load %arg8[%c0_2, %c0_3] : memref<600x256xf32, #tpu.memory_space<vmem>>, vector<24x128xf32>
    tpu.vector_store %arg8[%c0_2, %c0_3], %2 {strides = array<i32>} : memref<600x256xf32, #tpu.memory_space<vmem>>, vector<24x128xf32>,
    %4 = vector.extract_strided_slice %1 {offsets = [0, 1], sizes = [24, 128], strides = [1, 1]} : vector<24x256xf32> to vector<24x128xf32>
    %c24 = arith.constant 24 : index
    %c0_4 = arith.constant 0 : index
    %5 = vector.load %arg8[%c24, %c0_4] : memref<600x256xf32, #tpu.memory_space<vmem>>, vector<24x128xf32>
    tpu.vector_store %arg8[%c24, %c0_4], %4 {strides = array<i32>} : memref<600x256xf32, #tpu.memory_space<vmem>>, vector<24x128xf32>,
    %6 = vector.extract_strided_slice %1 {offsets = [0, 2], sizes = [24, 128], strides = [1, 1]} : vector<24x256xf32> to vector<24x128xf32>
    %c48 = arith.constant 48 : index
    %c0_5 = arith.constant 0 : index
    %7 = vector.load %arg8[%c48, %c0_5] : memref<600x256xf32, #tpu.memory_space<vmem>>, vector<24x128xf32>
    tpu.vector_store %arg8[%c48, %c0_5], %6 {strides = array<i32>} : memref<600x256xf32, #tpu.memory_space<vmem>>, vector<24x128xf32>,
    %8 = vector.extract_strided_slice %1 {offsets = [0, 3], sizes = [24, 128], strides = [1, 1]} : vector<24x256xf32> to vector<24x128xf32>
    %c72 = arith.constant 72 : index
    %c0_6 = arith.constant 0 : index
    %9 = vector.load %arg8[%c72, %c0_6] : memref<600x256xf32, #tpu.memory_space<vmem>>, vector<24x128xf32>
    tpu.vector_store %arg8[%c72, %c0_6], %8 {strides = array<i32>} : memref<600x256xf32, #tpu.memory_space<vmem>>, vector<24x128xf32>,
    %10 = vector.extract_strided_slice %1 {offsets = [0, 4], sizes = [24, 128], strides = [1, 1]} : vector<24x256xf32> to vector<24x128xf32>
    %c96 = arith.constant 96 : index
    %c0_7 = arith.constant 0 : index
    %11 = vector.load %arg8[%c96, %c0_7] : memref<600x256xf32, #tpu.memory_space<vmem>>, vector<24x128xf32>
    tpu.vector_store %arg8[%c96, %c0_7], %10 {strides = array<i32>} : memref<600x256xf32, #tpu.memory_space<vmem>>, vector<24x128xf32>,
    %12 = vector.extract_strided_slice %1 {offsets = [0, 5], sizes = [24, 128], strides = [1, 1]} : vector<24x256xf32> to vector<24x128xf32>
    %c120 = arith.constant 120 : index
    %c0_8 = arith.constant 0 : index
    %13 = vector.load %arg8[%c120, %c0_8] : memref<600x256xf32, #tpu.memory_space<vmem>>, vector<24x128xf32>
    tpu.vector_store %arg8[%c120, %c0_8], %12 {strides = array<i32>} : memref<600x256xf32, #tpu.memory_space<vmem>>, vector<24x128xf32>,
    %14 = vector.extract_strided_slice %1 {offsets = [0, 6], sizes = [24, 128], strides = [1, 1]} : vector<24x256xf32> to vector<24x128xf32>
    %c144 = arith.constant 144 : index
    %c0_9 = arith.constant 0 : index
    %15 = vector.load %arg8[%c144, %c0_9] : memref<600x256xf32, #tpu.memory_space<vmem>>, vector<24x128xf32>
    tpu.vector_store %arg8[%c144, %c0_9], %14 {strides = array<i32>} : memref<600x256xf32, #tpu.memory_space<vmem>>, vector<24x128xf32>,
    %16 = vector.extract_strided_slice %1 {offsets = [0, 7], sizes = [24, 128], strides = [1, 1]} : vector<24x256xf32> to vector<24x128xf32>
    %c168 = arith.constant 168 : index
    %c0_10 = arith.constant 0 : index
    %17 = vector.load %arg8[%c168, %c0_10] : memref<600x256xf32, #tpu.memory_space<vmem>>, vector<24x128xf32>
    tpu.vector_store %arg8[%c168, %c0_10], %16 {strides = array<i32>} : memref<600x256xf32, #tpu.memory_space<vmem>>, vector<24x128xf32>,
    %18 = vector.extract_strided_slice %1 {offsets = [0, 8], sizes = [24, 128], strides = [1, 1]} : vector<24x256xf32> to vector<24x128xf32>
    %c192 = arith.constant 192 : index
    %c0_11 = arith.constant 0 : index
    %19 = vector.load %arg8[%c192, %c0_11] : memref<600x256xf32, #tpu.memory_space<vmem>>, vector<24x128xf32>
    tpu.vector_store %arg8[%c192, %c0_11], %18 {strides = array<i32>} : memref<600x256xf32, #tpu.memory_space<vmem>>, vector<24x128xf32>,
    %20 = vector.extract_strided_slice %1 {offsets = [0, 9], sizes = [24, 128], strides = [1, 1]} : vector<24x256xf32> to vector<24x128xf32>
    %c216 = arith.constant 216 : index
    %c0_12 = arith.constant 0 : index
    %21 = vector.load %arg8[%c216, %c0_12] : memref<600x256xf32, #tpu.memory_space<vmem>>, vector<24x128xf32>
    tpu.vector_store %arg8[%c216, %c0_12], %20 {strides = array<i32>} : memref<600x256xf32, #tpu.memory_space<vmem>>, vector<24x128xf32>,
    %22 = vector.extract_strided_slice %1 {offsets = [0, 10], sizes = [24, 128], strides = [1, 1]} : vector<24x256xf32> to vector<24x128xf32>
    %c240 = arith.constant 240 : index
    %c0_13 = arith.constant 0 : index
    %23 = vector.load %arg8[%c240, %c0_13] : memref<600x256xf32, #tpu.memory_space<vmem>>, vector<24x128xf32>
    tpu.vector_store %arg8[%c240, %c0_13], %22 {strides = array<i32>} : memref<600x256xf32, #tpu.memory_space<vmem>>, vector<24x128xf32>,
    %24 = vector.extract_strided_slice %1 {offsets = [0, 11], sizes = [24, 128], strides = [1, 1]} : vector<24x256xf32> to vector<24x128xf32>
    %c264 = arith.constant 264 : index
    %c0_14 = arith.constant 0 : index
    %25 = vector.load %arg8[%c264, %c0_14] : memref<600x256xf32, #tpu.memory_space<vmem>>, vector<24x128xf32>
    tpu.vector_store %arg8[%c264, %c0_14], %24 {strides = array<i32>} : memref<600x256xf32, #tpu.memory_space<vmem>>, vector<24x128xf32>,
    %26 = vector.extract_strided_slice %1 {offsets = [0, 12], sizes = [24, 128], strides = [1, 1]} : vector<24x256xf32> to vector<24x128xf32>
    %c288 = arith.constant 288 : index
    %c0_15 = arith.constant 0 : index
    %27 = vector.load %arg8[%c288, %c0_15] : memref<600x256xf32, #tpu.memory_space<vmem>>, vector<24x128xf32>
    tpu.vector_store %arg8[%c288, %c0_15], %26 {strides = array<i32>} : memref<600x256xf32, #tpu.memory_space<vmem>>, vector<24x128xf32>,
    %28 = vector.extract_strided_slice %1 {offsets = [0, 13], sizes = [24, 128], strides = [1, 1]} : vector<24x256xf32> to vector<24x128xf32>
    %c312 = arith.constant 312 : index
    %c0_16 = arith.constant 0 : index
    %29 = vector.load %arg8[%c312, %c0_16] : memref<600x256xf32, #tpu.memory_space<vmem>>, vector<24x128xf32>
    tpu.vector_store %arg8[%c312, %c0_16], %28 {strides = array<i32>} : memref<600x256xf32, #tpu.memory_space<vmem>>, vector<24x128xf32>,
    %30 = vector.extract_strided_slice %1 {offsets = [0, 14], sizes = [24, 128], strides = [1, 1]} : vector<24x256xf32> to vector<24x128xf32>
    %c336 = arith.constant 336 : index
    %c0_17 = arith.constant 0 : index
    %31 = vector.load %arg8[%c336, %c0_17] : memref<600x256xf32, #tpu.memory_space<vmem>>, vector<24x128xf32>
    tpu.vector_store %arg8[%c336, %c0_17], %30 {strides = array<i32>} : memref<600x256xf32, #tpu.memory_space<vmem>>, vector<24x128xf32>,
    %32 = vector.extract_strided_slice %1 {offsets = [0, 15], sizes = [24, 128], strides = [1, 1]} : vector<24x256xf32> to vector<24x128xf32>
    %c360 = arith.constant 360 : index
    %c0_18 = arith.constant 0 : index
    %33 = vector.load %arg8[%c360, %c0_18] : memref<600x256xf32, #tpu.memory_space<vmem>>, vector<24x128xf32>
    tpu.vector_store %arg8[%c360, %c0_18], %32 {strides = array<i32>} : memref<600x256xf32, #tpu.memory_space<vmem>>, vector<24x128xf32>,
    %34 = vector.extract_strided_slice %1 {offsets = [0, 16], sizes = [24, 128], strides = [1, 1]} : vector<24x256xf32> to vector<24x128xf32>
    %c384 = arith.constant 384 : index
    %c0_19 = arith.constant 0 : index
    %35 = vector.load %arg8[%c384, %c0_19] : memref<600x256xf32, #tpu.memory_space<vmem>>, vector<24x128xf32>
    tpu.vector_store %arg8[%c384, %c0_19], %34 {strides = array<i32>} : memref<600x256xf32, #tpu.memory_space<vmem>>, vector<24x128xf32>,
    %36 = vector.extract_strided_slice %1 {offsets = [0, 17], sizes = [24, 128], strides = [1, 1]} : vector<24x256xf32> to vector<24x128xf32>
    %c408 = arith.constant 408 : index
    %c0_20 = arith.constant 0 : index
    %37 = vector.load %arg8[%c408, %c0_20] : memref<600x256xf32, #tpu.memory_space<vmem>>, vector<24x128xf32>
    tpu.vector_store %arg8[%c408, %c0_20], %36 {strides = array<i32>} : memref<600x256xf32, #tpu.memory_space<vmem>>, vector<24x128xf32>,
    %38 = vector.extract_strided_slice %1 {offsets = [0, 18], sizes = [24, 128], strides = [1, 1]} : vector<24x256xf32> to vector<24x128xf32>
    %c432 = arith.constant 432 : index
    %c0_21 = arith.constant 0 : index
    %39 = vector.load %arg8[%c432, %c0_21] : memref<600x256xf32, #tpu.memory_space<vmem>>, vector<24x128xf32>
    tpu.vector_store %arg8[%c432, %c0_21], %38 {strides = array<i32>} : memref<600x256xf32, #tpu.memory_space<vmem>>, vector<24x128xf32>,
    %40 = vector.extract_strided_slice %1 {offsets = [0, 19], sizes = [24, 128], strides = [1, 1]} : vector<24x256xf32> to vector<24x128xf32>
    %c456 = arith.constant 456 : index
    %c0_22 = arith.constant 0 : index
    %41 = vector.load %arg8[%c456, %c0_22] : memref<600x256xf32, #tpu.memory_space<vmem>>, vector<24x128xf32>
    tpu.vector_store %arg8[%c456, %c0_22], %40 {strides = array<i32>} : memref<600x256xf32, #tpu.memory_space<vmem>>, vector<24x128xf32>,
    %42 = vector.extract_strided_slice %1 {offsets = [0, 20], sizes = [24, 128], strides = [1, 1]} : vector<24x256xf32> to vector<24x128xf32>
    %c480 = arith.constant 480 : index
    %c0_23 = arith.constant 0 : index
    %43 = vector.load %arg8[%c480, %c0_23] : memref<600x256xf32, #tpu.memory_space<vmem>>, vector<24x128xf32>
    tpu.vector_store %arg8[%c480, %c0_23], %42 {strides = array<i32>} : memref<600x256xf32, #tpu.memory_space<vmem>>, vector<24x128xf32>,
    %44 = vector.extract_strided_slice %1 {offsets = [0, 21], sizes = [24, 128], strides = [1, 1]} : vector<24x256xf32> to vector<24x128xf32>
    %c504 = arith.constant 504 : index
    %c0_24 = arith.constant 0 : index
    %45 = vector.load %arg8[%c504, %c0_24] : memref<600x256xf32, #tpu.memory_space<vmem>>, vector<24x128xf32>
    tpu.vector_store %arg8[%c504, %c0_24], %44 {strides = array<i32>} : memref<600x256xf32, #tpu.memory_space<vmem>>, vector<24x128xf32>,
    %46 = vector.extract_strided_slice %1 {offsets = [0, 22], sizes = [24, 128], strides = [1, 1]} : vector<24x256xf32> to vector<24x128xf32>
    %c528 = arith.constant 528 : index
    %c0_25 = arith.constant 0 : index
    %47 = vector.load %arg8[%c528, %c0_25] : memref<600x256xf32, #tpu.memory_space<vmem>>, vector<24x128xf32>
    tpu.vector_store %arg8[%c528, %c0_25], %46 {strides = array<i32>} : memref<600x256xf32, #tpu.memory_space<vmem>>, vector<24x128xf32>,
    %48 = vector.extract_strided_slice %1 {offsets = [0, 23], sizes = [24, 128], strides = [1, 1]} : vector<24x256xf32> to vector<24x128xf32>
    %c552 = arith.constant 552 : index
    %c0_26 = arith.constant 0 : index
    %49 = vector.load %arg8[%c552, %c0_26] : memref<600x256xf32, #tpu.memory_space<vmem>>, vector<24x128xf32>
    tpu.vector_store %arg8[%c552, %c0_26], %48 {strides = array<i32>} : memref<600x256xf32, #tpu.memory_space<vmem>>, vector<24x128xf32>,
    %50 = vector.extract_strided_slice %1 {offsets = [0, 24], sizes = [24, 128], strides = [1, 1]} : vector<24x256xf32> to vector<24x128xf32>
    %c576 = arith.constant 576 : index
    %c0_27 = arith.constant 0 : index
    %51 = vector.load %arg8[%c576, %c0_27] : memref<600x256xf32, #tpu.memory_space<vmem>>, vector<24x128xf32>
    tpu.vector_store %arg8[%c576, %c0_27], %50 {strides = array<i32>} : memref<600x256xf32, #tpu.memory_space<vmem>>, vector<24x128xf32>,
    %c1 = arith.constant 1 : index
    %c0_28 = arith.constant 0 : index
    %c0_29 = arith.constant 0 : index
    %52 = vector.load %arg1[%c1, %c0_28, %c0_29] : memref<2x24x256xf32, #tpu.memory_space<vmem>>, vector<1x24x256xf32>
    %53 = vector.shape_cast %52 : vector<1x24x256xf32> to vector<24x256xf32>
    %54 = vector.extract_strided_slice %53 {offsets = [0, 0], sizes = [24, 128], strides = [1, 1]} : vector<24x256xf32> to vector<24x128xf32>
    %c0_30 = arith.constant 0 : index
    %c128 = arith.constant 128 : index
    %55 = vector.load %arg8[%c0_30, %c128] : memref<600x256xf32, #tpu.memory_space<vmem>>, vector<24x128xf32>
    tpu.vector_store %arg8[%c0_30, %c128], %54 {strides = array<i32>} : memref<600x256xf32, #tpu.memory_space<vmem>>, vector<24x128xf32>,
    %56 = vector.extract_strided_slice %53 {offsets = [0, 1], sizes = [24, 128], strides = [1, 1]} : vector<24x256xf32> to vector<24x128xf32>
    %c24_31 = arith.constant 24 : index
    %c128_32 = arith.constant 128 : index
    %57 = vector.load %arg8[%c24_31, %c128_32] : memref<600x256xf32, #tpu.memory_space<vmem>>, vector<24x128xf32>
    tpu.vector_store %arg8[%c24_31, %c128_32], %56 {strides = array<i32>} : memref<600x256xf32, #tpu.memory_space<vmem>>, vector<24x128xf32>,
    %58 = vector.extract_strided_slice %53 {offsets = [0, 2], sizes = [24, 128], strides = [1, 1]} : vector<24x256xf32> to vector<24x128xf32>
    %c48_33 = arith.constant 48 : index
    %c128_34 = arith.constant 128 : index
    %59 = vector.load %arg8[%c48_33, %c128_34] : memref<600x256xf32, #tpu.memory_space<vmem>>, vector<24x128xf32>
    tpu.vector_store %arg8[%c48_33, %c128_34], %58 {strides = array<i32>} : memref<600x256xf32, #tpu.memory_space<vmem>>, vector<24x128xf32>,
    %60 = vector.extract_strided_slice %53 {offsets = [0, 3], sizes = [24, 128], strides = [1, 1]} : vector<24x256xf32> to vector<24x128xf32>
    %c72_35 = arith.constant 72 : index
    %c128_36 = arith.constant 128 : index
    %61 = vector.load %arg8[%c72_35, %c128_36] : memref<600x256xf32, #tpu.memory_space<vmem>>, vector<24x128xf32>
    tpu.vector_store %arg8[%c72_35, %c128_36], %60 {strides = array<i32>} : memref<600x256xf32, #tpu.memory_space<vmem>>, vector<24x128xf32>,
    %62 = vector.extract_strided_slice %53 {offsets = [0, 4], sizes = [24, 128], strides = [1, 1]} : vector<24x256xf32> to vector<24x128xf32>
    %c96_37 = arith.constant 96 : index
    %c128_38 = arith.constant 128 : index
    %63 = vector.load %arg8[%c96_37, %c128_38] : memref<600x256xf32, #tpu.memory_space<vmem>>, vector<24x128xf32>
    tpu.vector_store %arg8[%c96_37, %c128_38], %62 {strides = array<i32>} : memref<600x256xf32, #tpu.memory_space<vmem>>, vector<24x128xf32>,
    %64 = vector.extract_strided_slice %53 {offsets = [0, 5], sizes = [24, 128], strides = [1, 1]} : vector<24x256xf32> to vector<24x128xf32>
    %c120_39 = arith.constant 120 : index
    %c128_40 = arith.constant 128 : index
    %65 = vector.load %arg8[%c120_39, %c128_40] : memref<600x256xf32, #tpu.memory_space<vmem>>, vector<24x128xf32>
    tpu.vector_store %arg8[%c120_39, %c128_40], %64 {strides = array<i32>} : memref<600x256xf32, #tpu.memory_space<vmem>>, vector<24x128xf32>,
    %66 = vector.extract_strided_slice %53 {offsets = [0, 6], sizes = [24, 128], strides = [1, 1]} : vector<24x256xf32> to vector<24x128xf32>
    %c144_41 = arith.constant 144 : index
    %c128_42 = arith.constant 128 : index
    %67 = vector.load %arg8[%c144_41, %c128_42] : memref<600x256xf32, #tpu.memory_space<vmem>>, vector<24x128xf32>
    tpu.vector_store %arg8[%c144_41, %c128_42], %66 {strides = array<i32>} : memref<600x256xf32, #tpu.memory_space<vmem>>, vector<24x128xf32>,
    %68 = vector.extract_strided_slice %53 {offsets = [0, 7], sizes = [24, 128], strides = [1, 1]} : vector<24x256xf32> to vector<24x128xf32>
    %c168_43 = arith.constant 168 : index
    %c128_44 = arith.constant 128 : index
    %69 = vector.load %arg8[%c168_43, %c128_44] : memref<600x256xf32, #tpu.memory_space<vmem>>, vector<24x128xf32>
    tpu.vector_store %arg8[%c168_43, %c128_44], %68 {strides = array<i32>} : memref<600x256xf32, #tpu.memory_space<vmem>>, vector<24x128xf32>,
    %70 = vector.extract_strided_slice %53 {offsets = [0, 8], sizes = [24, 128], strides = [1, 1]} : vector<24x256xf32> to vector<24x128xf32>
    %c192_45 = arith.constant 192 : index
    %c128_46 = arith.constant 128 : index
    %71 = vector.load %arg8[%c192_45, %c128_46] : memref<600x256xf32, #tpu.memory_space<vmem>>, vector<24x128xf32>
    tpu.vector_store %arg8[%c192_45, %c128_46], %70 {strides = array<i32>} : memref<600x256xf32, #tpu.memory_space<vmem>>, vector<24x128xf32>,
    %72 = vector.extract_strided_slice %53 {offsets = [0, 9], sizes = [24, 128], strides = [1, 1]} : vector<24x256xf32> to vector<24x128xf32>
    %c216_47 = arith.constant 216 : index
    %c128_48 = arith.constant 128 : index
    %73 = vector.load %arg8[%c216_47, %c128_48] : memref<600x256xf32, #tpu.memory_space<vmem>>, vector<24x128xf32>
    tpu.vector_store %arg8[%c216_47, %c128_48], %72 {strides = array<i32>} : memref<600x256xf32, #tpu.memory_space<vmem>>, vector<24x128xf32>,
    %74 = vector.extract_strided_slice %53 {offsets = [0, 10], sizes = [24, 128], strides = [1, 1]} : vector<24x256xf32> to vector<24x128xf32>
    %c240_49 = arith.constant 240 : index
    %c128_50 = arith.constant 128 : index
    %75 = vector.load %arg8[%c240_49, %c128_50] : memref<600x256xf32, #tpu.memory_space<vmem>>, vector<24x128xf32>
    tpu.vector_store %arg8[%c240_49, %c128_50], %74 {strides = array<i32>} : memref<600x256xf32, #tpu.memory_space<vmem>>, vector<24x128xf32>,
    %76 = vector.extract_strided_slice %53 {offsets = [0, 11], sizes = [24, 128], strides = [1, 1]} : vector<24x256xf32> to vector<24x128xf32>
    %c264_51 = arith.constant 264 : index
    %c128_52 = arith.constant 128 : index
    %77 = vector.load %arg8[%c264_51, %c128_52] : memref<600x256xf32, #tpu.memory_space<vmem>>, vector<24x128xf32>
    tpu.vector_store %arg8[%c264_51, %c128_52], %76 {strides = array<i32>} : memref<600x256xf32, #tpu.memory_space<vmem>>, vector<24x128xf32>,
    %78 = vector.extract_strided_slice %53 {offsets = [0, 12], sizes = [24, 128], strides = [1, 1]} : vector<24x256xf32> to vector<24x128xf32>
    %c288_53 = arith.constant 288 : index
    %c128_54 = arith.constant 128 : index
    %79 = vector.load %arg8[%c288_53, %c128_54] : memref<600x256xf32, #tpu.memory_space<vmem>>, vector<24x128xf32>
    tpu.vector_store %arg8[%c288_53, %c128_54], %78 {strides = array<i32>} : memref<600x256xf32, #tpu.memory_space<vmem>>, vector<24x128xf32>,
    %80 = vector.extract_strided_slice %53 {offsets = [0, 13], sizes = [24, 128], strides = [1, 1]} : vector<24x256xf32> to vector<24x128xf32>
    %c312_55 = arith.constant 312 : index
    %c128_56 = arith.constant 128 : index
    %81 = vector.load %arg8[%c312_55, %c128_56] : memref<600x256xf32, #tpu.memory_space<vmem>>, vector<24x128xf32>
    tpu.vector_store %arg8[%c312_55, %c128_56], %80 {strides = array<i32>} : memref<600x256xf32, #tpu.memory_space<vmem>>, vector<24x128xf32>,
    %82 = vector.extract_strided_slice %53 {offsets = [0, 14], sizes = [24, 128], strides = [1, 1]} : vector<24x256xf32> to vector<24x128xf32>
    %c336_57 = arith.constant 336 : index
    %c128_58 = arith.constant 128 : index
    %83 = vector.load %arg8[%c336_57, %c128_58] : memref<600x256xf32, #tpu.memory_space<vmem>>, vector<24x128xf32>
    tpu.vector_store %arg8[%c336_57, %c128_58], %82 {strides = array<i32>} : memref<600x256xf32, #tpu.memory_space<vmem>>, vector<24x128xf32>,
    %84 = vector.extract_strided_slice %53 {offsets = [0, 15], sizes = [24, 128], strides = [1, 1]} : vector<24x256xf32> to vector<24x128xf32>
    %c360_59 = arith.constant 360 : index
    %c128_60 = arith.constant 128 : index
    %85 = vector.load %arg8[%c360_59, %c128_60] : memref<600x256xf32, #tpu.memory_space<vmem>>, vector<24x128xf32>
    tpu.vector_store %arg8[%c360_59, %c128_60], %84 {strides = array<i32>} : memref<600x256xf32, #tpu.memory_space<vmem>>, vector<24x128xf32>,
    %86 = vector.extract_strided_slice %53 {offsets = [0, 16], sizes = [24, 128], strides = [1, 1]} : vector<24x256xf32> to vector<24x128xf32>
    %c384_61 = arith.constant 384 : index
    %c128_62 = arith.constant 128 : index
    %87 = vector.load %arg8[%c384_61, %c128_62] : memref<600x256xf32, #tpu.memory_space<vmem>>, vector<24x128xf32>
    tpu.vector_store %arg8[%c384_61, %c128_62], %86 {strides = array<i32>} : memref<600x256xf32, #tpu.memory_space<vmem>>, vector<24x128xf32>,
    %88 = vector.extract_strided_slice %53 {offsets = [0, 17], sizes = [24, 128], strides = [1, 1]} : vector<24x256xf32> to vector<24x128xf32>
    %c408_63 = arith.constant 408 : index
    %c128_64 = arith.constant 128 : index
    %89 = vector.load %arg8[%c408_63, %c128_64] : memref<600x256xf32, #tpu.memory_space<vmem>>, vector<24x128xf32>
    tpu.vector_store %arg8[%c408_63, %c128_64], %88 {strides = array<i32>} : memref<600x256xf32, #tpu.memory_space<vmem>>, vector<24x128xf32>,
    %90 = vector.extract_strided_slice %53 {offsets = [0, 18], sizes = [24, 128], strides = [1, 1]} : vector<24x256xf32> to vector<24x128xf32>
    %c432_65 = arith.constant 432 : index
    %c128_66 = arith.constant 128 : index
    %91 = vector.load %arg8[%c432_65, %c128_66] : memref<600x256xf32, #tpu.memory_space<vmem>>, vector<24x128xf32>
    tpu.vector_store %arg8[%c432_65, %c128_66], %90 {strides = array<i32>} : memref<600x256xf32, #tpu.memory_space<vmem>>, vector<24x128xf32>,
    %92 = vector.extract_strided_slice %53 {offsets = [0, 19], sizes = [24, 128], strides = [1, 1]} : vector<24x256xf32> to vector<24x128xf32>
    %c456_67 = arith.constant 456 : index
    %c128_68 = arith.constant 128 : index
    %93 = vector.load %arg8[%c456_67, %c128_68] : memref<600x256xf32, #tpu.memory_space<vmem>>, vector<24x128xf32>
    tpu.vector_store %arg8[%c456_67, %c128_68], %92 {strides = array<i32>} : memref<600x256xf32, #tpu.memory_space<vmem>>, vector<24x128xf32>,
    %94 = vector.extract_strided_slice %53 {offsets = [0, 20], sizes = [24, 128], strides = [1, 1]} : vector<24x256xf32> to vector<24x128xf32>
    %c480_69 = arith.constant 480 : index
    %c128_70 = arith.constant 128 : index
    %95 = vector.load %arg8[%c480_69, %c128_70] : memref<600x256xf32, #tpu.memory_space<vmem>>, vector<24x128xf32>
    tpu.vector_store %arg8[%c480_69, %c128_70], %94 {strides = array<i32>} : memref<600x256xf32, #tpu.memory_space<vmem>>, vector<24x128xf32>,
    %96 = vector.extract_strided_slice %53 {offsets = [0, 21], sizes = [24, 128], strides = [1, 1]} : vector<24x256xf32> to vector<24x128xf32>
    %c504_71 = arith.constant 504 : index
    %c128_72 = arith.constant 128 : index
    %97 = vector.load %arg8[%c504_71, %c128_72] : memref<600x256xf32, #tpu.memory_space<vmem>>, vector<24x128xf32>
    tpu.vector_store %arg8[%c504_71, %c128_72], %96 {strides = array<i32>} : memref<600x256xf32, #tpu.memory_space<vmem>>, vector<24x128xf32>,
    %98 = vector.extract_strided_slice %53 {offsets = [0, 22], sizes = [24, 128], strides = [1, 1]} : vector<24x256xf32> to vector<24x128xf32>
    %c528_73 = arith.constant 528 : index
    %c128_74 = arith.constant 128 : index
    %99 = vector.load %arg8[%c528_73, %c128_74] : memref<600x256xf32, #tpu.memory_space<vmem>>, vector<24x128xf32>
    tpu.vector_store %arg8[%c528_73, %c128_74], %98 {strides = array<i32>} : memref<600x256xf32, #tpu.memory_space<vmem>>, vector<24x128xf32>,
    %100 = vector.extract_strided_slice %53 {offsets = [0, 23], sizes = [24, 128], strides = [1, 1]} : vector<24x256xf32> to vector<24x128xf32>
    %c552_75 = arith.constant 552 : index
    %c128_76 = arith.constant 128 : index
    %101 = vector.load %arg8[%c552_75, %c128_76] : memref<600x256xf32, #tpu.memory_space<vmem>>, vector<24x128xf32>
    tpu.vector_store %arg8[%c552_75, %c128_76], %100 {strides = array<i32>} : memref<600x256xf32, #tpu.memory_space<vmem>>, vector<24x128xf32>,
    %102 = vector.extract_strided_slice %53 {offsets = [0, 24], sizes = [24, 128], strides = [1, 1]} : vector<24x256xf32> to vector<24x128xf32>
    %c576_77 = arith.constant 576 : index
    %c128_78 = arith.constant 128 : index
    %103 = vector.load %arg8[%c576_77, %c128_78] : memref<600x256xf32, #tpu.memory_space<vmem>>, vector<24x128xf32>
    tpu.vector_store %arg8[%c576_77, %c128_78], %102 {strides = array<i32>} : memref<600x256xf32, #tpu.memory_space<vmem>>, vector<24x128xf32>,
    %c0_79 = arith.constant 0 : index
    %c0_80 = arith.constant 0 : index
    %104 = vector.load %arg2[%c0_79, %c0_80] : memref<40x600xf32, #tpu.memory_space<vmem>>, vector<40x600xf32>
    %c0_81 = arith.constant 0 : index
    %c0_82 = arith.constant 0 : index
    %105 = vector.load %arg8[%c0_81, %c0_82] : memref<600x256xf32, #tpu.memory_space<vmem>>, vector<600x256xf32>
    %cst = arith.constant dense<0.000000e+00> : vector<40x256xf32>
    %106 = tpu.matmul %104, %105, %cst {dimension_numbers = #tpu.dot_dimension_numbers<[1], [0], [0], [1], [0, 0, 1, 1], [], []>} : vector<40x600xf32>, vector<600x256xf32>, vector<40x256xf32> -> vector<40x256xf32>
    %c0_83 = arith.constant 0 : index
    %c0_84 = arith.constant 0 : index
    %107 = vector.load %arg3[%c0_83, %c0_84] : memref<40x1xf32, #tpu.memory_space<vmem>>, vector<40x1xf32>
    %108 = vector.broadcast %107 : vector<40x1xf32> to vector<40x256xf32>
    %109 = arith.addf %106, %108 : vector<40x256xf32>
    %cst_85 = arith.constant 5.000000e-01 : f32
    %110 = vector.broadcast %cst_85 : f32 to vector<40x256xf32>
    %111 = arith.mulf %110, %109 : vector<40x256xf32>
    %cst_86 = arith.constant 0.707106769 : f32
    %112 = vector.broadcast %cst_86 : f32 to vector<40x256xf32>
    %113 = arith.mulf %109, %112 : vector<40x256xf32>
    %114 = math.absf %113 : vector<40x256xf32>
    %cst_87 = arith.constant 0.327591091 : f32
    %115 = vector.broadcast %cst_87 : f32 to vector<40x256xf32>
    %116 = arith.mulf %115, %114 : vector<40x256xf32>
    %cst_88 = arith.constant 1.000000e+00 : f32
    %117 = vector.broadcast %cst_88 : f32 to vector<40x256xf32>
    %118 = arith.addf %117, %116 : vector<40x256xf32>
    %cst_89 = arith.constant 1.000000e+00 : f32
    %119 = vector.broadcast %cst_89 : f32 to vector<40x256xf32>
    %120 = arith.divf %119, %118 : vector<40x256xf32>
    %cst_90 = arith.constant 1.06140542 : f32
    %121 = vector.broadcast %cst_90 : f32 to vector<40x256xf32>
    %122 = arith.mulf %121, %120 : vector<40x256xf32>
    %cst_91 = arith.constant -1.45315206 : f32
    %123 = vector.broadcast %cst_91 : f32 to vector<40x256xf32>
    %124 = arith.addf %122, %123 : vector<40x256xf32>
    %125 = arith.mulf %124, %120 : vector<40x256xf32>
    %cst_92 = arith.constant 1.42141378 : f32
    %126 = vector.broadcast %cst_92 : f32 to vector<40x256xf32>
    %127 = arith.addf %125, %126 : vector<40x256xf32>
    %128 = arith.mulf %127, %120 : vector<40x256xf32>
    %cst_93 = arith.constant -0.284496725 : f32
    %129 = vector.broadcast %cst_93 : f32 to vector<40x256xf32>
    %130 = arith.addf %128, %129 : vector<40x256xf32>
    %131 = arith.mulf %130, %120 : vector<40x256xf32>
    %cst_94 = arith.constant 0.254829586 : f32
    %132 = vector.broadcast %cst_94 : f32 to vector<40x256xf32>
    %133 = arith.addf %131, %132 : vector<40x256xf32>
    %134 = arith.mulf %133, %120 : vector<40x256xf32>
    %cst_95 = arith.constant 0.000000e+00 : f32
    %135 = vector.broadcast %cst_95 : f32 to vector<40x256xf32>
    %136 = arith.subf %135, %114 : vector<40x256xf32>
    %137 = arith.mulf %136, %114 : vector<40x256xf32>
    %138 = math.exp %137 : vector<40x256xf32>
    %139 = arith.mulf %134, %138 : vector<40x256xf32>
    %cst_96 = arith.constant 1.000000e+00 : f32
    %140 = vector.broadcast %cst_96 : f32 to vector<40x256xf32>
    %141 = arith.subf %140, %139 : vector<40x256xf32>
    %cst_97 = arith.constant 0.000000e+00 : f32
    %142 = vector.broadcast %cst_97 : f32 to vector<40x256xf32>
    %143 = arith.cmpf oge, %113, %142 : vector<40x256xf32>
    %cst_98 = arith.constant 0.000000e+00 : f32
    %144 = vector.broadcast %cst_98 : f32 to vector<40x256xf32>
    %145 = arith.subf %144, %141 : vector<40x256xf32>
    %146 = arith.select %143, %141, %145 : vector<40x256xi1>, vector<40x256xf32>
    %cst_99 = arith.constant 1.000000e+00 : f32
    %147 = vector.broadcast %cst_99 : f32 to vector<40x256xf32>
    %148 = arith.addf %147, %146 : vector<40x256xf32>
    %149 = arith.mulf %111, %148 : vector<40x256xf32>
    %150 = vector.extract_strided_slice %149 {offsets = [0, 0], sizes = [40, 128], strides = [1, 1]} : vector<40x256xf32> to vector<40x128xf32>
    %c0_100 = arith.constant 0 : index
    %c0_101 = arith.constant 0 : index
    %151 = vector.load %arg4[%c0_100, %c0_101] : memref<128x128xf32, #tpu.memory_space<vmem>>, vector<128x128xf32>
    %cst_102 = arith.constant dense<0.000000e+00> : vector<40x128xf32>
    %152 = tpu.matmul %150, %151, %cst_102 {dimension_numbers = #tpu.dot_dimension_numbers<[1], [0], [0], [1], [0, 0, 1, 1], [], []>} : vector<40x128xf32>, vector<128x128xf32>, vector<40x128xf32> -> vector<40x128xf32>
    %c0_103 = arith.constant 0 : index
    %c0_104 = arith.constant 0 : index
    %153 = vector.load %arg5[%c0_103, %c0_104] : memref<40x40xf32, #tpu.memory_space<vmem>>, vector<40x40xf32>
    %cst_105 = arith.constant dense<0.000000e+00> : vector<40x128xf32>
    %154 = tpu.matmul %153, %152, %cst_105 {dimension_numbers = #tpu.dot_dimension_numbers<[1], [0], [0], [1], [0, 0, 1, 1], [], []>} : vector<40x40xf32>, vector<40x128xf32>, vector<40x128xf32> -> vector<40x128xf32>
    %c0_106 = arith.constant 0 : index
    %c0_107 = arith.constant 0 : index
    %155 = vector.load %arg6[%c0_106, %c0_107] : memref<40x1xf32, #tpu.memory_space<vmem>>, vector<40x1xf32>
    %156 = vector.broadcast %155 : vector<40x1xf32> to vector<40x128xf32>
    %157 = arith.addf %154, %156 : vector<40x128xf32>
    %c0_108 = arith.constant 0 : index
    %c0_109 = arith.constant 0 : index
    %c0_110 = arith.constant 0 : index
    %158 = vector.load %arg7[%c0_108, %c0_109, %c0_110] : memref<2x40x128xf32, #tpu.memory_space<vmem>>, vector<1x40x128xf32>
    %159 = vector.shape_cast %158 : vector<1x40x128xf32> to vector<40x128xf32>
    %160 = vector.shape_cast %157 : vector<40x128xf32> to vector<1x40x128xf32>
    tpu.vector_store %arg7[%c0_108, %c0_109, %c0_110], %160 {strides = array<i32>} : memref<2x40x128xf32, #tpu.memory_space<vmem>>, vector<1x40x128xf32>,
    %161 = vector.extract_strided_slice %149 {offsets = [0, 128], sizes = [40, 128], strides = [1, 1]} : vector<40x256xf32> to vector<40x128xf32>
    %c0_111 = arith.constant 0 : index
    %c0_112 = arith.constant 0 : index
    %162 = vector.load %arg4[%c0_111, %c0_112] : memref<128x128xf32, #tpu.memory_space<vmem>>, vector<128x128xf32>
    %cst_113 = arith.constant dense<0.000000e+00> : vector<40x128xf32>
    %163 = tpu.matmul %161, %162, %cst_113 {dimension_numbers = #tpu.dot_dimension_numbers<[1], [0], [0], [1], [0, 0, 1, 1], [], []>} : vector<40x128xf32>, vector<128x128xf32>, vector<40x128xf32> -> vector<40x128xf32>
    %c0_114 = arith.constant 0 : index
    %c0_115 = arith.constant 0 : index
    %164 = vector.load %arg5[%c0_114, %c0_115] : memref<40x40xf32, #tpu.memory_space<vmem>>, vector<40x40xf32>
    %cst_116 = arith.constant dense<0.000000e+00> : vector<40x128xf32>
    %165 = tpu.matmul %164, %163, %cst_116 {dimension_numbers = #tpu.dot_dimension_numbers<[1], [0], [0], [1], [0, 0, 1, 1], [], []>} : vector<40x40xf32>, vector<40x128xf32>, vector<40x128xf32> -> vector<40x128xf32>
    %c0_117 = arith.constant 0 : index
    %c0_118 = arith.constant 0 : index
    %166 = vector.load %arg6[%c0_117, %c0_118] : memref<40x1xf32, #tpu.memory_space<vmem>>, vector<40x1xf32>
    %167 = vector.broadcast %166 : vector<40x1xf32> to vector<40x128xf32>
    %168 = arith.addf %165, %167 : vector<40x128xf32>
    %c1_119 = arith.constant 1 : index
    %c0_120 = arith.constant 0 : index
    %c0_121 = arith.constant 0 : index
    %169 = vector.load %arg7[%c1_119, %c0_120, %c0_121] : memref<2x40x128xf32, #tpu.memory_space<vmem>>, vector<1x40x128xf32>
    %170 = vector.shape_cast %169 : vector<1x40x128xf32> to vector<40x128xf32>
    %171 = vector.shape_cast %168 : vector<40x128xf32> to vector<1x40x128xf32>
    tpu.vector_store %arg7[%c1_119, %c0_120, %c0_121], %171 {strides = array<i32>} : memref<2x40x128xf32, #tpu.memory_space<vmem>>, vector<1x40x128xf32>,
    return
  }
  func.func @transform_0(%arg0: i32) -> (i32, i32, i32) {
    %c0_i32 = arith.constant 0 : i32
    %c0_i32_0 = arith.constant 0 : i32
    %c0_i32_1 = arith.constant 0 : i32
    return %arg0, %c0_i32, %c0_i32_0 : i32, i32, i32
  }
  func.func @transform_1(%arg0: i32) -> (i32, i32) {
    %c0_i32 = arith.constant 0 : i32
    %c0_i32_0 = arith.constant 0 : i32
    %c0_i32_1 = arith.constant 0 : i32
    return %c0_i32, %c0_i32_0 : i32, i32
  }
  func.func @transform_2(%arg0: i32) -> (i32, i32) {
    %c0_i32 = arith.constant 0 : i32
    %c0_i32_0 = arith.constant 0 : i32
    %c0_i32_1 = arith.constant 0 : i32
    return %c0_i32, %c0_i32_0 : i32, i32
  }
  func.func @transform_3(%arg0: i32) -> (i32, i32) {
    %c0_i32 = arith.constant 0 : i32
    %c0_i32_0 = arith.constant 0 : i32
    %c0_i32_1 = arith.constant 0 : i32
    return %c0_i32, %c0_i32_0 : i32, i32
  }
  func.func @transform_4(%arg0: i32) -> (i32, i32) {
    %c0_i32 = arith.constant 0 : i32
    %c0_i32_0 = arith.constant 0 : i32
    %c0_i32_1 = arith.constant 0 : i32
    return %c0_i32, %c0_i32_0 : i32, i32
  }
  func.func @transform_5(%arg0: i32) -> (i32, i32) {
    %c0_i32 = arith.constant 0 : i32
    %c0_i32_0 = arith.constant 0 : i32
    %c0_i32_1 = arith.constant 0 : i32
    return %c0_i32, %c0_i32_0 : i32, i32
  }
  func.func @transform_6(%arg0: i32) -> (i32, i32, i32) {
    %c0_i32 = arith.constant 0 : i32
    %c0_i32_0 = arith.constant 0 : i32
    %c0_i32_1 = arith.constant 0 : i32
    return %arg0, %c0_i32, %c0_i32_0 : i32, i32, i32
  }
}

</mosaic_0001>

<llo_original>
// kernel: tpu_custom_call.1
$region0: #{tpu_custom_call.1}
  #allocation0 [shape = 'u32[]', space=smem, size = 0x4, offset = 0x4, fixed_abs, tag = 'smem constant byte address 0x4 - core index']
  #allocation1 [shape = 'u32[144,128]{1,0:T(1,128)}', space=vmem, size = 0x12000, scoped, tag = 'internal scratch']
  #allocation2 [shape = 'f32[600,256]{1,0:T(8,128)}', space=vmem, size = 0x96000, scoped, tag = 'scratch operand']
  %s0 = inlined_call_operand.hbm [shape: f32[4,24,256], index: 0, kind: input, shape index: {}]
  %s1 = inlined_call_operand.hbm [shape: f32[40,600], index: 1, kind: input, shape index: {}]
  %s2 = inlined_call_operand.vmem [shape: f32[40,1], index: 2, kind: input, shape index: {}]
  %s3 = inlined_call_operand.hbm [shape: f32[128,128], index: 3, kind: input, shape index: {}]
  %s4 = inlined_call_operand.vmem [shape: f32[40,40], index: 4, kind: input, shape index: {}]
  %s5 = inlined_call_operand.vmem [shape: f32[40,1], index: 5, kind: input, shape index: {}]
  %s6 = inlined_call_operand.hbm [shape: f32[4,40,128], index: 6, kind: output, shape index: {}]
  %s7 = sld [smem:[#allocation0]]
  $region69: #{tpu_custom_call.1} parent=0
    _
  %s9 = ssub.s32 1, %s7
  %s10 = scalar_select 0, %s9, %s7
  $region1: #{tpu_custom_call.1} parent=0
    #allocation3 [shape = 'u8[98304]{0}', space=vmem, size = 0x18000, scoped, tag = 'input window, operand 0']
    #allocation4 [shape = 's32[2]{0}', space=sflag, size = 0x8, scoped, tag = 'scoped memory for tpu_custom_call.1']
    #allocation5 [shape = 's32[2]{0}', space=sflag, size = 0x8, scoped, tag = 'scoped memory for tpu_custom_call.1']
    #allocation6 [shape = 'u8[102400]{0}', space=vmem, size = 0x19000, scoped, tag = 'input window, operand 1, single buffered']
    #allocation7 [shape = 's32[1]{0}', space=sflag, size = 0x4, scoped, tag = 'scoped memory for tpu_custom_call.1']
    #allocation8 [shape = 'u8[65536]{0}', space=vmem, size = 0x10000, scoped, tag = 'input window, operand 3, single buffered']
    #allocation9 [shape = 'u8[81920]{0}', space=vmem, size = 0x14000, scoped, tag = 'output window, operand 0']
    %11 = vsyncpa [#allocation4], 0
    %s12 = scalar_lea.sflag [#allocation4], 1
    %13 = vsyncpa %s12, 0
    %14 = vsyncpa [#allocation7], 0
    %15 = vsyncpa [#allocation5], 0
    %s16 = scalar_lea.sflag [#allocation5], 1
    %17 = vsyncpa %s16, 0
    loop: start=0, step=1, limit=4
    $region2: #{tpu_custom_call.1} parent=1 // loop_pre_header
      _
    $region3: #{tpu_custom_call.1} parent=1 // loop_header
      %s19 = sphi 0, %s23
      %p20 = scmp.ge.s32.totalorder %s19, 4
      %s29 = sphi 0, %s31
      %s32 = sphi 0, %s29
      %s33 = sphi 0, %s32
      %s49 = sphi 0, %s33
      %s53 = sphi 0, %s53
      %s55 = sphi 0, %s53
      %s56 = sphi 0, %s55
      %s70 = sphi 0, %s56
      %s74 = sphi 0, %s74
      %s76 = sphi 0, %s74
      %s77 = sphi 0, %s76
      %s91 = sphi 0, %s77
      %s95 = sphi 0, %s95
      %s97 = sphi 0, %s95
      %s98 = sphi 0, %s97
      %s112 = sphi 0, %s98
      %s116 = sphi 0, %s116
      %s118 = sphi 0, %s116
      %s119 = sphi 0, %s118
      %s133 = sphi 0, %s119
      %s137 = sphi 0, %s137
      %s139 = sphi 0, %s137
      %s140 = sphi 0, %s139
      %s154 = sphi 0, %s140
      %s160 = sphi 0, %s162
      %s163 = sphi 0, %s160
      %s164 = sphi 0, %s163
      %s180 = sphi 0, %s164
    $region4: #{tpu_custom_call.1} parent=1 // loop_header_branch
      %22 = sbr.rel (%p20) target = $region8
    $region5: #{tpu_custom_call.1} parent=1 // loop_body
      %s24 = ssub.s32 %s19, 1
      %s25 = ssub.s32 %s19, 2
      %s26 = sadd.s32 %s19, 1
      %s27 = ssub.s32 %s19, %s26
      %p28 = scmp.eq.s32.totalorder %s27, 0
      %s30 = sadd.s32 %s29, 1
      %s31 = scalar_select %p28, %s29, %s30
      %p34 = pneg %p28
      %p35 = scmp.eq.s32.totalorder %s19, 1
      %p36 = por %p34, %p35
      %p37 = scmp.ne.s32.totalorder %s29, %s32
      %p38 = scmp.eq.s32.totalorder %s19, 0
      %p39 = por %p37, %p38
      %p40 = scmp.ne.s32.totalorder %s29, %s32
      %p41 = scmp.eq.s32.totalorder %s24, 1
      %p42 = por %p40, %p41
      %p43 = scmp.ne.s32.totalorder %s32, %s33
      %p44 = scmp.eq.s32.totalorder %s24, 0
      %p45 = por %p43, %p44
      %p46 = scmp.ne.s32.totalorder %s32, %s33
      %p47 = scmp.eq.s32.totalorder %s25, 1
      %p48 = por %p46, %p47
      %p50 = scmp.ne.s32.totalorder %s33, %s49
      %p51 = scmp.eq.s32.totalorder %s25, 0
      %p52 = por %p50, %p51
      %s54 = sadd.s32 %s53, 1
      %p57 = scmp.eq.s32.totalorder %s19, 1
      %p58 = scmp.ne.s32.totalorder %s53, %s55
      %p59 = scmp.eq.s32.totalorder %s19, 0
      %p60 = por %p58, %p59
      %p61 = scmp.ne.s32.totalorder %s53, %s55
      %p62 = scmp.eq.s32.totalorder %s24, 1
      %p63 = por %p61, %p62
      %p64 = scmp.ne.s32.totalorder %s55, %s56
      %p65 = scmp.eq.s32.totalorder %s24, 0
      %p66 = por %p64, %p65
      %p67 = scmp.ne.s32.totalorder %s55, %s56
      %p68 = scmp.eq.s32.totalorder %s25, 1
      %p69 = por %p67, %p68
      %p71 = scmp.ne.s32.totalorder %s56, %s70
      %p72 = scmp.eq.s32.totalorder %s25, 0
      %p73 = por %p71, %p72
      %s75 = sadd.s32 %s74, 1
      %p78 = scmp.eq.s32.totalorder %s19, 1
      %p79 = scmp.ne.s32.totalorder %s74, %s76
      %p80 = scmp.eq.s32.totalorder %s19, 0
      %p81 = por %p79, %p80
      %p82 = scmp.ne.s32.totalorder %s74, %s76
      %p83 = scmp.eq.s32.totalorder %s24, 1
      %p84 = por %p82, %p83
      %p85 = scmp.ne.s32.totalorder %s76, %s77
      %p86 = scmp.eq.s32.totalorder %s24, 0
      %p87 = por %p85, %p86
      %p88 = scmp.ne.s32.totalorder %s76, %s77
      %p89 = scmp.eq.s32.totalorder %s25, 1
      %p90 = por %p88, %p89
      %p92 = scmp.ne.s32.totalorder %s77, %s91
      %p93 = scmp.eq.s32.totalorder %s25, 0
      %p94 = por %p92, %p93
      %s96 = sadd.s32 %s95, 1
      %p99 = scmp.eq.s32.totalorder %s19, 1
      %p100 = scmp.ne.s32.totalorder %s95, %s97
      %p101 = scmp.eq.s32.totalorder %s19, 0
      %p102 = por %p100, %p101
      %p103 = scmp.ne.s32.totalorder %s95, %s97
      %p104 = scmp.eq.s32.totalorder %s24, 1
      %p105 = por %p103, %p104
      %p106 = scmp.ne.s32.totalorder %s97, %s98
      %p107 = scmp.eq.s32.totalorder %s24, 0
      %p108 = por %p106, %p107
      %p109 = scmp.ne.s32.totalorder %s97, %s98
      %p110 = scmp.eq.s32.totalorder %s25, 1
      %p111 = por %p109, %p110
      %p113 = scmp.ne.s32.totalorder %s98, %s112
      %p114 = scmp.eq.s32.totalorder %s25, 0
      %p115 = por %p113, %p114
      %s117 = sadd.s32 %s116, 1
      %p120 = scmp.eq.s32.totalorder %s19, 1
      %p121 = scmp.ne.s32.totalorder %s116, %s118
      %p122 = scmp.eq.s32.totalorder %s19, 0
      %p123 = por %p121, %p122
      %p124 = scmp.ne.s32.totalorder %s116, %s118
      %p125 = scmp.eq.s32.totalorder %s24, 1
      %p126 = por %p124, %p125
      %p127 = scmp.ne.s32.totalorder %s118, %s119
      %p128 = scmp.eq.s32.totalorder %s24, 0
      %p129 = por %p127, %p128
      %p130 = scmp.ne.s32.totalorder %s118, %s119
      %p131 = scmp.eq.s32.totalorder %s25, 1
      %p132 = por %p130, %p131
      %p134 = scmp.ne.s32.totalorder %s119, %s133
      %p135 = scmp.eq.s32.totalorder %s25, 0
      %p136 = por %p134, %p135
      %s138 = sadd.s32 %s137, 1
      %p141 = scmp.eq.s32.totalorder %s19, 1
      %p142 = scmp.ne.s32.totalorder %s137, %s139
      %p143 = scmp.eq.s32.totalorder %s19, 0
      %p144 = por %p142, %p143
      %p145 = scmp.ne.s32.totalorder %s137, %s139
      %p146 = scmp.eq.s32.totalorder %s24, 1
      %p147 = por %p145, %p146
      %p148 = scmp.ne.s32.totalorder %s139, %s140
      %p149 = scmp.eq.s32.totalorder %s24, 0
      %p150 = por %p148, %p149
      %p151 = scmp.ne.s32.totalorder %s139, %s140
      %p152 = scmp.eq.s32.totalorder %s25, 1
      %p153 = por %p151, %p152
      %p155 = scmp.ne.s32.totalorder %s140, %s154
      %p156 = scmp.eq.s32.totalorder %s25, 0
      %p157 = por %p155, %p156
      %s158 = ssub.s32 %s19, %s26
      %p159 = scmp.eq.s32.totalorder %s158, 0
      %s161 = sadd.s32 %s160, 1
      %s162 = scalar_select %p159, %s160, %s161
      %p165 = pneg %p159
      %p166 = scmp.eq.s32.totalorder %s19, 1
      %p167 = por %p165, %p166
      %p168 = scmp.ne.s32.totalorder %s160, %s163
      %p169 = scmp.eq.s32.totalorder %s19, 0
      %p170 = por %p168, %p169
      %p171 = scmp.ne.s32.totalorder %s160, %s163
      %p172 = scmp.eq.s32.totalorder %s24, 1
      %p173 = por %p171, %p172
      %p174 = scmp.ne.s32.totalorder %s163, %s164
      %p175 = scmp.eq.s32.totalorder %s24, 0
      %p176 = por %p174, %p175
      %p177 = scmp.ne.s32.totalorder %s163, %s164
      %p178 = scmp.eq.s32.totalorder %s25, 1
      %p179 = por %p177, %p178
      %p181 = scmp.ne.s32.totalorder %s164, %s180
      %p182 = scmp.eq.s32.totalorder %s25, 0
      %p183 = por %p181, %p182
      %p184 = scmp.le.s32.totalorder 1, %s19
      %p185 = scmp.lt.s32.totalorder %s19, 3
      %p186 = pnand %p184, %p185
      %p187 = pneg %p186
      // Predicated region
      $region9: #{tpu_custom_call.1} parent=5 // pred_check
        _
      $region10: #{tpu_custom_call.1} parent=5 // pred_check_branch
        %189 = sbr.rel (%p186) target = $region12
      $region11: #{tpu_custom_call.1} parent=5 // pred_region
        %s190 = ssub.s32 %s19, 1
        // Predicated region
        $region13: #{tpu_custom_call.1} parent=11 // pred_check
          %p191 = pneg %p66
        $region14: #{tpu_custom_call.1} parent=11 // pred_check_branch
          %193 = sbr.rel (%p191) target = $region16
        $region15: #{tpu_custom_call.1} parent=11 // pred_region
          %s195 = ssub.s32 3200, 3200
          %196 = vsyncadd [#allocation7], %s195
          %s197 = sshll.u32 [#allocation6], 4
          %s198 = int_to_ptr.vmem [resolvable:$true] %s197
          %203 = dma.hbm_to_vmem [thread:$0]  %s1, 3200, %s198, [#allocation7], 640, 640, 40
        $region16: #{tpu_custom_call.1} parent=11 // pred_fallthru
          _
        // Predicated region
        $region17: #{tpu_custom_call.1} parent=11 // pred_check
          %p204 = pneg %p87
        $region18: #{tpu_custom_call.1} parent=11 // pred_check_branch
          %206 = sbr.rel (%p204) target = $region20
        $region19: #{tpu_custom_call.1} parent=11 // pred_region
          _
        $region20: #{tpu_custom_call.1} parent=11 // pred_fallthru
          _
        // Predicated region
        $region21: #{tpu_custom_call.1} parent=11 // pred_check
          %p207 = pneg %p108
        $region22: #{tpu_custom_call.1} parent=11 // pred_check_branch
          %209 = sbr.rel (%p207) target = $region24
        $region23: #{tpu_custom_call.1} parent=11 // pred_region
          %s211 = ssub.s32 2048, 2048
          %212 = vsyncadd [#allocation7], %s211
          %s213 = sshll.u32 [#allocation8], 4
          %s214 = int_to_ptr.vmem [resolvable:$true] %s213
          %219 = dma.hbm_to_vmem [thread:$0]  %s3, 2048, %s214, [#allocation7], 128, 128, 8
        $region24: #{tpu_custom_call.1} parent=11 // pred_fallthru
          _
        // Predicated region
        $region25: #{tpu_custom_call.1} parent=11 // pred_check
          %p220 = pneg %p129
        $region26: #{tpu_custom_call.1} parent=11 // pred_check_branch
          %222 = sbr.rel (%p220) target = $region28
        $region27: #{tpu_custom_call.1} parent=11 // pred_region
          _
        $region28: #{tpu_custom_call.1} parent=11 // pred_fallthru
          _
        // Predicated region
        $region29: #{tpu_custom_call.1} parent=11 // pred_check
          %p223 = pneg %p150
        $region30: #{tpu_custom_call.1} parent=11 // pred_check_branch
          %225 = sbr.rel (%p223) target = $region32
        $region31: #{tpu_custom_call.1} parent=11 // pred_region
          _
        $region32: #{tpu_custom_call.1} parent=11 // pred_fallthru
          _
      $region12: #{tpu_custom_call.1} parent=5 // pred_fallthru
        _
      %p226 = scmp.lt.s32.totalorder %s19, 2
      // Predicated region
      $region33: #{tpu_custom_call.1} parent=5 // pred_check
        %p227 = pneg %p226
      $region34: #{tpu_custom_call.1} parent=5 // pred_check_branch
        %229 = sbr.rel (%p227) target = $region36
      $region35: #{tpu_custom_call.1} parent=5 // pred_region
        // Predicated region
        $region37: #{tpu_custom_call.1} parent=35 // pred_check
          %p230 = pneg %p39
        $region38: #{tpu_custom_call.1} parent=35 // pred_check_branch
          %232 = sbr.rel (%p230) target = $region40
        $region39: #{tpu_custom_call.1} parent=35 // pred_region
          %s233 = sand.u32 %s29, 1
          %s234 = scalar_lea.sflag [#allocation4], %s233
          %s235 = sand.u32 %s29, 1
          %s236 = smul.addr %s235, 96
          %s237 = scalar_lea.vmem [#allocation3], %s236
          %s238 = smul.u32 2, %s19
          %s240 = ssub.s32 1536, 1536
          %241 = vsyncadd %s234, %s240
          %s242 = smul.addr %s238, 6
          %s243 = smul.addr %s242, 128
          %s244 = scalar_lea.hbm %s0, %s243
          %s245 = sshll.u32 %s237, 4
          %s246 = int_to_ptr.vmem [resolvable:$true] %s245
          %251 = dma.hbm_to_vmem [thread:$0]  %s244, 1536, %s246, %s234, 256, 256, 16
        $region40: #{tpu_custom_call.1} parent=35 // pred_fallthru
          _
      $region36: #{tpu_custom_call.1} parent=5 // pred_fallthru
        _
      %p252 = scmp.le.s32.totalorder 1, %s19
      %p253 = scmp.lt.s32.totalorder %s19, 3
      %p254 = pnand %p252, %p253
      %p255 = pneg %p254
      // Predicated region
      $region41: #{tpu_custom_call.1} parent=5 // pred_check
        _
      $region42: #{tpu_custom_call.1} parent=5 // pred_check_branch
        %257 = sbr.rel (%p254) target = $region44
      $region43: #{tpu_custom_call.1} parent=5 // pred_region
        %s258 = ssub.s32 %s19, 1
        %s259 = sand.u32 %s32, 1
        %s260 = scalar_lea.sflag [#allocation4], %s259
        %s261 = sand.u32 %s32, 1
        %s262 = smul.addr %s261, 96
        %s263 = scalar_lea.vmem [#allocation3], %s262
        // Predicated region
        $region45: #{tpu_custom_call.1} parent=43 // pred_check
          %p264 = pneg %p45
        $region46: #{tpu_custom_call.1} parent=43 // pred_check_branch
          %266 = sbr.rel (%p264) target = $region48
        $region47: #{tpu_custom_call.1} parent=43 // pred_region
          %267 = dma.done %s260, 1536
        $region48: #{tpu_custom_call.1} parent=43 // pred_fallthru
          _
        // Predicated region
        $region49: #{tpu_custom_call.1} parent=43 // pred_check
          %p268 = pneg %p66
        $region50: #{tpu_custom_call.1} parent=43 // pred_check_branch
          %270 = sbr.rel (%p268) target = $region52
        $region51: #{tpu_custom_call.1} parent=43 // pred_region
          %271 = dma.done [#allocation7], 3200
        $region52: #{tpu_custom_call.1} parent=43 // pred_fallthru
          _
        // Predicated region
        $region53: #{tpu_custom_call.1} parent=43 // pred_check
          %p272 = pneg %p108
        $region54: #{tpu_custom_call.1} parent=43 // pred_check_branch
          %274 = sbr.rel (%p272) target = $region56
        $region55: #{tpu_custom_call.1} parent=43 // pred_region
          %275 = dma.done [#allocation7], 2048
        $region56: #{tpu_custom_call.1} parent=43 // pred_fallthru
          _
        %s276 = sand.u32 %s32, 1
        %s277 = scalar_lea.sflag [#allocation4], %s276
        %s278 = sand.u32 %s32, 1
        %s279 = smul.addr %s278, 96
        %s280 = scalar_lea.vmem [#allocation3], %s279
        %p281 = pneg %p45
        %p282 = pneg %p42
        %p283 = pneg %p66
        %p284 = pneg %p63
        %p285 = pneg %p87
        %p286 = pneg %p84
        %p287 = pneg %p108
        %p288 = pneg %p105
        %p289 = pneg %p129
        %p290 = pneg %p126
        %p291 = pneg %p150
        %p292 = pneg %p147
        %p293 = pneg %p176
        %p294 = pneg %p173
        %s295 = sand.u32 %s163, 1
        %s296 = scalar_lea.sflag [#allocation5], %s295
        %s297 = sand.u32 %s163, 1
        %s298 = smul.addr %s297, 80
        %s299 = scalar_lea.vmem [#allocation9], %s298
        %s300 = smul.u32 2, %s24
        %s301 = smul.u32 2, %s24
        %v302 = vld [vmem:[%s263] sm:$0xff]
        %v303 = vld [vmem:[%s263 + $0x8] sm:$0xff]
        %v304 = vld [vmem:[%s263 + $0x10] sm:$0xff]
        %v305 = vld [vmem:[%s263 + $0x18] sm:$0xff]
        %v306 = vld [vmem:[%s263 + $0x20] sm:$0xff]
        %v307 = vld [vmem:[%s263 + $0x28] sm:$0xff]
        %308 = vst [vmem:[#allocation2] sm:$0xff] %v302
        %309 = vst [vmem:[#allocation2 + $0x10] sm:$0xff] %v304
        %310 = vst [vmem:[#allocation2 + $0x20] sm:$0xff] %v306
        %317 = vrot.lane.b32.xlu0 %v302, 127
        %v318 = vpop.permute.xlu0 %317
        %319 = vrot.lane.b32.xlu0 %v303, 127
        %v320 = vpop.permute.xlu0 %319
        %321 = vrot.lane.b32.xlu0 %v304, 127
        %v322 = vpop.permute.xlu0 %321
        %323 = vrot.lane.b32.xlu0 %v305, 127
        %v324 = vpop.permute.xlu0 %323
        %325 = vrot.lane.b32.xlu0 %v306, 127
        %v326 = vpop.permute.xlu0 %325
        %327 = vrot.lane.b32.xlu0 %v307, 127
        %v328 = vpop.permute.xlu0 %327
        %vm329 = vcmask 1039360
        %v330 = vsel %vm329, %v318, %v320
        %v331 = vsel %vm329, %v322, %v324
        %v332 = vsel %vm329, %v326, %v328
        %336 = vst [vmem:[#allocation2 + $0x30] sm:$0xff] %v330
        %337 = vst [vmem:[#allocation2 + $0x40] sm:$0xff] %v331
        %338 = vst [vmem:[#allocation2 + $0x50] sm:$0xff] %v332
        %339 = vrot.lane.b32.xlu0 %v302, 126
        %v340 = vpop.permute.xlu0 %339
        %341 = vrot.lane.b32.xlu0 %v303, 126
        %v342 = vpop.permute.xlu0 %341
        %343 = vrot.lane.b32.xlu0 %v304, 126
        %v344 = vpop.permute.xlu0 %343
        %345 = vrot.lane.b32.xlu0 %v305, 126
        %v346 = vpop.permute.xlu0 %345
        %347 = vrot.lane.b32.xlu0 %v306, 126
        %v348 = vpop.permute.xlu0 %347
        %349 = vrot.lane.b32.xlu0 %v307, 126
        %v350 = vpop.permute.xlu0 %349
        %vm351 = vcmask 1031168
        %v352 = vsel %vm351, %v340, %v342
        %v353 = vsel %vm351, %v344, %v346
        %v354 = vsel %vm351, %v348, %v350
        %358 = vst [vmem:[#allocation2 + $0x60] sm:$0xff] %v352
        %359 = vst [vmem:[#allocation2 + $0x70] sm:$0xff] %v353
        %360 = vst [vmem:[#allocation2 + $0x80] sm:$0xff] %v354
        %361 = vrot.lane.b32.xlu0 %v302, 125
        %v362 = vpop.permute.xlu0 %361
        %363 = vrot.lane.b32.xlu0 %v303, 125
        %v364 = vpop.permute.xlu0 %363
        %365 = vrot.lane.b32.xlu0 %v304, 125
        %v366 = vpop.permute.xlu0 %365
        %367 = vrot.lane.b32.xlu0 %v305, 125
        %v368 = vpop.permute.xlu0 %367
        %369 = vrot.lane.b32.xlu0 %v306, 125
        %v370 = vpop.permute.xlu0 %369
        %371 = vrot.lane.b32.xlu0 %v307, 125
        %v372 = vpop.permute.xlu0 %371
        %vm373 = vcmask 1022976
        %v374 = vsel %vm373, %v362, %v364
        %v375 = vsel %vm373, %v366, %v368
        %v376 = vsel %vm373, %v370, %v372
        %380 = vst [vmem:[#allocation2 + $0x90] sm:$0xff] %v374
        %381 = vst [vmem:[#allocation2 + $0xa0] sm:$0xff] %v375
        %382 = vst [vmem:[#allocation2 + $0xb0] sm:$0xff] %v376
        %383 = vrot.lane.b32.xlu0 %v302, 124
        %v384 = vpop.permute.xlu0 %383
        %385 = vrot.lane.b32.xlu0 %v303, 124
        %v386 = vpop.permute.xlu0 %385
        %387 = vrot.lane.b32.xlu0 %v304, 124
        %v388 = vpop.permute.xlu0 %387
        %389 = vrot.lane.b32.xlu0 %v305, 124
        %v390 = vpop.permute.xlu0 %389
        %391 = vrot.lane.b32.xlu0 %v306, 124
        %v392 = vpop.permute.xlu0 %391
        %393 = vrot.lane.b32.xlu0 %v307, 124
        %v394 = vpop.permute.xlu0 %393
        %vm395 = vcmask 1014784
        %v396 = vsel %vm395, %v384, %v386
        %v397 = vsel %vm395, %v388, %v390
        %v398 = vsel %vm395, %v392, %v394
        %402 = vst [vmem:[#allocation2 + $0xc0] sm:$0xff] %v396
        %403 = vst [vmem:[#allocation2 + $0xd0] sm:$0xff] %v397
        %404 = vst [vmem:[#allocation2 + $0xe0] sm:$0xff] %v398
        %405 = vrot.lane.b32.xlu0 %v302, 123
        %v406 = vpop.permute.xlu0 %405
        %407 = vrot.lane.b32.xlu0 %v303, 123
        %v408 = vpop.permute.xlu0 %407
        %409 = vrot.lane.b32.xlu0 %v304, 123
        %v410 = vpop.permute.xlu0 %409
        %411 = vrot.lane.b32.xlu0 %v305, 123
        %v412 = vpop.permute.xlu0 %411
        %413 = vrot.lane.b32.xlu0 %v306, 123
        %v414 = vpop.permute.xlu0 %413
        %415 = vrot.lane.b32.xlu0 %v307, 123
        %v416 = vpop.permute.xlu0 %415
        %vm417 = vcmask 1006592
        %v418 = vsel %vm417, %v406, %v408
        %v419 = vsel %vm417, %v410, %v412
        %v420 = vsel %vm417, %v414, %v416
        %424 = vst [vmem:[#allocation2 + $0xf0] sm:$0xff] %v418
        %425 = vst [vmem:[#allocation2 + $0x100] sm:$0xff] %v419
        %426 = vst [vmem:[#allocation2 + $0x110] sm:$0xff] %v420
        %427 = vrot.lane.b32.xlu0 %v302, 122
        %v428 = vpop.permute.xlu0 %427
        %429 = vrot.lane.b32.xlu0 %v303, 122
        %v430 = vpop.permute.xlu0 %429
        %431 = vrot.lane.b32.xlu0 %v304, 122
        %v432 = vpop.permute.xlu0 %431
        %433 = vrot.lane.b32.xlu0 %v305, 122
        %v434 = vpop.permute.xlu0 %433
        %435 = vrot.lane.b32.xlu0 %v306, 122
        %v436 = vpop.permute.xlu0 %435
        %437 = vrot.lane.b32.xlu0 %v307, 122
        %v438 = vpop.permute.xlu0 %437
        %vm439 = vcmask 998400
        %v440 = vsel %vm439, %v428, %v430
        %v441 = vsel %vm439, %v432, %v434
        %v442 = vsel %vm439, %v436, %v438
        %446 = vst [vmem:[#allocation2 + $0x120] sm:$0xff] %v440
        %447 = vst [vmem:[#allocation2 + $0x130] sm:$0xff] %v441
        %448 = vst [vmem:[#allocation2 + $0x140] sm:$0xff] %v442
        %449 = vrot.lane.b32.xlu0 %v302, 121
        %v450 = vpop.permute.xlu0 %449
        %451 = vrot.lane.b32.xlu0 %v303, 121
        %v452 = vpop.permute.xlu0 %451
        %453 = vrot.lane.b32.xlu0 %v304, 121
        %v454 = vpop.permute.xlu0 %453
        %455 = vrot.lane.b32.xlu0 %v305, 121
        %v456 = vpop.permute.xlu0 %455
        %457 = vrot.lane.b32.xlu0 %v306, 121
        %v458 = vpop.permute.xlu0 %457
        %459 = vrot.lane.b32.xlu0 %v307, 121
        %v460 = vpop.permute.xlu0 %459
        %vm461 = vcmask 990208
        %v462 = vsel %vm461, %v450, %v452
        %v463 = vsel %vm461, %v454, %v456
        %v464 = vsel %vm461, %v458, %v460
        %468 = vst [vmem:[#allocation2 + $0x150] sm:$0xff] %v462
        %469 = vst [vmem:[#allocation2 + $0x160] sm:$0xff] %v463
        %470 = vst [vmem:[#allocation2 + $0x170] sm:$0xff] %v464
        %471 = vrot.lane.b32.xlu0 %v302, 120
        %v472 = vpop.permute.xlu0 %471
        %473 = vrot.lane.b32.xlu0 %v303, 120
        %v474 = vpop.permute.xlu0 %473
        %475 = vrot.lane.b32.xlu0 %v304, 120
        %v476 = vpop.permute.xlu0 %475
        %477 = vrot.lane.b32.xlu0 %v305, 120
        %v478 = vpop.permute.xlu0 %477
        %479 = vrot.lane.b32.xlu0 %v306, 120
        %v480 = vpop.permute.xlu0 %479
        %481 = vrot.lane.b32.xlu0 %v307, 120
        %v482 = vpop.permute.xlu0 %481
        %vm483 = vcmask 982016
        %v484 = vsel %vm483, %v472, %v474
        %v485 = vsel %vm483, %v476, %v478
        %v486 = vsel %vm483, %v480, %v482
        %490 = vst [vmem:[#allocation2 + $0x180] sm:$0xff] %v484
        %491 = vst [vmem:[#allocation2 + $0x190] sm:$0xff] %v485
        %492 = vst [vmem:[#allocation2 + $0x1a0] sm:$0xff] %v486
        %493 = vrot.lane.b32.xlu0 %v302, 119
        %v494 = vpop.permute.xlu0 %493
        %495 = vrot.lane.b32.xlu0 %v303, 119
        %v496 = vpop.permute.xlu0 %495
        %497 = vrot.lane.b32.xlu0 %v304, 119
        %v498 = vpop.permute.xlu0 %497
        %499 = vrot.lane.b32.xlu0 %v305, 119
        %v500 = vpop.permute.xlu0 %499
        %501 = vrot.lane.b32.xlu0 %v306, 119
        %v502 = vpop.permute.xlu0 %501
        %503 = vrot.lane.b32.xlu0 %v307, 119
        %v504 = vpop.permute.xlu0 %503
        %vm505 = vcmask 973824
        %v506 = vsel %vm505, %v494, %v496
        %v507 = vsel %vm505, %v498, %v500
        %v508 = vsel %vm505, %v502, %v504
        %512 = vst [vmem:[#allocation2 + $0x1b0] sm:$0xff] %v506
        %513 = vst [vmem:[#allocation2 + $0x1c0] sm:$0xff] %v507
        %514 = vst [vmem:[#allocation2 + $0x1d0] sm:$0xff] %v508
        %515 = vrot.lane.b32.xlu0 %v302, 118
        %v516 = vpop.permute.xlu0 %515
        %517 = vrot.lane.b32.xlu0 %v303, 118
        %v518 = vpop.permute.xlu0 %517
        %519 = vrot.lane.b32.xlu0 %v304, 118
        %v520 = vpop.permute.xlu0 %519
        %521 = vrot.lane.b32.xlu0 %v305, 118
        %v522 = vpop.permute.xlu0 %521
        %523 = vrot.lane.b32.xlu0 %v306, 118
        %v524 = vpop.permute.xlu0 %523
        %525 = vrot.lane.b32.xlu0 %v307, 118
        %v526 = vpop.permute.xlu0 %525
        %vm527 = vcmask 965632
        %v528 = vsel %vm527, %v516, %v518
        %v529 = vsel %vm527, %v520, %v522
        %v530 = vsel %vm527, %v524, %v526
        %534 = vst [vmem:[#allocation2 + $0x1e0] sm:$0xff] %v528
        %535 = vst [vmem:[#allocation2 + $0x1f0] sm:$0xff] %v529
        %536 = vst [vmem:[#allocation2 + $0x200] sm:$0xff] %v530
        %537 = vrot.lane.b32.xlu0 %v302, 117
        %v538 = vpop.permute.xlu0 %537
        %539 = vrot.lane.b32.xlu0 %v303, 117
        %v540 = vpop.permute.xlu0 %539
        %541 = vrot.lane.b32.xlu0 %v304, 117
        %v542 = vpop.permute.xlu0 %541
        %543 = vrot.lane.b32.xlu0 %v305, 117
        %v544 = vpop.permute.xlu0 %543
        %545 = vrot.lane.b32.xlu0 %v306, 117
        %v546 = vpop.permute.xlu0 %545
        %547 = vrot.lane.b32.xlu0 %v307, 117
        %v548 = vpop.permute.xlu0 %547
        %vm549 = vcmask 957440
        %v550 = vsel %vm549, %v538, %v540
        %v551 = vsel %vm549, %v542, %v544
        %v552 = vsel %vm549, %v546, %v548
        %556 = vst [vmem:[#allocation2 + $0x210] sm:$0xff] %v550
        %557 = vst [vmem:[#allocation2 + $0x220] sm:$0xff] %v551
        %558 = vst [vmem:[#allocation2 + $0x230] sm:$0xff] %v552
        %559 = vrot.lane.b32.xlu0 %v302, 116
        %v560 = vpop.permute.xlu0 %559
        %561 = vrot.lane.b32.xlu0 %v303, 116
        %v562 = vpop.permute.xlu0 %561
        %563 = vrot.lane.b32.xlu0 %v304, 116
        %v564 = vpop.permute.xlu0 %563
        %565 = vrot.lane.b32.xlu0 %v305, 116
        %v566 = vpop.permute.xlu0 %565
        %567 = vrot.lane.b32.xlu0 %v306, 116
        %v568 = vpop.permute.xlu0 %567
        %569 = vrot.lane.b32.xlu0 %v307, 116
        %v570 = vpop.permute.xlu0 %569
        %vm571 = vcmask 949248
        %v572 = vsel %vm571, %v560, %v562
        %v573 = vsel %vm571, %v564, %v566
        %v574 = vsel %vm571, %v568, %v570
        %578 = vst [vmem:[#allocation2 + $0x240] sm:$0xff] %v572
        %579 = vst [vmem:[#allocation2 + $0x250] sm:$0xff] %v573
        %580 = vst [vmem:[#allocation2 + $0x260] sm:$0xff] %v574
        %581 = vrot.lane.b32.xlu0 %v302, 115
        %v582 = vpop.permute.xlu0 %581
        %583 = vrot.lane.b32.xlu0 %v303, 115
        %v584 = vpop.permute.xlu0 %583
        %585 = vrot.lane.b32.xlu0 %v304, 115
        %v586 = vpop.permute.xlu0 %585
        %587 = vrot.lane.b32.xlu0 %v305, 115
        %v588 = vpop.permute.xlu0 %587
        %589 = vrot.lane.b32.xlu0 %v306, 115
        %v590 = vpop.permute.xlu0 %589
        %591 = vrot.lane.b32.xlu0 %v307, 115
        %v592 = vpop.permute.xlu0 %591
        %vm593 = vcmask 941056
        %v594 = vsel %vm593, %v582, %v584
        %v595 = vsel %vm593, %v586, %v588
        %v596 = vsel %vm593, %v590, %v592
        %600 = vst [vmem:[#allocation2 + $0x270] sm:$0xff] %v594
        %601 = vst [vmem:[#allocation2 + $0x280] sm:$0xff] %v595
        %602 = vst [vmem:[#allocation2 + $0x290] sm:$0xff] %v596
        %603 = vrot.lane.b32.xlu0 %v302, 114
        %v604 = vpop.permute.xlu0 %603
        %605 = vrot.lane.b32.xlu0 %v303, 114
        %v606 = vpop.permute.xlu0 %605
        %607 = vrot.lane.b32.xlu0 %v304, 114
        %v608 = vpop.permute.xlu0 %607
        %609 = vrot.lane.b32.xlu0 %v305, 114
        %v610 = vpop.permute.xlu0 %609
        %611 = vrot.lane.b32.xlu0 %v306, 114
        %v612 = vpop.permute.xlu0 %611
        %613 = vrot.lane.b32.xlu0 %v307, 114
        %v614 = vpop.permute.xlu0 %613
        %vm615 = vcmask 932864
        %v616 = vsel %vm615, %v604, %v606
        %v617 = vsel %vm615, %v608, %v610
        %v618 = vsel %vm615, %v612, %v614
        %622 = vst [vmem:[#allocation2 + $0x2a0] sm:$0xff] %v616
        %623 = vst [vmem:[#allocation2 + $0x2b0] sm:$0xff] %v617
        %624 = vst [vmem:[#allocation2 + $0x2c0] sm:$0xff] %v618
        %625 = vrot.lane.b32.xlu0 %v302, 113
        %v626 = vpop.permute.xlu0 %625
        %627 = vrot.lane.b32.xlu0 %v303, 113
        %v628 = vpop.permute.xlu0 %627
        %629 = vrot.lane.b32.xlu0 %v304, 113
        %v630 = vpop.permute.xlu0 %629
        %631 = vrot.lane.b32.xlu0 %v305, 113
        %v632 = vpop.permute.xlu0 %631
        %633 = vrot.lane.b32.xlu0 %v306, 113
        %v634 = vpop.permute.xlu0 %633
        %635 = vrot.lane.b32.xlu0 %v307, 113
        %v636 = vpop.permute.xlu0 %635
        %vm637 = vcmask 924672
        %v638 = vsel %vm637, %v626, %v628
        %v639 = vsel %vm637, %v630, %v632
        %v640 = vsel %vm637, %v634, %v636
        %644 = vst [vmem:[#allocation2 + $0x2d0] sm:$0xff] %v638
        %645 = vst [vmem:[#allocation2 + $0x2e0] sm:$0xff] %v639
        %646 = vst [vmem:[#allocation2 + $0x2f0] sm:$0xff] %v640
        %647 = vrot.lane.b32.xlu0 %v302, 112
        %v648 = vpop.permute.xlu0 %647
        %649 = vrot.lane.b32.xlu0 %v303, 112
        %v650 = vpop.permute.xlu0 %649
        %651 = vrot.lane.b32.xlu0 %v304, 112
        %v652 = vpop.permute.xlu0 %651
        %653 = vrot.lane.b32.xlu0 %v305, 112
        %v654 = vpop.permute.xlu0 %653
        %655 = vrot.lane.b32.xlu0 %v306, 112
        %v656 = vpop.permute.xlu0 %655
        %657 = vrot.lane.b32.xlu0 %v307, 112
        %v658 = vpop.permute.xlu0 %657
        %vm659 = vcmask 916480
        %v660 = vsel %vm659, %v648, %v650
        %v661 = vsel %vm659, %v652, %v654
        %v662 = vsel %vm659, %v656, %v658
        %666 = vst [vmem:[#allocation2 + $0x300] sm:$0xff] %v660
        %667 = vst [vmem:[#allocation2 + $0x310] sm:$0xff] %v661
        %668 = vst [vmem:[#allocation2 + $0x320] sm:$0xff] %v662
        %669 = vrot.lane.b32.xlu0 %v302, 111
        %v670 = vpop.permute.xlu0 %669
        %671 = vrot.lane.b32.xlu0 %v303, 111
        %v672 = vpop.permute.xlu0 %671
        %673 = vrot.lane.b32.xlu0 %v304, 111
        %v674 = vpop.permute.xlu0 %673
        %675 = vrot.lane.b32.xlu0 %v305, 111
        %v676 = vpop.permute.xlu0 %675
        %677 = vrot.lane.b32.xlu0 %v306, 111
        %v678 = vpop.permute.xlu0 %677
        %679 = vrot.lane.b32.xlu0 %v307, 111
        %v680 = vpop.permute.xlu0 %679
        %vm681 = vcmask 908288
        %v682 = vsel %vm681, %v670, %v672
        %v683 = vsel %vm681, %v674, %v676
        %v684 = vsel %vm681, %v678, %v680
        %688 = vst [vmem:[#allocation2 + $0x330] sm:$0xff] %v682
        %689 = vst [vmem:[#allocation2 + $0x340] sm:$0xff] %v683
        %690 = vst [vmem:[#allocation2 + $0x350] sm:$0xff] %v684
        %691 = vrot.lane.b32.xlu0 %v302, 110
        %v692 = vpop.permute.xlu0 %691
        %693 = vrot.lane.b32.xlu0 %v303, 110
        %v694 = vpop.permute.xlu0 %693
        %695 = vrot.lane.b32.xlu0 %v304, 110
        %v696 = vpop.permute.xlu0 %695
        %697 = vrot.lane.b32.xlu0 %v305, 110
        %v698 = vpop.permute.xlu0 %697
        %699 = vrot.lane.b32.xlu0 %v306, 110
        %v700 = vpop.permute.xlu0 %699
        %701 = vrot.lane.b32.xlu0 %v307, 110
        %v702 = vpop.permute.xlu0 %701
        %vm703 = vcmask 900096
        %v704 = vsel %vm703, %v692, %v694
        %v705 = vsel %vm703, %v696, %v698
        %v706 = vsel %vm703, %v700, %v702
        %710 = vst [vmem:[#allocation2 + $0x360] sm:$0xff] %v704
        %711 = vst [vmem:[#allocation2 + $0x370] sm:$0xff] %v705
        %712 = vst [vmem:[#allocation2 + $0x380] sm:$0xff] %v706
        %713 = vrot.lane.b32.xlu0 %v302, 109
        %v714 = vpop.permute.xlu0 %713
        %715 = vrot.lane.b32.xlu0 %v303, 109
        %v716 = vpop.permute.xlu0 %715
        %717 = vrot.lane.b32.xlu0 %v304, 109
        %v718 = vpop.permute.xlu0 %717
        %719 = vrot.lane.b32.xlu0 %v305, 109
        %v720 = vpop.permute.xlu0 %719
        %721 = vrot.lane.b32.xlu0 %v306, 109
        %v722 = vpop.permute.xlu0 %721
        %723 = vrot.lane.b32.xlu0 %v307, 109
        %v724 = vpop.permute.xlu0 %723
        %vm725 = vcmask 891904
        %v726 = vsel %vm725, %v714, %v716
        %v727 = vsel %vm725, %v718, %v720
        %v728 = vsel %vm725, %v722, %v724
        %732 = vst [vmem:[#allocation2 + $0x390] sm:$0xff] %v726
        %733 = vst [vmem:[#allocation2 + $0x3a0] sm:$0xff] %v727
        %734 = vst [vmem:[#allocation2 + $0x3b0] sm:$0xff] %v728
        %735 = vrot.lane.b32.xlu0 %v302, 108
        %v736 = vpop.permute.xlu0 %735
        %737 = vrot.lane.b32.xlu0 %v303, 108
        %v738 = vpop.permute.xlu0 %737
        %739 = vrot.lane.b32.xlu0 %v304, 108
        %v740 = vpop.permute.xlu0 %739
        %741 = vrot.lane.b32.xlu0 %v305, 108
        %v742 = vpop.permute.xlu0 %741
        %743 = vrot.lane.b32.xlu0 %v306, 108
        %v744 = vpop.permute.xlu0 %743
        %745 = vrot.lane.b32.xlu0 %v307, 108
        %v746 = vpop.permute.xlu0 %745
        %vm747 = vcmask 883712
        %v748 = vsel %vm747, %v736, %v738
        %v749 = vsel %vm747, %v740, %v742
        %v750 = vsel %vm747, %v744, %v746
        %754 = vst [vmem:[#allocation2 + $0x3c0] sm:$0xff] %v748
        %755 = vst [vmem:[#allocation2 + $0x3d0] sm:$0xff] %v749
        %756 = vst [vmem:[#allocation2 + $0x3e0] sm:$0xff] %v750
        %757 = vrot.lane.b32.xlu0 %v302, 107
        %v758 = vpop.permute.xlu0 %757
        %759 = vrot.lane.b32.xlu0 %v303, 107
        %v760 = vpop.permute.xlu0 %759
        %761 = vrot.lane.b32.xlu0 %v304, 107
        %v762 = vpop.permute.xlu0 %761
        %763 = vrot.lane.b32.xlu0 %v305, 107
        %v764 = vpop.permute.xlu0 %763
        %765 = vrot.lane.b32.xlu0 %v306, 107
        %v766 = vpop.permute.xlu0 %765
        %767 = vrot.lane.b32.xlu0 %v307, 107
        %v768 = vpop.permute.xlu0 %767
        %vm769 = vcmask 875520
        %v770 = vsel %vm769, %v758, %v760
        %v771 = vsel %vm769, %v762, %v764
        %v772 = vsel %vm769, %v766, %v768
        %776 = vst [vmem:[#allocation2 + $0x3f0] sm:$0xff] %v770
        %777 = vst [vmem:[#allocation2 + $0x400] sm:$0xff] %v771
        %778 = vst [vmem:[#allocation2 + $0x410] sm:$0xff] %v772
        %779 = vrot.lane.b32.xlu0 %v302, 106
        %v780 = vpop.permute.xlu0 %779
        %781 = vrot.lane.b32.xlu0 %v303, 106
        %v782 = vpop.permute.xlu0 %781
        %783 = vrot.lane.b32.xlu0 %v304, 106
        %v784 = vpop.permute.xlu0 %783
        %785 = vrot.lane.b32.xlu0 %v305, 106
        %v786 = vpop.permute.xlu0 %785
        %787 = vrot.lane.b32.xlu0 %v306, 106
        %v788 = vpop.permute.xlu0 %787
        %789 = vrot.lane.b32.xlu0 %v307, 106
        %v790 = vpop.permute.xlu0 %789
        %vm791 = vcmask 867328
        %v792 = vsel %vm791, %v780, %v782
        %v793 = vsel %vm791, %v784, %v786
        %v794 = vsel %vm791, %v788, %v790
        %798 = vst [vmem:[#allocation2 + $0x420] sm:$0xff] %v792
        %799 = vst [vmem:[#allocation2 + $0x430] sm:$0xff] %v793
        %800 = vst [vmem:[#allocation2 + $0x440] sm:$0xff] %v794
        %801 = vrot.lane.b32.xlu0 %v302, 105
        %v802 = vpop.permute.xlu0 %801
        %803 = vrot.lane.b32.xlu0 %v303, 105
        %v804 = vpop.permute.xlu0 %803
        %805 = vrot.lane.b32.xlu0 %v304, 105
        %v806 = vpop.permute.xlu0 %805
        %807 = vrot.lane.b32.xlu0 %v305, 105
        %v808 = vpop.permute.xlu0 %807
        %809 = vrot.lane.b32.xlu0 %v306, 105
        %v810 = vpop.permute.xlu0 %809
        %811 = vrot.lane.b32.xlu0 %v307, 105
        %v812 = vpop.permute.xlu0 %811
        %vm813 = vcmask 859136
        %v814 = vsel %vm813, %v802, %v804
        %v815 = vsel %vm813, %v806, %v808
        %v816 = vsel %vm813, %v810, %v812
        %820 = vst [vmem:[#allocation2 + $0x450] sm:$0xff] %v814
        %821 = vst [vmem:[#allocation2 + $0x460] sm:$0xff] %v815
        %822 = vst [vmem:[#allocation2 + $0x470] sm:$0xff] %v816
        %823 = vrot.lane.b32.xlu0 %v302, 104
        %v824 = vpop.permute.xlu0 %823
        %825 = vrot.lane.b32.xlu0 %v303, 104
        %v826 = vpop.permute.xlu0 %825
        %827 = vrot.lane.b32.xlu0 %v304, 104
        %v828 = vpop.permute.xlu0 %827
        %829 = vrot.lane.b32.xlu0 %v305, 104
        %v830 = vpop.permute.xlu0 %829
        %831 = vrot.lane.b32.xlu0 %v306, 104
        %v832 = vpop.permute.xlu0 %831
        %833 = vrot.lane.b32.xlu0 %v307, 104
        %v834 = vpop.permute.xlu0 %833
        %vm835 = vcmask 850944
        %v836 = vsel %vm835, %v824, %v826
        %v837 = vsel %vm835, %v828, %v830
        %v838 = vsel %vm835, %v832, %v834
        %842 = vst [vmem:[#allocation2 + $0x480] sm:$0xff] %v836
        %843 = vst [vmem:[#allocation2 + $0x490] sm:$0xff] %v837
        %844 = vst [vmem:[#allocation2 + $0x4a0] sm:$0xff] %v838
        %s845 = scalar_lea.vmem %s263, 48 [#allocation3]
        %v846 = vld [vmem:[%s845] sm:$0xff]
        %v847 = vld [vmem:[%s845 + $0x8] sm:$0xff]
        %v848 = vld [vmem:[%s845 + $0x10] sm:$0xff]
        %v849 = vld [vmem:[%s845 + $0x18] sm:$0xff]
        %v850 = vld [vmem:[%s845 + $0x20] sm:$0xff]
        %v851 = vld [vmem:[%s845 + $0x28] sm:$0xff]
        %852 = vst [vmem:[#allocation2 + $0x8] sm:$0xff] %v846
        %853 = vst [vmem:[#allocation2 + $0x18] sm:$0xff] %v848
        %854 = vst [vmem:[#allocation2 + $0x28] sm:$0xff] %v850
        %861 = vrot.lane.b32.xlu0 %v846, 127
        %v862 = vpop.permute.xlu0 %861
        %863 = vrot.lane.b32.xlu0 %v847, 127
        %v864 = vpop.permute.xlu0 %863
        %865 = vrot.lane.b32.xlu0 %v848, 127
        %v866 = vpop.permute.xlu0 %865
        %867 = vrot.lane.b32.xlu0 %v849, 127
        %v868 = vpop.permute.xlu0 %867
        %869 = vrot.lane.b32.xlu0 %v850, 127
        %v870 = vpop.permute.xlu0 %869
        %871 = vrot.lane.b32.xlu0 %v851, 127
        %v872 = vpop.permute.xlu0 %871
        %v873 = vsel %vm329, %v862, %v864
        %v874 = vsel %vm329, %v866, %v868
        %v875 = vsel %vm329, %v870, %v872
        %879 = vst [vmem:[#allocation2 + $0x38] sm:$0xff] %v873
        %880 = vst [vmem:[#allocation2 + $0x48] sm:$0xff] %v874
        %881 = vst [vmem:[#allocation2 + $0x58] sm:$0xff] %v875
        %882 = vrot.lane.b32.xlu0 %v846, 126
        %v883 = vpop.permute.xlu0 %882
        %884 = vrot.lane.b32.xlu0 %v847, 126
        %v885 = vpop.permute.xlu0 %884
        %886 = vrot.lane.b32.xlu0 %v848, 126
        %v887 = vpop.permute.xlu0 %886
        %888 = vrot.lane.b32.xlu0 %v849, 126
        %v889 = vpop.permute.xlu0 %888
        %890 = vrot.lane.b32.xlu0 %v850, 126
        %v891 = vpop.permute.xlu0 %890
        %892 = vrot.lane.b32.xlu0 %v851, 126
        %v893 = vpop.permute.xlu0 %892
        %v894 = vsel %vm351, %v883, %v885
        %v895 = vsel %vm351, %v887, %v889
        %v896 = vsel %vm351, %v891, %v893
        %900 = vst [vmem:[#allocation2 + $0x68] sm:$0xff] %v894
        %901 = vst [vmem:[#allocation2 + $0x78] sm:$0xff] %v895
        %902 = vst [vmem:[#allocation2 + $0x88] sm:$0xff] %v896
        %903 = vrot.lane.b32.xlu0 %v846, 125
        %v904 = vpop.permute.xlu0 %903
        %905 = vrot.lane.b32.xlu0 %v847, 125
        %v906 = vpop.permute.xlu0 %905
        %907 = vrot.lane.b32.xlu0 %v848, 125
        %v908 = vpop.permute.xlu0 %907
        %909 = vrot.lane.b32.xlu0 %v849, 125
        %v910 = vpop.permute.xlu0 %909
        %911 = vrot.lane.b32.xlu0 %v850, 125
        %v912 = vpop.permute.xlu0 %911
        %913 = vrot.lane.b32.xlu0 %v851, 125
        %v914 = vpop.permute.xlu0 %913
        %v915 = vsel %vm373, %v904, %v906
        %v916 = vsel %vm373, %v908, %v910
        %v917 = vsel %vm373, %v912, %v914
        %921 = vst [vmem:[#allocation2 + $0x98] sm:$0xff] %v915
        %922 = vst [vmem:[#allocation2 + $0xa8] sm:$0xff] %v916
        %923 = vst [vmem:[#allocation2 + $0xb8] sm:$0xff] %v917
        %924 = vrot.lane.b32.xlu0 %v846, 124
        %v925 = vpop.permute.xlu0 %924
        %926 = vrot.lane.b32.xlu0 %v847, 124
        %v927 = vpop.permute.xlu0 %926
        %928 = vrot.lane.b32.xlu0 %v848, 124
        %v929 = vpop.permute.xlu0 %928
        %930 = vrot.lane.b32.xlu0 %v849, 124
        %v931 = vpop.permute.xlu0 %930
        %932 = vrot.lane.b32.xlu0 %v850, 124
        %v933 = vpop.permute.xlu0 %932
        %934 = vrot.lane.b32.xlu0 %v851, 124
        %v935 = vpop.permute.xlu0 %934
        %v936 = vsel %vm395, %v925, %v927
        %v937 = vsel %vm395, %v929, %v931
        %v938 = vsel %vm395, %v933, %v935
        %942 = vst [vmem:[#allocation2 + $0xc8] sm:$0xff] %v936
        %943 = vst [vmem:[#allocation2 + $0xd8] sm:$0xff] %v937
        %944 = vst [vmem:[#allocation2 + $0xe8] sm:$0xff] %v938
        %945 = vrot.lane.b32.xlu0 %v846, 123
        %v946 = vpop.permute.xlu0 %945
        %947 = vrot.lane.b32.xlu0 %v847, 123
        %v948 = vpop.permute.xlu0 %947
        %949 = vrot.lane.b32.xlu0 %v848, 123
        %v950 = vpop.permute.xlu0 %949
        %951 = vrot.lane.b32.xlu0 %v849, 123
        %v952 = vpop.permute.xlu0 %951
        %953 = vrot.lane.b32.xlu0 %v850, 123
        %v954 = vpop.permute.xlu0 %953
        %955 = vrot.lane.b32.xlu0 %v851, 123
        %v956 = vpop.permute.xlu0 %955
        %v957 = vsel %vm417, %v946, %v948
        %v958 = vsel %vm417, %v950, %v952
        %v959 = vsel %vm417, %v954, %v956
        %963 = vst [vmem:[#allocation2 + $0xf8] sm:$0xff] %v957
        %964 = vst [vmem:[#allocation2 + $0x108] sm:$0xff] %v958
        %965 = vst [vmem:[#allocation2 + $0x118] sm:$0xff] %v959
        %966 = vrot.lane.b32.xlu0 %v846, 122
        %v967 = vpop.permute.xlu0 %966
        %968 = vrot.lane.b32.xlu0 %v847, 122
        %v969 = vpop.permute.xlu0 %968
        %970 = vrot.lane.b32.xlu0 %v848, 122
        %v971 = vpop.permute.xlu0 %970
        %972 = vrot.lane.b32.xlu0 %v849, 122
        %v973 = vpop.permute.xlu0 %972
        %974 = vrot.lane.b32.xlu0 %v850, 122
        %v975 = vpop.permute.xlu0 %974
        %976 = vrot.lane.b32.xlu0 %v851, 122
        %v977 = vpop.permute.xlu0 %976
        %v978 = vsel %vm439, %v967, %v969
        %v979 = vsel %vm439, %v971, %v973
        %v980 = vsel %vm439, %v975, %v977
        %984 = vst [vmem:[#allocation2 + $0x128] sm:$0xff] %v978
        %985 = vst [vmem:[#allocation2 + $0x138] sm:$0xff] %v979
        %986 = vst [vmem:[#allocation2 + $0x148] sm:$0xff] %v980
        %987 = vrot.lane.b32.xlu0 %v846, 121
        %v988 = vpop.permute.xlu0 %987
        %989 = vrot.lane.b32.xlu0 %v847, 121
        %v990 = vpop.permute.xlu0 %989
        %991 = vrot.lane.b32.xlu0 %v848, 121
        %v992 = vpop.permute.xlu0 %991
        %993 = vrot.lane.b32.xlu0 %v849, 121
        %v994 = vpop.permute.xlu0 %993
        %995 = vrot.lane.b32.xlu0 %v850, 121
        %v996 = vpop.permute.xlu0 %995
        %997 = vrot.lane.b32.xlu0 %v851, 121
        %v998 = vpop.permute.xlu0 %997
        %v999 = vsel %vm461, %v988, %v990
        %v1000 = vsel %vm461, %v992, %v994
        %v1001 = vsel %vm461, %v996, %v998
        %1005 = vst [vmem:[#allocation2 + $0x158] sm:$0xff] %v999
        %1006 = vst [vmem:[#allocation2 + $0x168] sm:$0xff] %v1000
        %1007 = vst [vmem:[#allocation2 + $0x178] sm:$0xff] %v1001
        %1008 = vrot.lane.b32.xlu0 %v846, 120
        %v1009 = vpop.permute.xlu0 %1008
        %1010 = vrot.lane.b32.xlu0 %v847, 120
        %v1011 = vpop.permute.xlu0 %1010
        %1012 = vrot.lane.b32.xlu0 %v848, 120
        %v1013 = vpop.permute.xlu0 %1012
        %1014 = vrot.lane.b32.xlu0 %v849, 120
        %v1015 = vpop.permute.xlu0 %1014
        %1016 = vrot.lane.b32.xlu0 %v850, 120
        %v1017 = vpop.permute.xlu0 %1016
        %1018 = vrot.lane.b32.xlu0 %v851, 120
        %v1019 = vpop.permute.xlu0 %1018
        %v1020 = vsel %vm483, %v1009, %v1011
        %v1021 = vsel %vm483, %v1013, %v1015
        %v1022 = vsel %vm483, %v1017, %v1019
        %1026 = vst [vmem:[#allocation2 + $0x188] sm:$0xff] %v1020
        %1027 = vst [vmem:[#allocation2 + $0x198] sm:$0xff] %v1021
        %1028 = vst [vmem:[#allocation2 + $0x1a8] sm:$0xff] %v1022
        %1029 = vrot.lane.b32.xlu0 %v846, 119
        %v1030 = vpop.permute.xlu0 %1029
        %1031 = vrot.lane.b32.xlu0 %v847, 119
        %v1032 = vpop.permute.xlu0 %1031
        %1033 = vrot.lane.b32.xlu0 %v848, 119
        %v1034 = vpop.permute.xlu0 %1033
        %1035 = vrot.lane.b32.xlu0 %v849, 119
        %v1036 = vpop.permute.xlu0 %1035
        %1037 = vrot.lane.b32.xlu0 %v850, 119
        %v1038 = vpop.permute.xlu0 %1037
        %1039 = vrot.lane.b32.xlu0 %v851, 119
        %v1040 = vpop.permute.xlu0 %1039
        %v1041 = vsel %vm505, %v1030, %v1032
        %v1042 = vsel %vm505, %v1034, %v1036
        %v1043 = vsel %vm505, %v1038, %v1040
        %1047 = vst [vmem:[#allocation2 + $0x1b8] sm:$0xff] %v1041
        %1048 = vst [vmem:[#allocation2 + $0x1c8] sm:$0xff] %v1042
        %1049 = vst [vmem:[#allocation2 + $0x1d8] sm:$0xff] %v1043
        %1050 = vrot.lane.b32.xlu0 %v846, 118
        %v1051 = vpop.permute.xlu0 %1050
        %1052 = vrot.lane.b32.xlu0 %v847, 118
        %v1053 = vpop.permute.xlu0 %1052
        %1054 = vrot.lane.b32.xlu0 %v848, 118
        %v1055 = vpop.permute.xlu0 %1054
        %1056 = vrot.lane.b32.xlu0 %v849, 118
        %v1057 = vpop.permute.xlu0 %1056
        %1058 = vrot.lane.b32.xlu0 %v850, 118
        %v1059 = vpop.permute.xlu0 %1058
        %1060 = vrot.lane.b32.xlu0 %v851, 118
        %v1061 = vpop.permute.xlu0 %1060
        %v1062 = vsel %vm527, %v1051, %v1053
        %v1063 = vsel %vm527, %v1055, %v1057
        %v1064 = vsel %vm527, %v1059, %v1061
        %1068 = vst [vmem:[#allocation2 + $0x1e8] sm:$0xff] %v1062
        %1069 = vst [vmem:[#allocation2 + $0x1f8] sm:$0xff] %v1063
        %1070 = vst [vmem:[#allocation2 + $0x208] sm:$0xff] %v1064
        %1071 = vrot.lane.b32.xlu0 %v846, 117
        %v1072 = vpop.permute.xlu0 %1071
        %1073 = vrot.lane.b32.xlu0 %v847, 117
        %v1074 = vpop.permute.xlu0 %1073
        %1075 = vrot.lane.b32.xlu0 %v848, 117
        %v1076 = vpop.permute.xlu0 %1075
        %1077 = vrot.lane.b32.xlu0 %v849, 117
        %v1078 = vpop.permute.xlu0 %1077
        %1079 = vrot.lane.b32.xlu0 %v850, 117
        %v1080 = vpop.permute.xlu0 %1079
        %1081 = vrot.lane.b32.xlu0 %v851, 117
        %v1082 = vpop.permute.xlu0 %1081
        %v1083 = vsel %vm549, %v1072, %v1074
        %v1084 = vsel %vm549, %v1076, %v1078
        %v1085 = vsel %vm549, %v1080, %v1082
        %1089 = vst [vmem:[#allocation2 + $0x218] sm:$0xff] %v1083
        %1090 = vst [vmem:[#allocation2 + $0x228] sm:$0xff] %v1084
        %1091 = vst [vmem:[#allocation2 + $0x238] sm:$0xff] %v1085
        %1092 = vrot.lane.b32.xlu0 %v846, 116
        %v1093 = vpop.permute.xlu0 %1092
        %1094 = vrot.lane.b32.xlu0 %v847, 116
        %v1095 = vpop.permute.xlu0 %1094
        %1096 = vrot.lane.b32.xlu0 %v848, 116
        %v1097 = vpop.permute.xlu0 %1096
        %1098 = vrot.lane.b32.xlu0 %v849, 116
        %v1099 = vpop.permute.xlu0 %1098
        %1100 = vrot.lane.b32.xlu0 %v850, 116
        %v1101 = vpop.permute.xlu0 %1100
        %1102 = vrot.lane.b32.xlu0 %v851, 116
        %v1103 = vpop.permute.xlu0 %1102
        %v1104 = vsel %vm571, %v1093, %v1095
        %v1105 = vsel %vm571, %v1097, %v1099
        %v1106 = vsel %vm571, %v1101, %v1103
        %1110 = vst [vmem:[#allocation2 + $0x248] sm:$0xff] %v1104
        %1111 = vst [vmem:[#allocation2 + $0x258] sm:$0xff] %v1105
        %1112 = vst [vmem:[#allocation2 + $0x268] sm:$0xff] %v1106
        %1113 = vrot.lane.b32.xlu0 %v846, 115
        %v1114 = vpop.permute.xlu0 %1113
        %1115 = vrot.lane.b32.xlu0 %v847, 115
        %v1116 = vpop.permute.xlu0 %1115
        %1117 = vrot.lane.b32.xlu0 %v848, 115
        %v1118 = vpop.permute.xlu0 %1117
        %1119 = vrot.lane.b32.xlu0 %v849, 115
        %v1120 = vpop.permute.xlu0 %1119
        %1121 = vrot.lane.b32.xlu0 %v850, 115
        %v1122 = vpop.permute.xlu0 %1121
        %1123 = vrot.lane.b32.xlu0 %v851, 115
        %v1124 = vpop.permute.xlu0 %1123
        %v1125 = vsel %vm593, %v1114, %v1116
        %v1126 = vsel %vm593, %v1118, %v1120
        %v1127 = vsel %vm593, %v1122, %v1124
        %1131 = vst [vmem:[#allocation2 + $0x278] sm:$0xff] %v1125
        %1132 = vst [vmem:[#allocation2 + $0x288] sm:$0xff] %v1126
        %1133 = vst [vmem:[#allocation2 + $0x298] sm:$0xff] %v1127
        %1134 = vrot.lane.b32.xlu0 %v846, 114
        %v1135 = vpop.permute.xlu0 %1134
        %1136 = vrot.lane.b32.xlu0 %v847, 114
        %v1137 = vpop.permute.xlu0 %1136
        %1138 = vrot.lane.b32.xlu0 %v848, 114
        %v1139 = vpop.permute.xlu0 %1138
        %1140 = vrot.lane.b32.xlu0 %v849, 114
        %v1141 = vpop.permute.xlu0 %1140
        %1142 = vrot.lane.b32.xlu0 %v850, 114
        %v1143 = vpop.permute.xlu0 %1142
        %1144 = vrot.lane.b32.xlu0 %v851, 114
        %v1145 = vpop.permute.xlu0 %1144
        %v1146 = vsel %vm615, %v1135, %v1137
        %v1147 = vsel %vm615, %v1139, %v1141
        %v1148 = vsel %vm615, %v1143, %v1145
        %1152 = vst [vmem:[#allocation2 + $0x2a8] sm:$0xff] %v1146
        %1153 = vst [vmem:[#allocation2 + $0x2b8] sm:$0xff] %v1147
        %1154 = vst [vmem:[#allocation2 + $0x2c8] sm:$0xff] %v1148
        %1155 = vrot.lane.b32.xlu0 %v846, 113
        %v1156 = vpop.permute.xlu0 %1155
        %1157 = vrot.lane.b32.xlu0 %v847, 113
        %v1158 = vpop.permute.xlu0 %1157
        %1159 = vrot.lane.b32.xlu0 %v848, 113
        %v1160 = vpop.permute.xlu0 %1159
        %1161 = vrot.lane.b32.xlu0 %v849, 113
        %v1162 = vpop.permute.xlu0 %1161
        %1163 = vrot.lane.b32.xlu0 %v850, 113
        %v1164 = vpop.permute.xlu0 %1163
        %1165 = vrot.lane.b32.xlu0 %v851, 113
        %v1166 = vpop.permute.xlu0 %1165
        %v1167 = vsel %vm637, %v1156, %v1158
        %v1168 = vsel %vm637, %v1160, %v1162
        %v1169 = vsel %vm637, %v1164, %v1166
        %1173 = vst [vmem:[#allocation2 + $0x2d8] sm:$0xff] %v1167
        %1174 = vst [vmem:[#allocation2 + $0x2e8] sm:$0xff] %v1168
        %1175 = vst [vmem:[#allocation2 + $0x2f8] sm:$0xff] %v1169
        %1176 = vrot.lane.b32.xlu0 %v846, 112
        %v1177 = vpop.permute.xlu0 %1176
        %1178 = vrot.lane.b32.xlu0 %v847, 112
        %v1179 = vpop.permute.xlu0 %1178
        %1180 = vrot.lane.b32.xlu0 %v848, 112
        %v1181 = vpop.permute.xlu0 %1180
        %1182 = vrot.lane.b32.xlu0 %v849, 112
        %v1183 = vpop.permute.xlu0 %1182
        %1184 = vrot.lane.b32.xlu0 %v850, 112
        %v1185 = vpop.permute.xlu0 %1184
        %1186 = vrot.lane.b32.xlu0 %v851, 112
        %v1187 = vpop.permute.xlu0 %1186
        %v1188 = vsel %vm659, %v1177, %v1179
        %v1189 = vsel %vm659, %v1181, %v1183
        %v1190 = vsel %vm659, %v1185, %v1187
        %1194 = vst [vmem:[#allocation2 + $0x308] sm:$0xff] %v1188
        %1195 = vst [vmem:[#allocation2 + $0x318] sm:$0xff] %v1189
        %1196 = vst [vmem:[#allocation2 + $0x328] sm:$0xff] %v1190
        %1197 = vrot.lane.b32.xlu0 %v846, 111
        %v1198 = vpop.permute.xlu0 %1197
        %1199 = vrot.lane.b32.xlu0 %v847, 111
        %v1200 = vpop.permute.xlu0 %1199
        %1201 = vrot.lane.b32.xlu0 %v848, 111
        %v1202 = vpop.permute.xlu0 %1201
        %1203 = vrot.lane.b32.xlu0 %v849, 111
        %v1204 = vpop.permute.xlu0 %1203
        %1205 = vrot.lane.b32.xlu0 %v850, 111
        %v1206 = vpop.permute.xlu0 %1205
        %1207 = vrot.lane.b32.xlu0 %v851, 111
        %v1208 = vpop.permute.xlu0 %1207
        %v1209 = vsel %vm681, %v1198, %v1200
        %v1210 = vsel %vm681, %v1202, %v1204
        %v1211 = vsel %vm681, %v1206, %v1208
        %1215 = vst [vmem:[#allocation2 + $0x338] sm:$0xff] %v1209
        %1216 = vst [vmem:[#allocation2 + $0x348] sm:$0xff] %v1210
        %1217 = vst [vmem:[#allocation2 + $0x358] sm:$0xff] %v1211
        %1218 = vrot.lane.b32.xlu0 %v846, 110
        %v1219 = vpop.permute.xlu0 %1218
        %1220 = vrot.lane.b32.xlu0 %v847, 110
        %v1221 = vpop.permute.xlu0 %1220
        %1222 = vrot.lane.b32.xlu0 %v848, 110
        %v1223 = vpop.permute.xlu0 %1222
        %1224 = vrot.lane.b32.xlu0 %v849, 110
        %v1225 = vpop.permute.xlu0 %1224
        %1226 = vrot.lane.b32.xlu0 %v850, 110
        %v1227 = vpop.permute.xlu0 %1226
        %1228 = vrot.lane.b32.xlu0 %v851, 110
        %v1229 = vpop.permute.xlu0 %1228
        %v1230 = vsel %vm703, %v1219, %v1221
        %v1231 = vsel %vm703, %v1223, %v1225
        %v1232 = vsel %vm703, %v1227, %v1229
        %1236 = vst [vmem:[#allocation2 + $0x368] sm:$0xff] %v1230
        %1237 = vst [vmem:[#allocation2 + $0x378] sm:$0xff] %v1231
        %1238 = vst [vmem:[#allocation2 + $0x388] sm:$0xff] %v1232
        %1239 = vrot.lane.b32.xlu0 %v846, 109
        %v1240 = vpop.permute.xlu0 %1239
        %1241 = vrot.lane.b32.xlu0 %v847, 109
        %v1242 = vpop.permute.xlu0 %1241
        %1243 = vrot.lane.b32.xlu0 %v848, 109
        %v1244 = vpop.permute.xlu0 %1243
        %1245 = vrot.lane.b32.xlu0 %v849, 109
        %v1246 = vpop.permute.xlu0 %1245
        %1247 = vrot.lane.b32.xlu0 %v850, 109
        %v1248 = vpop.permute.xlu0 %1247
        %1249 = vrot.lane.b32.xlu0 %v851, 109
        %v1250 = vpop.permute.xlu0 %1249
        %v1251 = vsel %vm725, %v1240, %v1242
        %v1252 = vsel %vm725, %v1244, %v1246
        %v1253 = vsel %vm725, %v1248, %v1250
        %1257 = vst [vmem:[#allocation2 + $0x398] sm:$0xff] %v1251
        %1258 = vst [vmem:[#allocation2 + $0x3a8] sm:$0xff] %v1252
        %1259 = vst [vmem:[#allocation2 + $0x3b8] sm:$0xff] %v1253
        %1260 = vrot.lane.b32.xlu0 %v846, 108
        %v1261 = vpop.permute.xlu0 %1260
        %1262 = vrot.lane.b32.xlu0 %v847, 108
        %v1263 = vpop.permute.xlu0 %1262
        %1264 = vrot.lane.b32.xlu0 %v848, 108
        %v1265 = vpop.permute.xlu0 %1264
        %1266 = vrot.lane.b32.xlu0 %v849, 108
        %v1267 = vpop.permute.xlu0 %1266
        %1268 = vrot.lane.b32.xlu0 %v850, 108
        %v1269 = vpop.permute.xlu0 %1268
        %1270 = vrot.lane.b32.xlu0 %v851, 108
        %v1271 = vpop.permute.xlu0 %1270
        %v1272 = vsel %vm747, %v1261, %v1263
        %v1273 = vsel %vm747, %v1265, %v1267
        %v1274 = vsel %vm747, %v1269, %v1271
        %1278 = vst [vmem:[#allocation2 + $0x3c8] sm:$0xff] %v1272
        %1279 = vst [vmem:[#allocation2 + $0x3d8] sm:$0xff] %v1273
        %1280 = vst [vmem:[#allocation2 + $0x3e8] sm:$0xff] %v1274
        %1281 = vrot.lane.b32.xlu0 %v846, 107
        %v1282 = vpop.permute.xlu0 %1281
        %1283 = vrot.lane.b32.xlu0 %v847, 107
        %v1284 = vpop.permute.xlu0 %1283
        %1285 = vrot.lane.b32.xlu0 %v848, 107
        %v1286 = vpop.permute.xlu0 %1285
        %1287 = vrot.lane.b32.xlu0 %v849, 107
        %v1288 = vpop.permute.xlu0 %1287
        %1289 = vrot.lane.b32.xlu0 %v850, 107
        %v1290 = vpop.permute.xlu0 %1289
        %1291 = vrot.lane.b32.xlu0 %v851, 107
        %v1292 = vpop.permute.xlu0 %1291
        %v1293 = vsel %vm769, %v1282, %v1284
        %v1294 = vsel %vm769, %v1286, %v1288
        %v1295 = vsel %vm769, %v1290, %v1292
        %1299 = vst [vmem:[#allocation2 + $0x3f8] sm:$0xff] %v1293
        %1300 = vst [vmem:[#allocation2 + $0x408] sm:$0xff] %v1294
        %1301 = vst [vmem:[#allocation2 + $0x418] sm:$0xff] %v1295
        %1302 = vrot.lane.b32.xlu0 %v846, 106
        %v1303 = vpop.permute.xlu0 %1302
        %1304 = vrot.lane.b32.xlu0 %v847, 106
        %v1305 = vpop.permute.xlu0 %1304
        %1306 = vrot.lane.b32.xlu0 %v848, 106
        %v1307 = vpop.permute.xlu0 %1306
        %1308 = vrot.lane.b32.xlu0 %v849, 106
        %v1309 = vpop.permute.xlu0 %1308
        %1310 = vrot.lane.b32.xlu0 %v850, 106
        %v1311 = vpop.permute.xlu0 %1310
        %1312 = vrot.lane.b32.xlu0 %v851, 106
        %v1313 = vpop.permute.xlu0 %1312
        %v1314 = vsel %vm791, %v1303, %v1305
        %v1315 = vsel %vm791, %v1307, %v1309
        %v1316 = vsel %vm791, %v1311, %v1313
        %1320 = vst [vmem:[#allocation2 + $0x428] sm:$0xff] %v1314
        %1321 = vst [vmem:[#allocation2 + $0x438] sm:$0xff] %v1315
        %1322 = vst [vmem:[#allocation2 + $0x448] sm:$0xff] %v1316
        %1323 = vrot.lane.b32.xlu0 %v846, 105
        %v1324 = vpop.permute.xlu0 %1323
        %1325 = vrot.lane.b32.xlu0 %v847, 105
        %v1326 = vpop.permute.xlu0 %1325
        %1327 = vrot.lane.b32.xlu0 %v848, 105
        %v1328 = vpop.permute.xlu0 %1327
        %1329 = vrot.lane.b32.xlu0 %v849, 105
        %v1330 = vpop.permute.xlu0 %1329
        %1331 = vrot.lane.b32.xlu0 %v850, 105
        %v1332 = vpop.permute.xlu0 %1331
        %1333 = vrot.lane.b32.xlu0 %v851, 105
        %v1334 = vpop.permute.xlu0 %1333
        %v1335 = vsel %vm813, %v1324, %v1326
        %v1336 = vsel %vm813, %v1328, %v1330
        %v1337 = vsel %vm813, %v1332, %v1334
        %1341 = vst [vmem:[#allocation2 + $0x458] sm:$0xff] %v1335
        %1342 = vst [vmem:[#allocation2 + $0x468] sm:$0xff] %v1336
        %1343 = vst [vmem:[#allocation2 + $0x478] sm:$0xff] %v1337
        %1344 = vrot.lane.b32.xlu0 %v846, 104
        %v1345 = vpop.permute.xlu0 %1344
        %1346 = vrot.lane.b32.xlu0 %v847, 104
        %v1347 = vpop.permute.xlu0 %1346
        %1348 = vrot.lane.b32.xlu0 %v848, 104
        %v1349 = vpop.permute.xlu0 %1348
        %1350 = vrot.lane.b32.xlu0 %v849, 104
        %v1351 = vpop.permute.xlu0 %1350
        %1352 = vrot.lane.b32.xlu0 %v850, 104
        %v1353 = vpop.permute.xlu0 %1352
        %1354 = vrot.lane.b32.xlu0 %v851, 104
        %v1355 = vpop.permute.xlu0 %1354
        %v1356 = vsel %vm835, %v1345, %v1347
        %v1357 = vsel %vm835, %v1349, %v1351
        %v1358 = vsel %vm835, %v1353, %v1355
        %1362 = vst [vmem:[#allocation2 + $0x488] sm:$0xff] %v1356
        %1363 = vst [vmem:[#allocation2 + $0x498] sm:$0xff] %v1357
        %1364 = vst [vmem:[#allocation2 + $0x4a8] sm:$0xff] %v1358
        %v1365 = vld [vmem:[#allocation6] sm:$0xff]
        %v1366 = vld [vmem:[#allocation6 + $0x8] sm:$0xff]
        %v1367 = vld [vmem:[#allocation6 + $0x10] sm:$0xff]
        %v1368 = vld [vmem:[#allocation6 + $0x18] sm:$0xff]
        %v1369 = vld [vmem:[#allocation6 + $0x20] sm:$0xff]
        %v1370 = vld [vmem:[#allocation6 + $0x28] sm:$0xff]
        %v1371 = vld [vmem:[#allocation6 + $0x30] sm:$0xff]
        %v1372 = vld [vmem:[#allocation6 + $0x38] sm:$0xff]
        %v1373 = vld [vmem:[#allocation6 + $0x40] sm:$0xff]
        %v1374 = vld [vmem:[#allocation6 + $0x48] sm:$0xff]
        %v1375 = vld [vmem:[#allocation6 + $0x50] sm:$0xff]
        %v1376 = vld [vmem:[#allocation6 + $0x58] sm:$0xff]
        %v1377 = vld [vmem:[#allocation6 + $0x60] sm:$0xff]
        %v1378 = vld [vmem:[#allocation6 + $0x68] sm:$0xff]
        %v1379 = vld [vmem:[#allocation6 + $0x70] sm:$0xff]
        %v1380 = vld [vmem:[#allocation6 + $0x78] sm:$0xff]
        %v1381 = vld [vmem:[#allocation6 + $0x80] sm:$0xff]
        %v1382 = vld [vmem:[#allocation6 + $0x88] sm:$0xff]
        %v1383 = vld [vmem:[#allocation6 + $0x90] sm:$0xff]
        %v1384 = vld [vmem:[#allocation6 + $0x98] sm:$0xff]
        %v1385 = vld [vmem:[#allocation6 + $0xa0] sm:$0xff]
        %v1386 = vld [vmem:[#allocation6 + $0xa8] sm:$0xff]
        %v1387 = vld [vmem:[#allocation6 + $0xb0] sm:$0xff]
        %v1388 = vld [vmem:[#allocation6 + $0xb8] sm:$0xff]
        %v1389 = vld [vmem:[#allocation6 + $0xc0] sm:$0xff]
        %v1390 = vld [vmem:[#allocation2] sm:$0xff]
        %v1391 = vld [vmem:[#allocation2 + $0x8] sm:$0xff]
        %v1392 = vld [vmem:[#allocation2 + $0x10] sm:$0xff]
        %v1393 = vld [vmem:[#allocation2 + $0x18] sm:$0xff]
        %v1394 = vld [vmem:[#allocation2 + $0x20] sm:$0xff]
        %v1395 = vld [vmem:[#allocation2 + $0x28] sm:$0xff]
        %v1396 = vld [vmem:[#allocation2 + $0x30] sm:$0xff]
        %v1397 = vld [vmem:[#allocation2 + $0x38] sm:$0xff]
        %v1398 = vld [vmem:[#allocation2 + $0x40] sm:$0xff]
        %v1399 = vld [vmem:[#allocation2 + $0x48] sm:$0xff]
        %v1400 = vld [vmem:[#allocation2 + $0x50] sm:$0xff]
        %v1401 = vld [vmem:[#allocation2 + $0x58] sm:$0xff]
        %v1402 = vld [vmem:[#allocation2 + $0x60] sm:$0xff]
        %v1403 = vld [vmem:[#allocation2 + $0x68] sm:$0xff]
        %v1404 = vld [vmem:[#allocation2 + $0x70] sm:$0xff]
        %v1405 = vld [vmem:[#allocation2 + $0x78] sm:$0xff]
        %v1406 = vld [vmem:[#allocation2 + $0x80] sm:$0xff]
        %v1407 = vld [vmem:[#allocation2 + $0x88] sm:$0xff]
        %v1408 = vld [vmem:[#allocation2 + $0x90] sm:$0xff]
        %v1409 = vld [vmem:[#allocation2 + $0x98] sm:$0xff]
        %v1410 = vld [vmem:[#allocation2 + $0xa0] sm:$0xff]
        %v1411 = vld [vmem:[#allocation2 + $0xa8] sm:$0xff]
        %v1412 = vld [vmem:[#allocation2 + $0xb0] sm:$0xff]
        %v1413 = vld [vmem:[#allocation2 + $0xb8] sm:$0xff]
        %v1414 = vld [vmem:[#allocation2 + $0xc0] sm:$0xff]
        %v1415 = vld [vmem:[#allocation2 + $0xc8] sm:$0xff]
        %v1416 = vld [vmem:[#allocation2 + $0xd0] sm:$0xff]
        %v1417 = vld [vmem:[#allocation2 + $0xd8] sm:$0xff]
        %v1418 = vld [vmem:[#allocation2 + $0xe0] sm:$0xff]
        %v1419 = vld [vmem:[#allocation2 + $0xe8] sm:$0xff]
        %v1420 = vld [vmem:[#allocation2 + $0xf0] sm:$0xff]
        %v1421 = vld [vmem:[#allocation2 + $0xf8] sm:$0xff]
        %v1422 = vld [vmem:[#allocation2 + $0x100] sm:$0xff]
        %v1423 = vld [vmem:[#allocation2 + $0x108] sm:$0xff]
        %v1424 = vld [vmem:[#allocation2 + $0x110] sm:$0xff]
        %v1425 = vld [vmem:[#allocation2 + $0x118] sm:$0xff]
        %v1426 = vld [vmem:[#allocation2 + $0x120] sm:$0xff]
        %v1427 = vld [vmem:[#allocation2 + $0x128] sm:$0xff]
        %v1428 = vld [vmem:[#allocation2 + $0x130] sm:$0xff]
        %v1429 = vld [vmem:[#allocation2 + $0x138] sm:$0xff]
        %v1430 = vld [vmem:[#allocation2 + $0x140] sm:$0xff]
        %v1431 = vld [vmem:[#allocation2 + $0x148] sm:$0xff]
        %v1432 = vld [vmem:[#allocation2 + $0x150] sm:$0xff]
        %v1433 = vld [vmem:[#allocation2 + $0x158] sm:$0xff]
        %v1434 = vld [vmem:[#allocation2 + $0x160] sm:$0xff]
        %v1435 = vld [vmem:[#allocation2 + $0x168] sm:$0xff]
        %v1436 = vld [vmem:[#allocation2 + $0x170] sm:$0xff]
        %v1437 = vld [vmem:[#allocation2 + $0x178] sm:$0xff]
        %v1438 = vld [vmem:[#allocation2 + $0x180] sm:$0xff]
        %v1439 = vld [vmem:[#allocation2 + $0x188] sm:$0xff]
        %v1440 = vld [vmem:[#allocation2 + $0x190] sm:$0xff]
        %v1441 = vld [vmem:[#allocation2 + $0x198] sm:$0xff]
        %v1442 = vld [vmem:[#allocation2 + $0x1a0] sm:$0xff]
        %v1443 = vld [vmem:[#allocation2 + $0x1a8] sm:$0xff]
        %v1444 = vld [vmem:[#allocation2 + $0x1b0] sm:$0xff]
        %v1445 = vld [vmem:[#allocation2 + $0x1b8] sm:$0xff]
        %v1446 = vld [vmem:[#allocation2 + $0x1c0] sm:$0xff]
        %v1447 = vld [vmem:[#allocation2 + $0x1c8] sm:$0xff]
        %v1448 = vld [vmem:[#allocation2 + $0x1d0] sm:$0xff]
        %v1449 = vld [vmem:[#allocation2 + $0x1d8] sm:$0xff]
        %v1450 = vld [vmem:[#allocation2 + $0x1e0] sm:$0xff]
        %v1451 = vld [vmem:[#allocation2 + $0x1e8] sm:$0xff]
        %v1452 = vld [vmem:[#allocation2 + $0x1f0] sm:$0xff]
        %v1453 = vld [vmem:[#allocation2 + $0x1f8] sm:$0xff]
        %v1454 = vld [vmem:[#allocation2 + $0x200] sm:$0xff]
        %v1455 = vld [vmem:[#allocation2 + $0x208] sm:$0xff]
        %v1456 = vld [vmem:[#allocation2 + $0x210] sm:$0xff]
        %v1457 = vld [vmem:[#allocation2 + $0x218] sm:$0xff]
        %v1458 = vld [vmem:[#allocation2 + $0x220] sm:$0xff]
        %v1459 = vld [vmem:[#allocation2 + $0x228] sm:$0xff]
        %v1460 = vld [vmem:[#allocation2 + $0x230] sm:$0xff]
        %v1461 = vld [vmem:[#allocation2 + $0x238] sm:$0xff]
        %v1462 = vld [vmem:[#allocation2 + $0x240] sm:$0xff]
        %v1463 = vld [vmem:[#allocation2 + $0x248] sm:$0xff]
        %v1464 = vld [vmem:[#allocation2 + $0x250] sm:$0xff]
        %v1465 = vld [vmem:[#allocation2 + $0x258] sm:$0xff]
        %v1466 = vld [vmem:[#allocation2 + $0x260] sm:$0xff]
        %v1467 = vld [vmem:[#allocation2 + $0x268] sm:$0xff]
        %v1468 = vld [vmem:[#allocation2 + $0x270] sm:$0xff]
        %v1469 = vld [vmem:[#allocation2 + $0x278] sm:$0xff]
        %v1470 = vld [vmem:[#allocation2 + $0x280] sm:$0xff]
        %v1471 = vld [vmem:[#allocation2 + $0x288] sm:$0xff]
        %v1472 = vld [vmem:[#allocation2 + $0x290] sm:$0xff]
        %v1473 = vld [vmem:[#allocation2 + $0x298] sm:$0xff]
        %v1474 = vld [vmem:[#allocation2 + $0x2a0] sm:$0xff]
        %v1475 = vld [vmem:[#allocation2 + $0x2a8] sm:$0xff]
        %v1476 = vld [vmem:[#allocation2 + $0x2b0] sm:$0xff]
        %v1477 = vld [vmem:[#allocation2 + $0x2b8] sm:$0xff]
        %v1478 = vld [vmem:[#allocation2 + $0x2c0] sm:$0xff]
        %v1479 = vld [vmem:[#allocation2 + $0x2c8] sm:$0xff]
        %v1480 = vld [vmem:[#allocation2 + $0x2d0] sm:$0xff]
        %v1481 = vld [vmem:[#allocation2 + $0x2d8] sm:$0xff]
        %v1482 = vld [vmem:[#allocation2 + $0x2e0] sm:$0xff]
        %v1483 = vld [vmem:[#allocation2 + $0x2e8] sm:$0xff]
        %v1484 = vld [vmem:[#allocation2 + $0x2f0] sm:$0xff]
        %v1485 = vld [vmem:[#allocation2 + $0x2f8] sm:$0xff]
        %v1486 = vld [vmem:[#allocation2 + $0x300] sm:$0xff]
        %v1487 = vld [vmem:[#allocation2 + $0x308] sm:$0xff]
        %v1488 = vld [vmem:[#allocation2 + $0x310] sm:$0xff]
        %v1489 = vld [vmem:[#allocation2 + $0x318] sm:$0xff]
        %v1490 = vld [vmem:[#allocation2 + $0x320] sm:$0xff]
        %v1491 = vld [vmem:[#allocation2 + $0x328] sm:$0xff]
        %v1492 = vld [vmem:[#allocation2 + $0x330] sm:$0xff]
        %v1493 = vld [vmem:[#allocation2 + $0x338] sm:$0xff]
        %v1494 = vld [vmem:[#allocation2 + $0x340] sm:$0xff]
        %v1495 = vld [vmem:[#allocation2 + $0x348] sm:$0xff]
        %v1496 = vld [vmem:[#allocation2 + $0x350] sm:$0xff]
        %v1497 = vld [vmem:[#allocation2 + $0x358] sm:$0xff]
        %v1498 = vld [vmem:[#allocation2 + $0x360] sm:$0xff]
        %v1499 = vld [vmem:[#allocation2 + $0x368] sm:$0xff]
        %v1500 = vld [vmem:[#allocation2 + $0x370] sm:$0xff]
        %v1501 = vld [vmem:[#allocation2 + $0x378] sm:$0xff]
        %v1502 = vld [vmem:[#allocation2 + $0x380] sm:$0xff]
        %v1503 = vld [vmem:[#allocation2 + $0x388] sm:$0xff]
        %v1504 = vld [vmem:[#allocation2 + $0x390] sm:$0xff]
        %v1505 = vld [vmem:[#allocation2 + $0x398] sm:$0xff]
        %v1506 = vld [vmem:[#allocation2 + $0x3a0] sm:$0xff]
        %v1507 = vld [vmem:[#allocation2 + $0x3a8] sm:$0xff]
        %v1508 = vld [vmem:[#allocation2 + $0x3b0] sm:$0xff]
        %v1509 = vld [vmem:[#allocation2 + $0x3b8] sm:$0xff]
        %v1510 = vld [vmem:[#allocation2 + $0x3c0] sm:$0xff]
        %v1511 = vld [vmem:[#allocation2 + $0x3c8] sm:$0xff]
        %v1512 = vld [vmem:[#allocation2 + $0x3d0] sm:$0xff]
        %v1513 = vld [vmem:[#allocation2 + $0x3d8] sm:$0xff]
        %v1514 = vld [vmem:[#allocation2 + $0x3e0] sm:$0xff]
        %v1515 = vld [vmem:[#allocation2 + $0x3e8] sm:$0xff]
        %v1516 = vld [vmem:[#allocation2 + $0x3f0] sm:$0xff]
        %v1517 = vld [vmem:[#allocation2 + $0x3f8] sm:$0xff]
        %v1518 = vld [vmem:[#allocation2 + $0x400] sm:$0xff]
        %v1519 = vld [vmem:[#allocation2 + $0x408] sm:$0xff]
        %v1520 = vld [vmem:[#allocation2 + $0x410] sm:$0xff]
        %v1521 = vld [vmem:[#allocation2 + $0x418] sm:$0xff]
        %v1522 = vld [vmem:[#allocation2 + $0x420] sm:$0xff]
        %v1523 = vld [vmem:[#allocation2 + $0x428] sm:$0xff]
        %v1524 = vld [vmem:[#allocation2 + $0x430] sm:$0xff]
        %v1525 = vld [vmem:[#allocation2 + $0x438] sm:$0xff]
        %v1526 = vld [vmem:[#allocation2 + $0x440] sm:$0xff]
        %v1527 = vld [vmem:[#allocation2 + $0x448] sm:$0xff]
        %v1528 = vld [vmem:[#allocation2 + $0x450] sm:$0xff]
        %v1529 = vld [vmem:[#allocation2 + $0x458] sm:$0xff]
        %v1530 = vld [vmem:[#allocation2 + $0x460] sm:$0xff]
        %v1531 = vld [vmem:[#allocation2 + $0x468] sm:$0xff]
        %v1532 = vld [vmem:[#allocation2 + $0x470] sm:$0xff]
        %v1533 = vld [vmem:[#allocation2 + $0x478] sm:$0xff]
        %v1534 = vld [vmem:[#allocation2 + $0x480] sm:$0xff]
        %v1535 = vld [vmem:[#allocation2 + $0x488] sm:$0xff]
        %v1536 = vld [vmem:[#allocation2 + $0x490] sm:$0xff]
        %v1537 = vld [vmem:[#allocation2 + $0x498] sm:$0xff]
        %v1538 = vld [vmem:[#allocation2 + $0x4a0] sm:$0xff]
        %v1539 = vld [vmem:[#allocation2 + $0x4a8] sm:$0xff]
        %v1540 = vld [vmem:[%s2] sm:$0xff]
        %v1541 = vld [vmem:[%s2 + $0x8] sm:$0xff]
        %v1542 = vld [vmem:[%s2 + $0x10] sm:$0xff]
        %v1543 = vld [vmem:[%s2 + $0x18] sm:$0xff]
        %v1544 = vld [vmem:[%s2 + $0x20] sm:$0xff]
        %1546 = vset.pattern.permute.xlu0 0
        %1547 = vperm.xlu0 %1546, %v1540
        %v1548 = vpop.permute.xlu0 %1547
        %1551 = vset.pattern.permute.xlu0 0
        %1552 = vperm.xlu0 %1551, %v1541
        %v1553 = vpop.permute.xlu0 %1552
        %1556 = vset.pattern.permute.xlu0 0
        %1557 = vperm.xlu0 %1556, %v1542
        %v1558 = vpop.permute.xlu0 %1557
        %1561 = vset.pattern.permute.xlu0 0
        %1562 = vperm.xlu0 %1561, %v1543
        %v1563 = vpop.permute.xlu0 %1562
        %1566 = vset.pattern.permute.xlu0 0
        %1567 = vperm.xlu0 %1566, %v1544
        %v1568 = vpop.permute.xlu0 %1567
        %vm1570 = vcmask 719872
        %v1572 = vsel %vm1570, %v1369, 0
        %v1575 = vsel %vm1570, %v1374, 0
        %v1578 = vsel %vm1570, %v1379, 0
        %v1581 = vsel %vm1570, %v1384, 0
        %v1584 = vsel %vm1570, %v1389, 0
        %1586 = vmatprep.subr.mxu0 %v1391
        %1587 = vmatpush1.msra.mxu0 %v1390
        %1588 = vmatprep.subr.mxu0 %v1393
        %1589 = vmatpush1.msra.mxu0 %v1392
        %1590 = vmatprep.subr.mxu0 %v1395
        %1591 = vmatpush1.msra.mxu0 %v1394
        %1592 = vmatprep.subr.mxu0 %v1397
        %1593 = vmatpush1.msra.mxu0 %v1396
        %1594 = vmatprep.subr.mxu0 %v1399
        %1595 = vmatpush1.msra.mxu0 %v1398
        %1596 = vmatprep.subr.mxu0 %v1401
        %1597 = vmatpush1.msra.mxu0 %v1400
        %1598 = vmatprep.subr.mxu0 %v1403
        %1599 = vmatpush1.msra.mxu0 %v1402
        %1600 = vmatprep.subr.mxu0 %v1405
        %1601 = vmatpush1.msra.mxu0 %v1404
        %1602 = vmatprep.subr.mxu0 %v1407
        %1603 = vmatpush1.msra.mxu0 %v1406
        %1604 = vmatprep.subr.mxu0 %v1409
        %1605 = vmatpush1.msra.mxu0 %v1408
        %1606 = vmatprep.subr.mxu0 %v1411
        %1607 = vmatpush1.msra.mxu0 %v1410
        %1608 = vmatprep.subr.mxu0 %v1413
        %1609 = vmatpush1.msra.mxu0 %v1412
        %1610 = vmatprep.subr.mxu0 %v1415
        %1611 = vmatpush1.msra.mxu0 %v1414
        %1612 = vmatprep.subr.mxu0 %v1417
        %1613 = vmatpush1.msra.mxu0 %v1416
        %1614 = vmatprep.subr.mxu0 %v1419
        %1615 = vmatpush1.msra.mxu0 %v1418
        %1616 = vmatprep.subr.mxu0 %v1421
        %1617 = vmatpush1.msra.mxu0 %v1420
        %1618 = vmatprep.subr.mxu0 %v1423
        %1619 = vmatpush1.msra.mxu0 %v1422
        %1620 = vmatprep.subr.mxu0 %v1425
        %1621 = vmatpush1.msra.mxu0 %v1424
        %1622 = vmatprep.subr.mxu0 %v1427
        %1623 = vmatpush1.msra.mxu0 %v1426
        %1624 = vmatprep.subr.mxu0 %v1429
        %1625 = vmatpush1.msra.mxu0 %v1428
        %1626 = vmatprep.subr.mxu0 %v1431
        %1627 = vmatpush1.msra.mxu0 %v1430
        %1628 = vmatprep.subr.mxu0 %v1433
        %1629 = vmatpush1.msra.mxu0 %v1432
        %1630 = vmatprep.subr.mxu0 %v1435
        %1631 = vmatpush1.msra.mxu0 %v1434
        %1632 = vmatprep.subr.mxu0 %v1437
        %1633 = vmatpush1.msra.mxu0 %v1436
        %1634 = vmatprep.subr.mxu0 %v1439
        %1635 = vmatpush1.msra.mxu0 %v1438
        %1636 = vmatprep.subr.mxu0 %v1441
        %1637 = vmatpush1.msra.mxu0 %v1440
        %1638 = vmatprep.subr.mxu0 %v1443
        %1639 = vmatpush1.msra.mxu0 %v1442
        %1640 = vmatprep.subr.mxu0 %v1445
        %1641 = vmatpush1.msra.mxu0 %v1444
        %1642 = vmatprep.subr.mxu0 %v1447
        %1643 = vmatpush1.msra.mxu0 %v1446
        %1644 = vmatprep.subr.mxu0 %v1449
        %1645 = vmatpush1.msra.mxu0 %v1448
        %1646 = vmatprep.subr.mxu0 %v1451
        %1647 = vmatpush1.msra.mxu0 %v1450
        %1648 = vmatprep.subr.mxu0 %v1453
        %1649 = vmatpush1.msra.mxu0 %v1452
        %1650 = vmatprep.mubr.f32.mxu0 %v1366
        %1651 = vmatmul.mubr.f32.gmra.mrb[0].mxu0 %v1365
        %v1652 = vpop.f32.mrb[0].mxu0
        %v1653 = vadd.f32 %v1548, %v1652
        %v1654 = vpop.f32.mrb[0].mxu0
        %v1655 = vadd.f32 %v1548, %v1654
        %1656 = vmatprep.mubr.f32.mxu0 %v1371
        %1657 = vmatmul.mubr.f32.gmra.mrb[0].mxu0 %v1370
        %v1658 = vpop.f32.mrb[0].mxu0
        %v1659 = vadd.f32 %v1553, %v1658
        %v1660 = vpop.f32.mrb[0].mxu0
        %v1661 = vadd.f32 %v1553, %v1660
        %1662 = vmatprep.mubr.f32.mxu0 %v1376
        %1663 = vmatmul.mubr.f32.gmra.mrb[0].mxu0 %v1375
        %v1664 = vpop.f32.mrb[0].mxu0
        %v1665 = vadd.f32 %v1558, %v1664
        %v1666 = vpop.f32.mrb[0].mxu0
        %v1667 = vadd.f32 %v1558, %v1666
        %1668 = vmatprep.mubr.f32.mxu0 %v1381
        %1669 = vmatmul.mubr.f32.gmra.mrb[0].mxu0 %v1380
        %v1670 = vpop.f32.mrb[0].mxu0
        %v1671 = vadd.f32 %v1563, %v1670
        %v1672 = vpop.f32.mrb[0].mxu0
        %v1673 = vadd.f32 %v1563, %v1672
        %1674 = vmatprep.mubr.f32.mxu0 %v1386
        %1675 = vmatmul.mubr.f32.gmra.mrb[0].mxu0 %v1385
        %v1676 = vpop.f32.mrb[0].mxu0
        %v1677 = vadd.f32 %v1568, %v1676
        %v1678 = vpop.f32.mrb[0].mxu0
        %v1679 = vadd.f32 %v1568, %v1678
        %1680 = vdwg.mxu0
        %1681 = vmatprep.subr.mxu0 %v1455
        %1682 = vmatpush1.msra.mxu0 %v1454
        %1683 = vmatprep.subr.mxu0 %v1457
        %1684 = vmatpush1.msra.mxu0 %v1456
        %1685 = vmatprep.subr.mxu0 %v1459
        %1686 = vmatpush1.msra.mxu0 %v1458
        %1687 = vmatprep.subr.mxu0 %v1461
        %1688 = vmatpush1.msra.mxu0 %v1460
        %1689 = vmatprep.subr.mxu0 %v1463
        %1690 = vmatpush1.msra.mxu0 %v1462
        %1691 = vmatprep.subr.mxu0 %v1465
        %1692 = vmatpush1.msra.mxu0 %v1464
        %1693 = vmatprep.subr.mxu0 %v1467
        %1694 = vmatpush1.msra.mxu0 %v1466
        %1695 = vmatprep.subr.mxu0 %v1469
        %1696 = vmatpush1.msra.mxu0 %v1468
        %1697 = vmatprep.subr.mxu0 %v1471
        %1698 = vmatpush1.msra.mxu0 %v1470
        %1699 = vmatprep.subr.mxu0 %v1473
        %1700 = vmatpush1.msra.mxu0 %v1472
        %1701 = vmatprep.subr.mxu0 %v1475
        %1702 = vmatpush1.msra.mxu0 %v1474
        %1703 = vmatprep.subr.mxu0 %v1477
        %1704 = vmatpush1.msra.mxu0 %v1476
        %1705 = vmatprep.subr.mxu0 %v1479
        %1706 = vmatpush1.msra.mxu0 %v1478
        %1707 = vmatprep.subr.mxu0 %v1481
        %1708 = vmatpush1.msra.mxu0 %v1480
        %1709 = vmatprep.subr.mxu0 %v1483
        %1710 = vmatpush1.msra.mxu0 %v1482
        %1711 = vmatprep.subr.mxu0 %v1485
        %1712 = vmatpush1.msra.mxu0 %v1484
        %1713 = vmatprep.subr.mxu0 %v1487
        %1714 = vmatpush1.msra.mxu0 %v1486
        %1715 = vmatprep.subr.mxu0 %v1489
        %1716 = vmatpush1.msra.mxu0 %v1488
        %1717 = vmatprep.subr.mxu0 %v1491
        %1718 = vmatpush1.msra.mxu0 %v1490
        %1719 = vmatprep.subr.mxu0 %v1493
        %1720 = vmatpush1.msra.mxu0 %v1492
        %1721 = vmatprep.subr.mxu0 %v1495
        %1722 = vmatpush1.msra.mxu0 %v1494
        %1723 = vmatprep.subr.mxu0 %v1497
        %1724 = vmatpush1.msra.mxu0 %v1496
        %1725 = vmatprep.subr.mxu0 %v1499
        %1726 = vmatpush1.msra.mxu0 %v1498
        %1727 = vmatprep.subr.mxu0 %v1501
        %1728 = vmatpush1.msra.mxu0 %v1500
        %1729 = vmatprep.subr.mxu0 %v1503
        %1730 = vmatpush1.msra.mxu0 %v1502
        %1731 = vmatprep.subr.mxu0 %v1505
        %1732 = vmatpush1.msra.mxu0 %v1504
        %1733 = vmatprep.subr.mxu0 %v1507
        %1734 = vmatpush1.msra.mxu0 %v1506
        %1735 = vmatprep.subr.mxu0 %v1509
        %1736 = vmatpush1.msra.mxu0 %v1508
        %1737 = vmatprep.subr.mxu0 %v1511
        %1738 = vmatpush1.msra.mxu0 %v1510
        %1739 = vmatprep.subr.mxu0 %v1513
        %1740 = vmatpush1.msra.mxu0 %v1512
        %1741 = vmatprep.subr.mxu0 %v1515
        %1742 = vmatpush1.msra.mxu0 %v1514
        %1743 = vmatprep.subr.mxu0 %v1517
        %1744 = vmatpush1.msra.mxu0 %v1516
        %1745 = vmatprep.mubr.f32.mxu0 %v1368
        %1746 = vmatmul.mubr.f32.gmra.mrb[0].mxu0 %v1367
        %v1747 = vpop.f32.mrb[0].mxu0
        %v1748 = vadd.f32 %v1653, %v1747
        %v1749 = vpop.f32.mrb[0].mxu0
        %v1750 = vadd.f32 %v1655, %v1749
        %1751 = vmatprep.mubr.f32.mxu0 %v1373
        %1752 = vmatmul.mubr.f32.gmra.mrb[0].mxu0 %v1372
        %v1753 = vpop.f32.mrb[0].mxu0
        %v1754 = vadd.f32 %v1659, %v1753
        %v1755 = vpop.f32.mrb[0].mxu0
        %v1756 = vadd.f32 %v1661, %v1755
        %1757 = vmatprep.mubr.f32.mxu0 %v1378
        %1758 = vmatmul.mubr.f32.gmra.mrb[0].mxu0 %v1377
        %v1759 = vpop.f32.mrb[0].mxu0
        %v1760 = vadd.f32 %v1665, %v1759
        %v1761 = vpop.f32.mrb[0].mxu0
        %v1762 = vadd.f32 %v1667, %v1761
        %1763 = vmatprep.mubr.f32.mxu0 %v1383
        %1764 = vmatmul.mubr.f32.gmra.mrb[0].mxu0 %v1382
        %v1765 = vpop.f32.mrb[0].mxu0
        %v1766 = vadd.f32 %v1671, %v1765
        %v1767 = vpop.f32.mrb[0].mxu0
        %v1768 = vadd.f32 %v1673, %v1767
        %1769 = vmatprep.mubr.f32.mxu0 %v1388
        %1770 = vmatmul.mubr.f32.gmra.mrb[0].mxu0 %v1387
        %v1771 = vpop.f32.mrb[0].mxu0
        %v1772 = vadd.f32 %v1677, %v1771
        %v1773 = vpop.f32.mrb[0].mxu0
        %v1774 = vadd.f32 %v1679, %v1773
        %1775 = vdwg.mxu0
        %1776 = vmatprep.subr.mxu0 %v1519
        %1777 = vmatpush1.msra.mxu0 %v1518
        %1778 = vmatprep.subr.mxu0 %v1521
        %1779 = vmatpush1.msra.mxu0 %v1520
        %1780 = vmatprep.subr.mxu0 %v1523
        %1781 = vmatpush1.msra.mxu0 %v1522
        %1782 = vmatprep.subr.mxu0 %v1525
        %1783 = vmatpush1.msra.mxu0 %v1524
        %1784 = vmatprep.subr.mxu0 %v1527
        %1785 = vmatpush1.msra.mxu0 %v1526
        %1786 = vmatprep.subr.mxu0 %v1529
        %1787 = vmatpush1.msra.mxu0 %v1528
        %1788 = vmatprep.subr.mxu0 %v1531
        %1789 = vmatpush1.msra.mxu0 %v1530
        %1790 = vmatprep.subr.mxu0 %v1533
        %1791 = vmatpush1.msra.mxu0 %v1532
        %1792 = vmatprep.subr.mxu0 %v1535
        %1793 = vmatpush1.msra.mxu0 %v1534
        %1794 = vmatprep.subr.mxu0 %v1537
        %1795 = vmatpush1.msra.mxu0 %v1536
        %1796 = vmatprep.subr.mxu0 %v1539
        %1797 = vmatpush1.msra.mxu0 %v1538
        %1798 = vmatprep.subr.mxu0 0.0
        %1799 = vmatpush1.msra.mxu0 0.0
        %1800 = vmatprep.subr.mxu0 0.0
        %1801 = vmatpush1.msra.mxu0 0.0
        %1802 = vmatprep.subr.mxu0 0.0
        %1803 = vmatpush1.msra.mxu0 0.0
        %1804 = vmatprep.subr.mxu0 0.0
        %1805 = vmatpush1.msra.mxu0 0.0
        %1806 = vmatprep.subr.mxu0 0.0
        %1807 = vmatpush1.msra.mxu0 0.0
        %1808 = vmatprep.subr.mxu0 0.0
        %1809 = vmatpush1.msra.mxu0 0.0
        %1810 = vmatprep.subr.mxu0 0.0
        %1811 = vmatpush1.msra.mxu0 0.0
        %1812 = vmatprep.subr.mxu0 0.0
        %1813 = vmatpush1.msra.mxu0 0.0
        %1814 = vmatprep.subr.mxu0 0.0
        %1815 = vmatpush1.msra.mxu0 0.0
        %1816 = vmatprep.subr.mxu0 0.0
        %1817 = vmatpush1.msra.mxu0 0.0
        %1818 = vmatprep.subr.mxu0 0.0
        %1819 = vmatpush1.msra.mxu0 0.0
        %1820 = vmatprep.subr.mxu0 0.0
        %1821 = vmatpush1.msra.mxu0 0.0
        %1822 = vmatprep.subr.mxu0 0.0
        %1823 = vmatpush1.msra.mxu0 0.0
        %1824 = vmatprep.subr.mxu0 0.0
        %1825 = vmatpush1.msra.mxu0 0.0
        %1826 = vmatprep.subr.mxu0 0.0
        %1827 = vmatpush1.msra.mxu0 0.0
        %1828 = vmatprep.subr.mxu0 0.0
        %1829 = vmatpush1.msra.mxu0 0.0
        %1830 = vmatprep.subr.mxu0 0.0
        %1831 = vmatpush1.msra.mxu0 0.0
        %1832 = vmatprep.subr.mxu0 0.0
        %1833 = vmatpush1.msra.mxu0 0.0
        %1834 = vmatprep.subr.mxu0 0.0
        %1835 = vmatpush1.msra.mxu0 0.0
        %1836 = vmatprep.subr.mxu0 0.0
        %1837 = vmatpush1.msra.mxu0 0.0
        %1838 = vmatprep.subr.mxu0 0.0
        %1839 = vmatpush1.msra.mxu0 0.0
        %1840 = vmatprep.mubr.f32.mxu0 0.0
        %1841 = vmatmul.mubr.f32.gmra.mrb[0].mxu0 %v1572
        %v1842 = vpop.f32.mrb[0].mxu0
        %v1843 = vadd.f32 %v1748, %v1842
        %v1844 = vpop.f32.mrb[0].mxu0
        %v1845 = vadd.f32 %v1750, %v1844
        %1846 = vmatprep.mubr.f32.mxu0 0.0
        %1847 = vmatmul.mubr.f32.gmra.mrb[0].mxu0 %v1575
        %v1848 = vpop.f32.mrb[0].mxu0
        %v1849 = vadd.f32 %v1754, %v1848
        %v1850 = vpop.f32.mrb[0].mxu0
        %v1851 = vadd.f32 %v1756, %v1850
        %1852 = vmatprep.mubr.f32.mxu0 0.0
        %1853 = vmatmul.mubr.f32.gmra.mrb[0].mxu0 %v1578
        %v1854 = vpop.f32.mrb[0].mxu0
        %v1855 = vadd.f32 %v1760, %v1854
        %v1856 = vpop.f32.mrb[0].mxu0
        %v1857 = vadd.f32 %v1762, %v1856
        %1858 = vmatprep.mubr.f32.mxu0 0.0
        %1859 = vmatmul.mubr.f32.gmra.mrb[0].mxu0 %v1581
        %v1860 = vpop.f32.mrb[0].mxu0
        %v1861 = vadd.f32 %v1766, %v1860
        %v1862 = vpop.f32.mrb[0].mxu0
        %v1863 = vadd.f32 %v1768, %v1862
        %1864 = vmatprep.mubr.f32.mxu0 0.0
        %1865 = vmatmul.mubr.f32.gmra.mrb[0].mxu0 %v1584
        %v1866 = vpop.f32.mrb[0].mxu0
        %v1867 = vadd.f32 %v1772, %v1866
        %v1868 = vpop.f32.mrb[0].mxu0
        %v1869 = vadd.f32 %v1774, %v1868
        %1870 = vdwg.mxu0
        %v1871 = vmul.f32 %v1843, 0.5
        %v1872 = vmul.f32 %v1845, 0.5
        %v1873 = vmul.f32 %v1849, 0.5
        %v1874 = vmul.f32 %v1851, 0.5
        %v1875 = vmul.f32 %v1855, 0.5
        %v1876 = vmul.f32 %v1857, 0.5
        %v1877 = vmul.f32 %v1861, 0.5
        %v1878 = vmul.f32 %v1863, 0.5
        %v1879 = vmul.f32 %v1867, 0.5
        %v1880 = vmul.f32 %v1869, 0.5
        %v1881 = vmul.f32 %v1843, 0.70710677
        %v1882 = vmul.f32 %v1845, 0.70710677
        %v1883 = vmul.f32 %v1849, 0.70710677
        %v1884 = vmul.f32 %v1851, 0.70710677
        %v1885 = vmul.f32 %v1855, 0.70710677
        %v1886 = vmul.f32 %v1857, 0.70710677
        %v1887 = vmul.f32 %v1861, 0.70710677
        %v1888 = vmul.f32 %v1863, 0.70710677
        %v1889 = vmul.f32 %v1867, 0.70710677
        %v1890 = vmul.f32 %v1869, 0.70710677
        %v1891 = vand.u32 2147483647, %v1881
        %v1892 = vand.u32 2147483647, %v1882
        %v1893 = vand.u32 2147483647, %v1883
        %v1894 = vand.u32 2147483647, %v1884
        %v1895 = vand.u32 2147483647, %v1885
        %v1896 = vand.u32 2147483647, %v1886
        %v1897 = vand.u32 2147483647, %v1887
        %v1898 = vand.u32 2147483647, %v1888
        %v1899 = vand.u32 2147483647, %v1889
        %v1900 = vand.u32 2147483647, %v1890
        %v1901 = vmul.f32 %v1891, 0.3275911
        %v1902 = vmul.f32 %v1892, 0.3275911
        %v1903 = vmul.f32 %v1893, 0.3275911
        %v1904 = vmul.f32 %v1894, 0.3275911
        %v1905 = vmul.f32 %v1895, 0.3275911
        %v1906 = vmul.f32 %v1896, 0.3275911
        %v1907 = vmul.f32 %v1897, 0.3275911
        %v1908 = vmul.f32 %v1898, 0.3275911
        %v1909 = vmul.f32 %v1899, 0.3275911
        %v1910 = vmul.f32 %v1900, 0.3275911
        %v1911 = vadd.f32 %v1901, 1.0
        %v1912 = vadd.f32 %v1902, 1.0
        %v1913 = vadd.f32 %v1903, 1.0
        %v1914 = vadd.f32 %v1904, 1.0
        %v1915 = vadd.f32 %v1905, 1.0
        %v1916 = vadd.f32 %v1906, 1.0
        %v1917 = vadd.f32 %v1907, 1.0
        %v1918 = vadd.f32 %v1908, 1.0
        %v1919 = vadd.f32 %v1909, 1.0
        %v1920 = vadd.f32 %v1910, 1.0
        %v1921 = vrcp.pop %v1911
        %v1922 = vmul.f32 1.0, %v1921
        %v1923 = vrcp.pop %v1912
        %v1924 = vmul.f32 1.0, %v1923
        %v1925 = vrcp.pop %v1913
        %v1926 = vmul.f32 1.0, %v1925
        %v1927 = vrcp.pop %v1914
        %v1928 = vmul.f32 1.0, %v1927
        %v1929 = vrcp.pop %v1915
        %v1930 = vmul.f32 1.0, %v1929
        %v1931 = vrcp.pop %v1916
        %v1932 = vmul.f32 1.0, %v1931
        %v1933 = vrcp.pop %v1917
        %v1934 = vmul.f32 1.0, %v1933
        %v1935 = vrcp.pop %v1918
        %v1936 = vmul.f32 1.0, %v1935
        %v1937 = vrcp.pop %v1919
        %v1938 = vmul.f32 1.0, %v1937
        %v1939 = vrcp.pop %v1920
        %v1940 = vmul.f32 1.0, %v1939
        %v1941 = vmul.f32 %v1922, 1.0614054
        %v1942 = vmul.f32 %v1924, 1.0614054
        %v1943 = vmul.f32 %v1926, 1.0614054
        %v1944 = vmul.f32 %v1928, 1.0614054
        %v1945 = vmul.f32 %v1930, 1.0614054
        %v1946 = vmul.f32 %v1932, 1.0614054
        %v1947 = vmul.f32 %v1934, 1.0614054
        %v1948 = vmul.f32 %v1936, 1.0614054
        %v1949 = vmul.f32 %v1938, 1.0614054
        %v1950 = vmul.f32 %v1940, 1.0614054
        %v1951 = vadd.f32 %v1941, -1.4531521
        %v1952 = vadd.f32 %v1942, -1.4531521
        %v1953 = vadd.f32 %v1943, -1.4531521
        %v1954 = vadd.f32 %v1944, -1.4531521
        %v1955 = vadd.f32 %v1945, -1.4531521
        %v1956 = vadd.f32 %v1946, -1.4531521
        %v1957 = vadd.f32 %v1947, -1.4531521
        %v1958 = vadd.f32 %v1948, -1.4531521
        %v1959 = vadd.f32 %v1949, -1.4531521
        %v1960 = vadd.f32 %v1950, -1.4531521
        %v1961 = vmul.f32 %v1951, %v1922
        %v1962 = vmul.f32 %v1952, %v1924
        %v1963 = vmul.f32 %v1953, %v1926
        %v1964 = vmul.f32 %v1954, %v1928
        %v1965 = vmul.f32 %v1955, %v1930
        %v1966 = vmul.f32 %v1956, %v1932
        %v1967 = vmul.f32 %v1957, %v1934
        %v1968 = vmul.f32 %v1958, %v1936
        %v1969 = vmul.f32 %v1959, %v1938
        %v1970 = vmul.f32 %v1960, %v1940
        %v1971 = vadd.f32 %v1961, 1.4214138
        %v1972 = vadd.f32 %v1962, 1.4214138
        %v1973 = vadd.f32 %v1963, 1.4214138
        %v1974 = vadd.f32 %v1964, 1.4214138
        %v1975 = vadd.f32 %v1965, 1.4214138
        %v1976 = vadd.f32 %v1966, 1.4214138
        %v1977 = vadd.f32 %v1967, 1.4214138
        %v1978 = vadd.f32 %v1968, 1.4214138
        %v1979 = vadd.f32 %v1969, 1.4214138
        %v1980 = vadd.f32 %v1970, 1.4214138
        %v1981 = vmul.f32 %v1971, %v1922
        %v1982 = vmul.f32 %v1972, %v1924
        %v1983 = vmul.f32 %v1973, %v1926
        %v1984 = vmul.f32 %v1974, %v1928
        %v1985 = vmul.f32 %v1975, %v1930
        %v1986 = vmul.f32 %v1976, %v1932
        %v1987 = vmul.f32 %v1977, %v1934
        %v1988 = vmul.f32 %v1978, %v1936
        %v1989 = vmul.f32 %v1979, %v1938
        %v1990 = vmul.f32 %v1980, %v1940
        %v1991 = vadd.f32 %v1981, -0.28449672
        %v1992 = vadd.f32 %v1982, -0.28449672
        %v1993 = vadd.f32 %v1983, -0.28449672
        %v1994 = vadd.f32 %v1984, -0.28449672
        %v1995 = vadd.f32 %v1985, -0.28449672
        %v1996 = vadd.f32 %v1986, -0.28449672
        %v1997 = vadd.f32 %v1987, -0.28449672
        %v1998 = vadd.f32 %v1988, -0.28449672
        %v1999 = vadd.f32 %v1989, -0.28449672
        %v2000 = vadd.f32 %v1990, -0.28449672
        %v2001 = vmul.f32 %v1991, %v1922
        %v2002 = vmul.f32 %v1992, %v1924
        %v2003 = vmul.f32 %v1993, %v1926
        %v2004 = vmul.f32 %v1994, %v1928
        %v2005 = vmul.f32 %v1995, %v1930
        %v2006 = vmul.f32 %v1996, %v1932
        %v2007 = vmul.f32 %v1997, %v1934
        %v2008 = vmul.f32 %v1998, %v1936
        %v2009 = vmul.f32 %v1999, %v1938
        %v2010 = vmul.f32 %v2000, %v1940
        %v2011 = vadd.f32 %v2001, 0.2548296
        %v2012 = vadd.f32 %v2002, 0.2548296
        %v2013 = vadd.f32 %v2003, 0.2548296
        %v2014 = vadd.f32 %v2004, 0.2548296
        %v2015 = vadd.f32 %v2005, 0.2548296
        %v2016 = vadd.f32 %v2006, 0.2548296
        %v2017 = vadd.f32 %v2007, 0.2548296
        %v2018 = vadd.f32 %v2008, 0.2548296
        %v2019 = vadd.f32 %v2009, 0.2548296
        %v2020 = vadd.f32 %v2010, 0.2548296
        %v2021 = vmul.f32 %v2011, %v1922
        %v2022 = vmul.f32 %v2012, %v1924
        %v2023 = vmul.f32 %v2013, %v1926
        %v2024 = vmul.f32 %v2014, %v1928
        %v2025 = vmul.f32 %v2015, %v1930
        %v2026 = vmul.f32 %v2016, %v1932
        %v2027 = vmul.f32 %v2017, %v1934
        %v2028 = vmul.f32 %v2018, %v1936
        %v2029 = vmul.f32 %v2019, %v1938
        %v2030 = vmul.f32 %v2020, %v1940
        %v2031 = vsub.f32 0.0, %v1891
        %v2032 = vsub.f32 0.0, %v1892
        %v2033 = vsub.f32 0.0, %v1893
        %v2034 = vsub.f32 0.0, %v1894
        %v2035 = vsub.f32 0.0, %v1895
        %v2036 = vsub.f32 0.0, %v1896
        %v2037 = vsub.f32 0.0, %v1897
        %v2038 = vsub.f32 0.0, %v1898
        %v2039 = vsub.f32 0.0, %v1899
        %v2040 = vsub.f32 0.0, %v1900
        %v2041 = vmul.f32 %v2031, %v1891
        %v2042 = vmul.f32 %v2032, %v1892
        %v2043 = vmul.f32 %v2033, %v1893
        %v2044 = vmul.f32 %v2034, %v1894
        %v2045 = vmul.f32 %v2035, %v1895
        %v2046 = vmul.f32 %v2036, %v1896
        %v2047 = vmul.f32 %v2037, %v1897
        %v2048 = vmul.f32 %v2038, %v1898
        %v2049 = vmul.f32 %v2039, %v1899
        %v2050 = vmul.f32 %v2040, %v1900
        %v2051 = vmul.f32 %v2041, 1.442695
        %v2052 = vpow.pop %v2051
        %v2053 = vmul.f32 %v2042, 1.442695
        %v2054 = vpow.pop %v2053
        %v2055 = vmul.f32 %v2043, 1.442695
        %v2056 = vpow.pop %v2055
        %v2057 = vmul.f32 %v2044, 1.442695
        %v2058 = vpow.pop %v2057
        %v2059 = vmul.f32 %v2045, 1.442695
        %v2060 = vpow.pop %v2059
        %v2061 = vmul.f32 %v2046, 1.442695
        %v2062 = vpow.pop %v2061
        %v2063 = vmul.f32 %v2047, 1.442695
        %v2064 = vpow.pop %v2063
        %v2065 = vmul.f32 %v2048, 1.442695
        %v2066 = vpow.pop %v2065
        %v2067 = vmul.f32 %v2049, 1.442695
        %v2068 = vpow.pop %v2067
        %v2069 = vmul.f32 %v2050, 1.442695
        %v2070 = vpow.pop %v2069
        %v2071 = vmul.f32 %v2021, %v2052
        %v2072 = vmul.f32 %v2022, %v2054
        %v2073 = vmul.f32 %v2023, %v2056
        %v2074 = vmul.f32 %v2024, %v2058
        %v2075 = vmul.f32 %v2025, %v2060
        %v2076 = vmul.f32 %v2026, %v2062
        %v2077 = vmul.f32 %v2027, %v2064
        %v2078 = vmul.f32 %v2028, %v2066
        %v2079 = vmul.f32 %v2029, %v2068
        %v2080 = vmul.f32 %v2030, %v2070
        %v2081 = vsub.f32 1.0, %v2071
        %v2082 = vsub.f32 1.0, %v2072
        %v2083 = vsub.f32 1.0, %v2073
        %v2084 = vsub.f32 1.0, %v2074
        %v2085 = vsub.f32 1.0, %v2075
        %v2086 = vsub.f32 1.0, %v2076
        %v2087 = vsub.f32 1.0, %v2077
        %v2088 = vsub.f32 1.0, %v2078
        %v2089 = vsub.f32 1.0, %v2079
        %v2090 = vsub.f32 1.0, %v2080
        %vm2091 = vcmp.ge.f32.partialorder %v1881, 0.0
        %vm2092 = vcmp.ge.f32.partialorder %v1882, 0.0
        %vm2093 = vcmp.ge.f32.partialorder %v1883, 0.0
        %vm2094 = vcmp.ge.f32.partialorder %v1884, 0.0
        %vm2095 = vcmp.ge.f32.partialorder %v1885, 0.0
        %vm2096 = vcmp.ge.f32.partialorder %v1886, 0.0
        %vm2097 = vcmp.ge.f32.partialorder %v1887, 0.0
        %vm2098 = vcmp.ge.f32.partialorder %v1888, 0.0
        %vm2099 = vcmp.ge.f32.partialorder %v1889, 0.0
        %vm2100 = vcmp.ge.f32.partialorder %v1890, 0.0
        %v2101 = vsub.f32 0.0, %v2081
        %v2102 = vsub.f32 0.0, %v2082
        %v2103 = vsub.f32 0.0, %v2083
        %v2104 = vsub.f32 0.0, %v2084
        %v2105 = vsub.f32 0.0, %v2085
        %v2106 = vsub.f32 0.0, %v2086
        %v2107 = vsub.f32 0.0, %v2087
        %v2108 = vsub.f32 0.0, %v2088
        %v2109 = vsub.f32 0.0, %v2089
        %v2110 = vsub.f32 0.0, %v2090
        %v2111 = vsel %vm2091, %v2081, %v2101
        %v2112 = vsel %vm2092, %v2082, %v2102
        %v2113 = vsel %vm2093, %v2083, %v2103
        %v2114 = vsel %vm2094, %v2084, %v2104
        %v2115 = vsel %vm2095, %v2085, %v2105
        %v2116 = vsel %vm2096, %v2086, %v2106
        %v2117 = vsel %vm2097, %v2087, %v2107
        %v2118 = vsel %vm2098, %v2088, %v2108
        %v2119 = vsel %vm2099, %v2089, %v2109
        %v2120 = vsel %vm2100, %v2090, %v2110
        %v2121 = vadd.f32 %v2111, 1.0
        %v2122 = vadd.f32 %v2112, 1.0
        %v2123 = vadd.f32 %v2113, 1.0
        %v2124 = vadd.f32 %v2114, 1.0
        %v2125 = vadd.f32 %v2115, 1.0
        %v2126 = vadd.f32 %v2116, 1.0
        %v2127 = vadd.f32 %v2117, 1.0
        %v2128 = vadd.f32 %v2118, 1.0
        %v2129 = vadd.f32 %v2119, 1.0
        %v2130 = vadd.f32 %v2120, 1.0
        %v2131 = vmul.f32 %v1871, %v2121
        %v2132 = vmul.f32 %v1872, %v2122
        %v2133 = vmul.f32 %v1873, %v2123
        %v2134 = vmul.f32 %v1874, %v2124
        %v2135 = vmul.f32 %v1875, %v2125
        %v2136 = vmul.f32 %v1876, %v2126
        %v2137 = vmul.f32 %v1877, %v2127
        %v2138 = vmul.f32 %v1878, %v2128
        %v2139 = vmul.f32 %v1879, %v2129
        %v2140 = vmul.f32 %v1880, %v2130
        %v2141 = vld [vmem:[#allocation8] sm:$0xff]
        %v2142 = vld [vmem:[#allocation8 + $0x8] sm:$0xff]
        %v2143 = vld [vmem:[#allocation8 + $0x10] sm:$0xff]
        %v2144 = vld [vmem:[#allocation8 + $0x18] sm:$0xff]
        %v2145 = vld [vmem:[#allocation8 + $0x20] sm:$0xff]
        %v2146 = vld [vmem:[#allocation8 + $0x28] sm:$0xff]
        %v2147 = vld [vmem:[#allocation8 + $0x30] sm:$0xff]
        %v2148 = vld [vmem:[#allocation8 + $0x38] sm:$0xff]
        %v2149 = vld [vmem:[#allocation8 + $0x40] sm:$0xff]
        %v2150 = vld [vmem:[#allocation8 + $0x48] sm:$0xff]
        %v2151 = vld [vmem:[#allocation8 + $0x50] sm:$0xff]
        %v2152 = vld [vmem:[#allocation8 + $0x58] sm:$0xff]
        %v2153 = vld [vmem:[#allocation8 + $0x60] sm:$0xff]
        %v2154 = vld [vmem:[#allocation8 + $0x68] sm:$0xff]
        %v2155 = vld [vmem:[#allocation8 + $0x70] sm:$0xff]
        %v2156 = vld [vmem:[#allocation8 + $0x78] sm:$0xff]
        %2157 = vmatprep.subr.mxu0 0.0
        %2158 = vmatpush1.msra.mxu0 %v2141
        %2159 = vmatprep.subr.mxu0 0.0
        %2160 = vmatpush1.msra.mxu0 %v2142
        %2161 = vmatprep.subr.mxu0 0.0
        %2162 = vmatpush1.msra.mxu0 %v2143
        %2163 = vmatprep.subr.mxu0 0.0
        %2164 = vmatpush1.msra.mxu0 %v2144
        %2165 = vmatprep.subr.mxu0 0.0
        %2166 = vmatpush1.msra.mxu0 %v2145
        %2167 = vmatprep.subr.mxu0 0.0
        %2168 = vmatpush1.msra.mxu0 %v2146
        %2169 = vmatprep.subr.mxu0 0.0
        %2170 = vmatpush1.msra.mxu0 %v2147
        %2171 = vmatprep.subr.mxu0 0.0
        %2172 = vmatpush1.msra.mxu0 %v2148
        %2173 = vmatprep.subr.mxu0 0.0
        %2174 = vmatpush1.msra.mxu0 %v2149
        %2175 = vmatprep.subr.mxu0 0.0
        %2176 = vmatpush1.msra.mxu0 %v2150
        %2177 = vmatprep.subr.mxu0 0.0
        %2178 = vmatpush1.msra.mxu0 %v2151
        %2179 = vmatprep.subr.mxu0 0.0
        %2180 = vmatpush1.msra.mxu0 %v2152
        %2181 = vmatprep.subr.mxu0 0.0
        %2182 = vmatpush1.msra.mxu0 %v2153
        %2183 = vmatprep.subr.mxu0 0.0
        %2184 = vmatpush1.msra.mxu0 %v2154
        %2185 = vmatprep.subr.mxu0 0.0
        %2186 = vmatpush1.msra.mxu0 %v2155
        %2187 = vmatprep.subr.mxu0 0.0
        %2188 = vmatpush1.msra.mxu0 %v2156
        %2189 = vmatprep.subr.mxu0 0.0
        %2190 = vmatpush1.msra.mxu0 0.0
        %2191 = vmatprep.subr.mxu0 0.0
        %2192 = vmatpush1.msra.mxu0 0.0
        %2193 = vmatprep.subr.mxu0 0.0
        %2194 = vmatpush1.msra.mxu0 0.0
        %2195 = vmatprep.subr.mxu0 0.0
        %2196 = vmatpush1.msra.mxu0 0.0
        %2197 = vmatprep.subr.mxu0 0.0
        %2198 = vmatpush1.msra.mxu0 0.0
        %2199 = vmatprep.subr.mxu0 0.0
        %2200 = vmatpush1.msra.mxu0 0.0
        %2201 = vmatprep.subr.mxu0 0.0
        %2202 = vmatpush1.msra.mxu0 0.0
        %2203 = vmatprep.subr.mxu0 0.0
        %2204 = vmatpush1.msra.mxu0 0.0
        %2205 = vmatprep.subr.mxu0 0.0
        %2206 = vmatpush1.msra.mxu0 0.0
        %2207 = vmatprep.subr.mxu0 0.0
        %2208 = vmatpush1.msra.mxu0 0.0
        %2209 = vmatprep.subr.mxu0 0.0
        %2210 = vmatpush1.msra.mxu0 0.0
        %2211 = vmatprep.subr.mxu0 0.0
        %2212 = vmatpush1.msra.mxu0 0.0
        %2213 = vmatprep.subr.mxu0 0.0
        %2214 = vmatpush1.msra.mxu0 0.0
        %2215 = vmatprep.subr.mxu0 0.0
        %2216 = vmatpush1.msra.mxu0 0.0
        %2217 = vmatprep.subr.mxu0 0.0
        %2218 = vmatpush1.msra.mxu0 0.0
        %2219 = vmatprep.subr.mxu0 0.0
        %2220 = vmatpush1.msra.mxu0 0.0
        %2221 = vmatprep.mubr.f32.mxu0 0.0
        %2222 = vmatmul.mubr.f32.gmra.mrb[0].mxu0 %v2131
        %v2223 = vpop.f32.mrb[0].mxu0
        %v2224 = vadd.f32 0.0, %v2223
        %v2225 = vpop.f32.mrb[0].mxu0
        %2226 = vmatprep.mubr.f32.mxu0 0.0
        %2227 = vmatmul.mubr.f32.gmra.mrb[0].mxu0 %v2133
        %v2228 = vpop.f32.mrb[0].mxu0
        %v2229 = vadd.f32 0.0, %v2228
        %v2230 = vpop.f32.mrb[0].mxu0
        %2231 = vmatprep.mubr.f32.mxu0 0.0
        %2232 = vmatmul.mubr.f32.gmra.mrb[0].mxu0 %v2135
        %v2233 = vpop.f32.mrb[0].mxu0
        %v2234 = vadd.f32 0.0, %v2233
        %v2235 = vpop.f32.mrb[0].mxu0
        %2236 = vmatprep.mubr.f32.mxu0 0.0
        %2237 = vmatmul.mubr.f32.gmra.mrb[0].mxu0 %v2137
        %v2238 = vpop.f32.mrb[0].mxu0
        %v2239 = vadd.f32 0.0, %v2238
        %v2240 = vpop.f32.mrb[0].mxu0
        %2241 = vmatprep.mubr.f32.mxu0 0.0
        %2242 = vmatmul.mubr.f32.gmra.mrb[0].mxu0 %v2139
        %v2243 = vpop.f32.mrb[0].mxu0
        %v2244 = vadd.f32 0.0, %v2243
        %v2245 = vpop.f32.mrb[0].mxu0
        %2246 = vdwg.mxu0
        %v2247 = vld [vmem:[%s4] sm:$0xff]
        %v2248 = vld [vmem:[%s4 + $0x8] sm:$0xff]
        %v2249 = vld [vmem:[%s4 + $0x10] sm:$0xff]
        %v2250 = vld [vmem:[%s4 + $0x18] sm:$0xff]
        %v2251 = vld [vmem:[%s4 + $0x20] sm:$0xff]
        %v2252 = vld [vmem:[%s5] sm:$0xff]
        %v2253 = vld [vmem:[%s5 + $0x8] sm:$0xff]
        %v2254 = vld [vmem:[%s5 + $0x10] sm:$0xff]
        %v2255 = vld [vmem:[%s5 + $0x18] sm:$0xff]
        %v2256 = vld [vmem:[%s5 + $0x20] sm:$0xff]
        %2258 = vset.pattern.permute.xlu0 0
        %2259 = vperm.xlu0 %2258, %v2252
        %v2260 = vpop.permute.xlu0 %2259
        %2263 = vset.pattern.permute.xlu0 0
        %2264 = vperm.xlu0 %2263, %v2253
        %v2265 = vpop.permute.xlu0 %2264
        %2268 = vset.pattern.permute.xlu0 0
        %2269 = vperm.xlu0 %2268, %v2254
        %v2270 = vpop.permute.xlu0 %2269
        %2273 = vset.pattern.permute.xlu0 0
        %2274 = vperm.xlu0 %2273, %v2255
        %v2275 = vpop.permute.xlu0 %2274
        %2278 = vset.pattern.permute.xlu0 0
        %2279 = vperm.xlu0 %2278, %v2256
        %v2280 = vpop.permute.xlu0 %2279
        %vm2282 = vcmask 326656
        %v2284 = vsel %vm2282, %v2247, 0
        %v2287 = vsel %vm2282, %v2248, 0
        %v2290 = vsel %vm2282, %v2249, 0
        %v2293 = vsel %vm2282, %v2250, 0
        %v2296 = vsel %vm2282, %v2251, 0
        %2298 = vmatprep.subr.mxu0 0.0
        %2299 = vmatpush1.msra.mxu0 %v2224
        %2300 = vmatprep.subr.mxu0 0.0
        %2301 = vmatpush1.msra.mxu0 %v2229
        %2302 = vmatprep.subr.mxu0 0.0
        %2303 = vmatpush1.msra.mxu0 %v2234
        %2304 = vmatprep.subr.mxu0 0.0
        %2305 = vmatpush1.msra.mxu0 %v2239
        %2306 = vmatprep.subr.mxu0 0.0
        %2307 = vmatpush1.msra.mxu0 %v2244
        %2308 = vmatprep.subr.mxu0 0.0
        %2309 = vmatpush1.msra.mxu0 0.0
        %2310 = vmatprep.subr.mxu0 0.0
        %2311 = vmatpush1.msra.mxu0 0.0
        %2312 = vmatprep.subr.mxu0 0.0
        %2313 = vmatpush1.msra.mxu0 0.0
        %2314 = vmatprep.subr.mxu0 0.0
        %2315 = vmatpush1.msra.mxu0 0.0
        %2316 = vmatprep.subr.mxu0 0.0
        %2317 = vmatpush1.msra.mxu0 0.0
        %2318 = vmatprep.subr.mxu0 0.0
        %2319 = vmatpush1.msra.mxu0 0.0
        %2320 = vmatprep.subr.mxu0 0.0
        %2321 = vmatpush1.msra.mxu0 0.0
        %2322 = vmatprep.subr.mxu0 0.0
        %2323 = vmatpush1.msra.mxu0 0.0
        %2324 = vmatprep.subr.mxu0 0.0
        %2325 = vmatpush1.msra.mxu0 0.0
        %2326 = vmatprep.subr.mxu0 0.0
        %2327 = vmatpush1.msra.mxu0 0.0
        %2328 = vmatprep.subr.mxu0 0.0
        %2329 = vmatpush1.msra.mxu0 0.0
        %2330 = vmatprep.subr.mxu0 0.0
        %2331 = vmatpush1.msra.mxu0 0.0
        %2332 = vmatprep.subr.mxu0 0.0
        %2333 = vmatpush1.msra.mxu0 0.0
        %2334 = vmatprep.subr.mxu0 0.0
        %2335 = vmatpush1.msra.mxu0 0.0
        %2336 = vmatprep.subr.mxu0 0.0
        %2337 = vmatpush1.msra.mxu0 0.0
        %2338 = vmatprep.subr.mxu0 0.0
        %2339 = vmatpush1.msra.mxu0 0.0
        %2340 = vmatprep.subr.mxu0 0.0
        %2341 = vmatpush1.msra.mxu0 0.0
        %2342 = vmatprep.subr.mxu0 0.0
        %2343 = vmatpush1.msra.mxu0 0.0
        %2344 = vmatprep.subr.mxu0 0.0
        %2345 = vmatpush1.msra.mxu0 0.0
        %2346 = vmatprep.subr.mxu0 0.0
        %2347 = vmatpush1.msra.mxu0 0.0
        %2348 = vmatprep.subr.mxu0 0.0
        %2349 = vmatpush1.msra.mxu0 0.0
        %2350 = vmatprep.subr.mxu0 0.0
        %2351 = vmatpush1.msra.mxu0 0.0
        %2352 = vmatprep.subr.mxu0 0.0
        %2353 = vmatpush1.msra.mxu0 0.0
        %2354 = vmatprep.subr.mxu0 0.0
        %2355 = vmatpush1.msra.mxu0 0.0
        %2356 = vmatprep.subr.mxu0 0.0
        %2357 = vmatpush1.msra.mxu0 0.0
        %2358 = vmatprep.subr.mxu0 0.0
        %2359 = vmatpush1.msra.mxu0 0.0
        %2360 = vmatprep.subr.mxu0 0.0
        %2361 = vmatpush1.msra.mxu0 0.0
        %2362 = vmatprep.mubr.f32.mxu0 0.0
        %2363 = vmatmul.mubr.f32.gmra.mrb[0].mxu0 %v2284
        %v2364 = vpop.f32.mrb[0].mxu0
        %v2365 = vadd.f32 %v2260, %v2364
        %v2366 = vpop.f32.mrb[0].mxu0
        %2367 = vmatprep.mubr.f32.mxu0 0.0
        %2368 = vmatmul.mubr.f32.gmra.mrb[0].mxu0 %v2287
        %v2369 = vpop.f32.mrb[0].mxu0
        %v2370 = vadd.f32 %v2265, %v2369
        %v2371 = vpop.f32.mrb[0].mxu0
        %2372 = vmatprep.mubr.f32.mxu0 0.0
        %2373 = vmatmul.mubr.f32.gmra.mrb[0].mxu0 %v2290
        %v2374 = vpop.f32.mrb[0].mxu0
        %v2375 = vadd.f32 %v2270, %v2374
        %v2376 = vpop.f32.mrb[0].mxu0
        %2377 = vmatprep.mubr.f32.mxu0 0.0
        %2378 = vmatmul.mubr.f32.gmra.mrb[0].mxu0 %v2293
        %v2379 = vpop.f32.mrb[0].mxu0
        %v2380 = vadd.f32 %v2275, %v2379
        %v2381 = vpop.f32.mrb[0].mxu0
        %2382 = vmatprep.mubr.f32.mxu0 0.0
        %2383 = vmatmul.mubr.f32.gmra.mrb[0].mxu0 %v2296
        %v2384 = vpop.f32.mrb[0].mxu0
        %v2385 = vadd.f32 %v2280, %v2384
        %v2386 = vpop.f32.mrb[0].mxu0
        %2387 = vdwg.mxu0
        %2388 = vst [vmem:[%s299] sm:$0xff] %v2365
        %2389 = vst [vmem:[%s299 + $0x8] sm:$0xff] %v2370
        %2390 = vst [vmem:[%s299 + $0x10] sm:$0xff] %v2375
        %2391 = vst [vmem:[%s299 + $0x18] sm:$0xff] %v2380
        %2392 = vst [vmem:[%s299 + $0x20] sm:$0xff] %v2385
        %v2393 = vld [vmem:[#allocation8] sm:$0xff]
        %v2394 = vld [vmem:[#allocation8 + $0x8] sm:$0xff]
        %v2395 = vld [vmem:[#allocation8 + $0x10] sm:$0xff]
        %v2396 = vld [vmem:[#allocation8 + $0x18] sm:$0xff]
        %v2397 = vld [vmem:[#allocation8 + $0x20] sm:$0xff]
        %v2398 = vld [vmem:[#allocation8 + $0x28] sm:$0xff]
        %v2399 = vld [vmem:[#allocation8 + $0x30] sm:$0xff]
        %v2400 = vld [vmem:[#allocation8 + $0x38] sm:$0xff]
        %v2401 = vld [vmem:[#allocation8 + $0x40] sm:$0xff]
        %v2402 = vld [vmem:[#allocation8 + $0x48] sm:$0xff]
        %v2403 = vld [vmem:[#allocation8 + $0x50] sm:$0xff]
        %v2404 = vld [vmem:[#allocation8 + $0x58] sm:$0xff]
        %v2405 = vld [vmem:[#allocation8 + $0x60] sm:$0xff]
        %v2406 = vld [vmem:[#allocation8 + $0x68] sm:$0xff]
        %v2407 = vld [vmem:[#allocation8 + $0x70] sm:$0xff]
        %v2408 = vld [vmem:[#allocation8 + $0x78] sm:$0xff]
        %2409 = vmatprep.subr.mxu0 0.0
        %2410 = vmatpush1.msra.mxu0 %v2393
        %2411 = vmatprep.subr.mxu0 0.0
        %2412 = vmatpush1.msra.mxu0 %v2394
        %2413 = vmatprep.subr.mxu0 0.0
        %2414 = vmatpush1.msra.mxu0 %v2395
        %2415 = vmatprep.subr.mxu0 0.0
        %2416 = vmatpush1.msra.mxu0 %v2396
        %2417 = vmatprep.subr.mxu0 0.0
        %2418 = vmatpush1.msra.mxu0 %v2397
        %2419 = vmatprep.subr.mxu0 0.0
        %2420 = vmatpush1.msra.mxu0 %v2398
        %2421 = vmatprep.subr.mxu0 0.0
        %2422 = vmatpush1.msra.mxu0 %v2399
        %2423 = vmatprep.subr.mxu0 0.0
        %2424 = vmatpush1.msra.mxu0 %v2400
        %2425 = vmatprep.subr.mxu0 0.0
        %2426 = vmatpush1.msra.mxu0 %v2401
        %2427 = vmatprep.subr.mxu0 0.0
        %2428 = vmatpush1.msra.mxu0 %v2402
        %2429 = vmatprep.subr.mxu0 0.0
        %2430 = vmatpush1.msra.mxu0 %v2403
        %2431 = vmatprep.subr.mxu0 0.0
        %2432 = vmatpush1.msra.mxu0 %v2404
        %2433 = vmatprep.subr.mxu0 0.0
        %2434 = vmatpush1.msra.mxu0 %v2405
        %2435 = vmatprep.subr.mxu0 0.0
        %2436 = vmatpush1.msra.mxu0 %v2406
        %2437 = vmatprep.subr.mxu0 0.0
        %2438 = vmatpush1.msra.mxu0 %v2407
        %2439 = vmatprep.subr.mxu0 0.0
        %2440 = vmatpush1.msra.mxu0 %v2408
        %2441 = vmatprep.subr.mxu0 0.0
        %2442 = vmatpush1.msra.mxu0 0.0
        %2443 = vmatprep.subr.mxu0 0.0
        %2444 = vmatpush1.msra.mxu0 0.0
        %2445 = vmatprep.subr.mxu0 0.0
        %2446 = vmatpush1.msra.mxu0 0.0
        %2447 = vmatprep.subr.mxu0 0.0
        %2448 = vmatpush1.msra.mxu0 0.0
        %2449 = vmatprep.subr.mxu0 0.0
        %2450 = vmatpush1.msra.mxu0 0.0
        %2451 = vmatprep.subr.mxu0 0.0
        %2452 = vmatpush1.msra.mxu0 0.0
        %2453 = vmatprep.subr.mxu0 0.0
        %2454 = vmatpush1.msra.mxu0 0.0
        %2455 = vmatprep.subr.mxu0 0.0
        %2456 = vmatpush1.msra.mxu0 0.0
        %2457 = vmatprep.subr.mxu0 0.0
        %2458 = vmatpush1.msra.mxu0 0.0
        %2459 = vmatprep.subr.mxu0 0.0
        %2460 = vmatpush1.msra.mxu0 0.0
        %2461 = vmatprep.subr.mxu0 0.0
        %2462 = vmatpush1.msra.mxu0 0.0
        %2463 = vmatprep.subr.mxu0 0.0
        %2464 = vmatpush1.msra.mxu0 0.0
        %2465 = vmatprep.subr.mxu0 0.0
        %2466 = vmatpush1.msra.mxu0 0.0
        %2467 = vmatprep.subr.mxu0 0.0
        %2468 = vmatpush1.msra.mxu0 0.0
        %2469 = vmatprep.subr.mxu0 0.0
        %2470 = vmatpush1.msra.mxu0 0.0
        %2471 = vmatprep.subr.mxu0 0.0
        %2472 = vmatpush1.msra.mxu0 0.0
        %2473 = vmatprep.mubr.f32.mxu0 0.0
        %2474 = vmatmul.mubr.f32.gmra.mrb[0].mxu0 %v2132
        %v2475 = vpop.f32.mrb[0].mxu0
        %v2476 = vadd.f32 0.0, %v2475
        %v2477 = vpop.f32.mrb[0].mxu0
        %2478 = vmatprep.mubr.f32.mxu0 0.0
        %2479 = vmatmul.mubr.f32.gmra.mrb[0].mxu0 %v2134
        %v2480 = vpop.f32.mrb[0].mxu0
        %v2481 = vadd.f32 0.0, %v2480
        %v2482 = vpop.f32.mrb[0].mxu0
        %2483 = vmatprep.mubr.f32.mxu0 0.0
        %2484 = vmatmul.mubr.f32.gmra.mrb[0].mxu0 %v2136
        %v2485 = vpop.f32.mrb[0].mxu0
        %v2486 = vadd.f32 0.0, %v2485
        %v2487 = vpop.f32.mrb[0].mxu0
        %2488 = vmatprep.mubr.f32.mxu0 0.0
        %2489 = vmatmul.mubr.f32.gmra.mrb[0].mxu0 %v2138
        %v2490 = vpop.f32.mrb[0].mxu0
        %v2491 = vadd.f32 0.0, %v2490
        %v2492 = vpop.f32.mrb[0].mxu0
        %2493 = vmatprep.mubr.f32.mxu0 0.0
        %2494 = vmatmul.mubr.f32.gmra.mrb[0].mxu0 %v2140
        %v2495 = vpop.f32.mrb[0].mxu0
        %v2496 = vadd.f32 0.0, %v2495
        %v2497 = vpop.f32.mrb[0].mxu0
        %2498 = vdwg.mxu0
        %v2499 = vld [vmem:[%s4] sm:$0xff]
        %v2500 = vld [vmem:[%s4 + $0x8] sm:$0xff]
        %v2501 = vld [vmem:[%s4 + $0x10] sm:$0xff]
        %v2502 = vld [vmem:[%s4 + $0x18] sm:$0xff]
        %v2503 = vld [vmem:[%s4 + $0x20] sm:$0xff]
        %v2504 = vld [vmem:[%s5] sm:$0xff]
        %v2505 = vld [vmem:[%s5 + $0x8] sm:$0xff]
        %v2506 = vld [vmem:[%s5 + $0x10] sm:$0xff]
        %v2507 = vld [vmem:[%s5 + $0x18] sm:$0xff]
        %v2508 = vld [vmem:[%s5 + $0x20] sm:$0xff]
        %2510 = vset.pattern.permute.xlu0 0
        %2511 = vperm.xlu0 %2510, %v2504
        %v2512 = vpop.permute.xlu0 %2511
        %2515 = vset.pattern.permute.xlu0 0
        %2516 = vperm.xlu0 %2515, %v2505
        %v2517 = vpop.permute.xlu0 %2516
        %2520 = vset.pattern.permute.xlu0 0
        %2521 = vperm.xlu0 %2520, %v2506
        %v2522 = vpop.permute.xlu0 %2521
        %2525 = vset.pattern.permute.xlu0 0
        %2526 = vperm.xlu0 %2525, %v2507
        %v2527 = vpop.permute.xlu0 %2526
        %2530 = vset.pattern.permute.xlu0 0
        %2531 = vperm.xlu0 %2530, %v2508
        %v2532 = vpop.permute.xlu0 %2531
        %v2535 = vsel %vm2282, %v2499, 0
        %v2538 = vsel %vm2282, %v2500, 0
        %v2541 = vsel %vm2282, %v2501, 0
        %v2544 = vsel %vm2282, %v2502, 0
        %v2547 = vsel %vm2282, %v2503, 0
        %2549 = vmatprep.subr.mxu0 0.0
        %2550 = vmatpush1.msra.mxu0 %v2476
        %2551 = vmatprep.subr.mxu0 0.0
        %2552 = vmatpush1.msra.mxu0 %v2481
        %2553 = vmatprep.subr.mxu0 0.0
        %2554 = vmatpush1.msra.mxu0 %v2486
        %2555 = vmatprep.subr.mxu0 0.0
        %2556 = vmatpush1.msra.mxu0 %v2491
        %2557 = vmatprep.subr.mxu0 0.0
        %2558 = vmatpush1.msra.mxu0 %v2496
        %2559 = vmatprep.subr.mxu0 0.0
        %2560 = vmatpush1.msra.mxu0 0.0
        %2561 = vmatprep.subr.mxu0 0.0
        %2562 = vmatpush1.msra.mxu0 0.0
        %2563 = vmatprep.subr.mxu0 0.0
        %2564 = vmatpush1.msra.mxu0 0.0
        %2565 = vmatprep.subr.mxu0 0.0
        %2566 = vmatpush1.msra.mxu0 0.0
        %2567 = vmatprep.subr.mxu0 0.0
        %2568 = vmatpush1.msra.mxu0 0.0
        %2569 = vmatprep.subr.mxu0 0.0
        %2570 = vmatpush1.msra.mxu0 0.0
        %2571 = vmatprep.subr.mxu0 0.0
        %2572 = vmatpush1.msra.mxu0 0.0
        %2573 = vmatprep.subr.mxu0 0.0
        %2574 = vmatpush1.msra.mxu0 0.0
        %2575 = vmatprep.subr.mxu0 0.0
        %2576 = vmatpush1.msra.mxu0 0.0
        %2577 = vmatprep.subr.mxu0 0.0
        %2578 = vmatpush1.msra.mxu0 0.0
        %2579 = vmatprep.subr.mxu0 0.0
        %2580 = vmatpush1.msra.mxu0 0.0
        %2581 = vmatprep.subr.mxu0 0.0
        %2582 = vmatpush1.msra.mxu0 0.0
        %2583 = vmatprep.subr.mxu0 0.0
        %2584 = vmatpush1.msra.mxu0 0.0
        %2585 = vmatprep.subr.mxu0 0.0
        %2586 = vmatpush1.msra.mxu0 0.0
        %2587 = vmatprep.subr.mxu0 0.0
        %2588 = vmatpush1.msra.mxu0 0.0
        %2589 = vmatprep.subr.mxu0 0.0
        %2590 = vmatpush1.msra.mxu0 0.0
        %2591 = vmatprep.subr.mxu0 0.0
        %2592 = vmatpush1.msra.mxu0 0.0
        %2593 = vmatprep.subr.mxu0 0.0
        %2594 = vmatpush1.msra.mxu0 0.0
        %2595 = vmatprep.subr.mxu0 0.0
        %2596 = vmatpush1.msra.mxu0 0.0
        %2597 = vmatprep.subr.mxu0 0.0
        %2598 = vmatpush1.msra.mxu0 0.0
        %2599 = vmatprep.subr.mxu0 0.0
        %2600 = vmatpush1.msra.mxu0 0.0
        %2601 = vmatprep.subr.mxu0 0.0
        %2602 = vmatpush1.msra.mxu0 0.0
        %2603 = vmatprep.subr.mxu0 0.0
        %2604 = vmatpush1.msra.mxu0 0.0
        %2605 = vmatprep.subr.mxu0 0.0
        %2606 = vmatpush1.msra.mxu0 0.0
        %2607 = vmatprep.subr.mxu0 0.0
        %2608 = vmatpush1.msra.mxu0 0.0
        %2609 = vmatprep.subr.mxu0 0.0
        %2610 = vmatpush1.msra.mxu0 0.0
        %2611 = vmatprep.subr.mxu0 0.0
        %2612 = vmatpush1.msra.mxu0 0.0
        %2613 = vmatprep.mubr.f32.mxu0 0.0
        %2614 = vmatmul.mubr.f32.gmra.mrb[0].mxu0 %v2535
        %v2615 = vpop.f32.mrb[0].mxu0
        %v2616 = vadd.f32 %v2512, %v2615
        %v2617 = vpop.f32.mrb[0].mxu0
        %2618 = vmatprep.mubr.f32.mxu0 0.0
        %2619 = vmatmul.mubr.f32.gmra.mrb[0].mxu0 %v2538
        %v2620 = vpop.f32.mrb[0].mxu0
        %v2621 = vadd.f32 %v2517, %v2620
        %v2622 = vpop.f32.mrb[0].mxu0
        %2623 = vmatprep.mubr.f32.mxu0 0.0
        %2624 = vmatmul.mubr.f32.gmra.mrb[0].mxu0 %v2541
        %v2625 = vpop.f32.mrb[0].mxu0
        %v2626 = vadd.f32 %v2522, %v2625
        %v2627 = vpop.f32.mrb[0].mxu0
        %2628 = vmatprep.mubr.f32.mxu0 0.0
        %2629 = vmatmul.mubr.f32.gmra.mrb[0].mxu0 %v2544
        %v2630 = vpop.f32.mrb[0].mxu0
        %v2631 = vadd.f32 %v2527, %v2630
        %v2632 = vpop.f32.mrb[0].mxu0
        %2633 = vmatprep.mubr.f32.mxu0 0.0
        %2634 = vmatmul.mubr.f32.gmra.mrb[0].mxu0 %v2547
        %v2635 = vpop.f32.mrb[0].mxu0
        %v2636 = vadd.f32 %v2532, %v2635
        %v2637 = vpop.f32.mrb[0].mxu0
        %2638 = vdwg.mxu0
        %s2639 = scalar_lea.vmem %s299, 40 [#allocation9]
        %2640 = vst [vmem:[%s2639] sm:$0xff] %v2616
        %2641 = vst [vmem:[%s2639 + $0x8] sm:$0xff] %v2621
        %2642 = vst [vmem:[%s2639 + $0x10] sm:$0xff] %v2626
        %2643 = vst [vmem:[%s2639 + $0x18] sm:$0xff] %v2631
        %2644 = vst [vmem:[%s2639 + $0x20] sm:$0xff] %v2636
        %s2645 = sand.u32 %s163, 1
        %s2646 = scalar_lea.sflag [#allocation5], %s2645
        %s2647 = sand.u32 %s163, 1
        %s2648 = smul.addr %s2647, 80
        %s2649 = scalar_lea.vmem [#allocation9], %s2648
        // Predicated region
        $region57: #{tpu_custom_call.1} parent=43 // pred_check
          %p2650 = pneg %p173
        $region58: #{tpu_custom_call.1} parent=43 // pred_check_branch
          %2652 = sbr.rel (%p2650) target = $region60
        $region59: #{tpu_custom_call.1} parent=43 // pred_region
          %s2653 = smul.u32 2, %s24
          %s2655 = ssub.s32 1280, 1280
          %2656 = vsyncadd %s2646, %s2655
          %s2657 = smul.addr %s2653, 5
          %s2658 = smul.addr %s2657, 128
          %s2659 = scalar_lea.hbm %s6, %s2658
          %s2660 = sshll.u32 %s2649, 4
          %s2661 = int_to_ptr.vmem [resolvable:$true] %s2660
          %2666 = dma.vmem_to_hbm [thread:$0]  %s2661, 1280, %s2659, %s2646, 128, 128, 8
        $region60: #{tpu_custom_call.1} parent=43 // pred_fallthru
          _
      $region44: #{tpu_custom_call.1} parent=5 // pred_fallthru
        _
      %p2667 = scmp.le.s32.totalorder 2, %s19
      // Predicated region
      $region61: #{tpu_custom_call.1} parent=5 // pred_check
        %p2668 = pneg %p2667
      $region62: #{tpu_custom_call.1} parent=5 // pred_check_branch
        %2670 = sbr.rel (%p2668) target = $region64
      $region63: #{tpu_custom_call.1} parent=5 // pred_region
        %s2671 = ssub.s32 %s19, 2
        // Predicated region
        $region65: #{tpu_custom_call.1} parent=63 // pred_check
          %p2672 = pneg %p179
        $region66: #{tpu_custom_call.1} parent=63 // pred_check_branch
          %2674 = sbr.rel (%p2672) target = $region68
        $region67: #{tpu_custom_call.1} parent=63 // pred_region
          %s2675 = sand.u32 %s164, 1
          %s2676 = scalar_lea.sflag [#allocation5], %s2675
          %s2677 = sand.u32 %s164, 1
          %s2678 = smul.addr %s2677, 80
          %s2679 = scalar_lea.vmem [#allocation9], %s2678
          %2680 = dma.done %s2676, 1280
        $region68: #{tpu_custom_call.1} parent=63 // pred_fallthru
          _
      $region64: #{tpu_custom_call.1} parent=5 // pred_fallthru
        _
    $region6: #{tpu_custom_call.1} parent=1 // loop_footer
      %s23 = sadd.s32 1, %s19
    $region7: #{tpu_custom_call.1} parent=1 // loop_footer_branch
      %18 = sbr.rel target = $region3
    $region8: #{tpu_custom_call.1} parent=1 // loop_exit
      _
    %2681 = vsyncpa [#allocation4], 1
    %s2682 = scalar_lea.sflag [#allocation4], 1
    %2683 = vsyncpa %s2682, 1
    %2684 = vsyncpa [#allocation7], 1
    %2685 = vsyncpa [#allocation5], 1
    %s2686 = scalar_lea.sflag [#allocation5], 1
    %2687 = vsyncpa %s2686, 1

</llo_original>
